<compile_context>
chip_gen: v6e
topology: v6e:2x2x1
jax: 0.10.0
libtpu: 0.0.40
codegen_flags: <defaults>
</compile_context>

<pallas_src>
import functools

import numpy as np
import jax
import jax.numpy as jnp
from jax.experimental import pallas as pl
from jax.experimental.pallas import tpu as pltpu


def _round_up(a, b):
    return (a + b - 1) // b * b


def _pos_embedding_kernel(x_ref, o_ref, *, freqs, d):
    # x_ref: (D, tn) block  -- lanes = points (dense), sublanes = xyz features.
    # o_ref: (D*(2F+1), tn) block, same lane mapping.
    x = x_ref[...].astype(jnp.float32)  # compute in f32 (v5e-safe transcendentals)
    o_ref[0:d, :] = x.astype(o_ref.dtype)
    for j, f in enumerate(freqs):       # static unroll over frequencies
        fx = f * x                      # VPU
        base = (2 * j + 1) * d
        o_ref[base:base + d, :] = jnp.sin(fx).astype(o_ref.dtype)      # EUP
        o_ref[base + d:base + 2 * d, :] = jnp.cos(fx).astype(o_ref.dtype)


def pos_embedding(x, max_logscale, n_freqs, logscale=True, *,
                  tile_cols=32768, out_dtype=None):
    """x: [..., D] float array. Returns [..., D * (2 * n_freqs + 1)]."""
    orig_shape = x.shape
    d = orig_shape[-1]
    out_dim = d * (2 * n_freqs + 1)
    out_dtype = x.dtype if out_dtype is None else jnp.dtype(out_dtype)

    # Frequencies are static (module __init__); baked into the kernel.
    if logscale:
        freqs = tuple(float(v) for v in (2.0 ** np.linspace(0.0, max_logscale, n_freqs)))
    else:
        freqs = tuple(float(v) for v in np.linspace(1.0, 2.0 ** max_logscale, n_freqs))

    x2 = x.reshape(-1, d)
    n = x2.shape[0]

    # --- tile sizing --------------------------------------------------------
    # Double-buffered in+out tile bytes per lane-column (f32 scratch layout,
    # sublane-padded to multiples of 8):
    bytes_per_col = 2 * 4 * (_round_up(d, 8) + _round_up(out_dim, 8))
    # Keep total pipelined tiles under ~12 MiB so even v5e's 16 MiB scoped
    # VMEM default has headroom (v6e/v7x defaults are 32 MiB).
    max_tn = max(128, ((12 << 20) // bytes_per_col) // 128 * 128)

    n_pad = _round_up(max(n, 1), 128)
    tn = min(_round_up(tile_cols, 128), n_pad, max_tn)
    n_pad = _round_up(n_pad, tn)
    grid = (n_pad // tn,)

    # Lane-dense layout: points -> lanes.  Pad N, then transpose to (D, N_pad);
    # XLA fuses the pad into the transpose copy.
    x_t = jnp.pad(x2, ((0, n_pad - n), (0, 0))).T

    kernel = functools.partial(_pos_embedding_kernel, freqs=freqs, d=d)

    elems = n_pad * d
    cost = pl.CostEstimate(
        flops=int(2 * elems * max(n_freqs, 1)),
        transcendentals=int(2 * elems * n_freqs),
        bytes_accessed=int(elems * x_t.dtype.itemsize
                           + out_dim * n_pad * out_dtype.itemsize),
    )

    out_t = pl.pallas_call(
        kernel,
        out_shape=jax.ShapeDtypeStruct((out_dim, n_pad), out_dtype),
        grid_spec=pltpu.PrefetchScalarGridSpec(
            num_scalar_prefetch=0,
            grid=grid,
            in_specs=[pl.BlockSpec((d, tn), lambda i: (0, i))],
            out_specs=pl.BlockSpec((out_dim, tn), lambda i: (0, i)),
        ),
        compiler_params=pltpu.CompilerParams(
            dimension_semantics=("parallel",),
        ),
        cost_estimate=cost,
    )(x_t)

    # Back to the torch.cat(..., -1) contract: [N, out_dim], then restore
    # leading dims (slice + transpose fuse into one XLA copy).
    out = out_t[:, :n].T
    return out.reshape(*orig_shape[:-1], out_dim)


def pos_embedding_ref(x, max_logscale, n_freqs, logscale=True):
    """Pure-JAX reference matching the PyTorch forward."""
    if logscale:
        freqs = 2.0 ** jnp.linspace(0.0, max_logscale, n_freqs)
    else:
        freqs = jnp.linspace(1.0, 2.0 ** max_logscale, n_freqs)
    out = [x]
    for f in freqs:
        out.append(jnp.sin(f * x))
        out.append(jnp.cos(f * x))
    return jnp.concatenate(out, axis=-1)


if __name__ == "__main__":
    MAX_LOGSCALE = 3
    N_FREQS = 4
    INPUT_DIM = 3
    OUT_DIM = INPUT_DIM * (2 * N_FREQS + 1)

    # 2-D case, row count not a multiple of anything nice (exercises padding).
    x = jax.random.normal(jax.random.PRNGKey(0), (1000, INPUT_DIM), dtype=jnp.float32)
    out = jax.block_until_ready(pos_embedding(x, MAX_LOGSCALE, N_FREQS, logscale=True))
    ref = pos_embedding_ref(x, MAX_LOGSCALE, N_FREQS, logscale=True)
    assert out.shape == (1000, OUT_DIM)
    assert jnp.allclose(out, ref, atol=1e-5, rtol=1e-5)

    # Multi-dim leading axes (module accepts any [..., D]).
    x3 = jax.random.normal(jax.random.PRNGKey(0), (2, 37, INPUT_DIM), dtype=jnp.float32)
    out3 = jax.block_until_ready(pos_embedding(x3, MAX_LOGSCALE, N_FREQS))
    ref3 = pos_embedding_ref(x3, MAX_LOGSCALE, N_FREQS)
    assert out3.shape == (2, 37, OUT_DIM)
    assert jnp.allclose(out3, ref3, atol=1e-5, rtol=1e-5)

    # Non-logscale frequency spacing path.
    out_lin = jax.block_until_ready(pos_embedding(x, MAX_LOGSCALE, N_FREQS, logscale=False))
    ref_lin = pos_embedding_ref(x, MAX_LOGSCALE, N_FREQS, logscale=False)
    assert jnp.allclose(out_lin, ref_lin, atol=1e-5, rtol=1e-5)

    # Optional bf16 output (halves the HBM write traffic on v6e/v7x); compute
    # stays in f32 inside the kernel.
    out_bf16 = jax.block_until_ready(
        pos_embedding(x, MAX_LOGSCALE, N_FREQS, out_dtype=jnp.bfloat16))
    assert jnp.allclose(out_bf16.astype(jnp.float32), ref, atol=5e-2, rtol=2e-2)

    print("KERNEL_OK")
</pallas_src>

<mosaic_0001>
module attributes {stable_mosaic.version = 11 : i64} {
  func.func @_pos_embedding_kernel(%arg0: i32, %arg1: memref<3x1024xf32, #tpu.memory_space<vmem>>, %arg2: memref<27x1024xf32, #tpu.memory_space<vmem>>) attributes {dimension_semantics = [#tpu.dimension_semantics<parallel>], iteration_bounds = array<i64: 1>, scalar_prefetch = 0 : i64, scratch_operands = 0 : i64, tpu.core_type = #tpu.core_type<tc>, window_params = [{transform_indices = @transform_0, window_bounds = array<i64: 3, 1024>}, {transform_indices = @transform_1, window_bounds = array<i64: 27, 1024>}]} {
    %c0 = arith.constant 0 : index
    %c0_0 = arith.constant 0 : index
    %0 = vector.load %arg1[%c0, %c0_0] : memref<3x1024xf32, #tpu.memory_space<vmem>>, vector<3x1024xf32>
    %c0_1 = arith.constant 0 : index
    %c0_2 = arith.constant 0 : index
    %1 = vector.load %arg2[%c0_1, %c0_2] : memref<27x1024xf32, #tpu.memory_space<vmem>>, vector<3x1024xf32>
    tpu.vector_store %arg2[%c0_1, %c0_2], %0 {strides = array<i32>} : memref<27x1024xf32, #tpu.memory_space<vmem>>, vector<3x1024xf32>,
    %cst = arith.constant 1.000000e+00 : f32
    %2 = vector.broadcast %cst : f32 to vector<3x1024xf32>
    %3 = arith.mulf %2, %0 : vector<3x1024xf32>
    %4 = math.sin %3 : vector<3x1024xf32>
    %c3 = arith.constant 3 : index
    %c0_3 = arith.constant 0 : index
    %5 = vector.load %arg2[%c3, %c0_3] : memref<27x1024xf32, #tpu.memory_space<vmem>>, vector<3x1024xf32>
    tpu.vector_store %arg2[%c3, %c0_3], %4 {strides = array<i32>} : memref<27x1024xf32, #tpu.memory_space<vmem>>, vector<3x1024xf32>,
    %6 = math.cos %3 : vector<3x1024xf32>
    %c6 = arith.constant 6 : index
    %c0_4 = arith.constant 0 : index
    %7 = vector.load %arg2[%c6, %c0_4] : memref<27x1024xf32, #tpu.memory_space<vmem>>, vector<3x1024xf32>
    tpu.vector_store %arg2[%c6, %c0_4], %6 {strides = array<i32>} : memref<27x1024xf32, #tpu.memory_space<vmem>>, vector<3x1024xf32>,
    %cst_5 = arith.constant 2.000000e+00 : f32
    %8 = vector.broadcast %cst_5 : f32 to vector<3x1024xf32>
    %9 = arith.mulf %8, %0 : vector<3x1024xf32>
    %10 = math.sin %9 : vector<3x1024xf32>
    %c9 = arith.constant 9 : index
    %c0_6 = arith.constant 0 : index
    %11 = vector.load %arg2[%c9, %c0_6] : memref<27x1024xf32, #tpu.memory_space<vmem>>, vector<3x1024xf32>
    tpu.vector_store %arg2[%c9, %c0_6], %10 {strides = array<i32>} : memref<27x1024xf32, #tpu.memory_space<vmem>>, vector<3x1024xf32>,
    %12 = math.cos %9 : vector<3x1024xf32>
    %c12 = arith.constant 12 : index
    %c0_7 = arith.constant 0 : index
    %13 = vector.load %arg2[%c12, %c0_7] : memref<27x1024xf32, #tpu.memory_space<vmem>>, vector<3x1024xf32>
    tpu.vector_store %arg2[%c12, %c0_7], %12 {strides = array<i32>} : memref<27x1024xf32, #tpu.memory_space<vmem>>, vector<3x1024xf32>,
    %cst_8 = arith.constant 4.000000e+00 : f32
    %14 = vector.broadcast %cst_8 : f32 to vector<3x1024xf32>
    %15 = arith.mulf %14, %0 : vector<3x1024xf32>
    %16 = math.sin %15 : vector<3x1024xf32>
    %c15 = arith.constant 15 : index
    %c0_9 = arith.constant 0 : index
    %17 = vector.load %arg2[%c15, %c0_9] : memref<27x1024xf32, #tpu.memory_space<vmem>>, vector<3x1024xf32>
    tpu.vector_store %arg2[%c15, %c0_9], %16 {strides = array<i32>} : memref<27x1024xf32, #tpu.memory_space<vmem>>, vector<3x1024xf32>,
    %18 = math.cos %15 : vector<3x1024xf32>
    %c18 = arith.constant 18 : index
    %c0_10 = arith.constant 0 : index
    %19 = vector.load %arg2[%c18, %c0_10] : memref<27x1024xf32, #tpu.memory_space<vmem>>, vector<3x1024xf32>
    tpu.vector_store %arg2[%c18, %c0_10], %18 {strides = array<i32>} : memref<27x1024xf32, #tpu.memory_space<vmem>>, vector<3x1024xf32>,
    %cst_11 = arith.constant 8.000000e+00 : f32
    %20 = vector.broadcast %cst_11 : f32 to vector<3x1024xf32>
    %21 = arith.mulf %20, %0 : vector<3x1024xf32>
    %22 = math.sin %21 : vector<3x1024xf32>
    %c21 = arith.constant 21 : index
    %c0_12 = arith.constant 0 : index
    %23 = vector.load %arg2[%c21, %c0_12] : memref<27x1024xf32, #tpu.memory_space<vmem>>, vector<3x1024xf32>
    tpu.vector_store %arg2[%c21, %c0_12], %22 {strides = array<i32>} : memref<27x1024xf32, #tpu.memory_space<vmem>>, vector<3x1024xf32>,
    %24 = math.cos %21 : vector<3x1024xf32>
    %c24 = arith.constant 24 : index
    %c0_13 = arith.constant 0 : index
    %25 = vector.load %arg2[%c24, %c0_13] : memref<27x1024xf32, #tpu.memory_space<vmem>>, vector<3x1024xf32>
    tpu.vector_store %arg2[%c24, %c0_13], %24 {strides = array<i32>} : memref<27x1024xf32, #tpu.memory_space<vmem>>, vector<3x1024xf32>,
    return
  }
  func.func @transform_0(%arg0: i32) -> (i32, i32) {
    %c0_i32 = arith.constant 0 : i32
    %c0_i32_0 = arith.constant 0 : i32
    return %c0_i32, %arg0 : i32, i32
  }
  func.func @transform_1(%arg0: i32) -> (i32, i32) {
    %c0_i32 = arith.constant 0 : i32
    %c0_i32_0 = arith.constant 0 : i32
    return %c0_i32, %arg0 : i32, i32
  }
}

</mosaic_0001>

<llo_original>
// kernel: tpu_custom_call.1
$region0: #{tpu_custom_call.1}
  #allocation0 [shape = 'u32[]', space=smem, size = 0x4, offset = 0x4, fixed_abs, tag = 'smem constant byte address 0x4 - core index']
  #allocation1 [shape = 'u32[144,128]{1,0:T(1,128)}', space=vmem, size = 0x12000, scoped, tag = 'internal scratch']
  %s0 = inlined_call_operand.hbm [shape: f32[3,1024], index: 0, kind: input, shape index: {}]
  %s1 = inlined_call_operand.hbm [shape: f32[27,1024], index: 1, kind: output, shape index: {}]
  %s2 = sld [smem:[#allocation0]]
  $region18: #{tpu_custom_call.1} parent=0
    _
  %s4 = ssub.s32 1, %s2
  %s5 = scalar_select 0, %s4, %s2
  $region1: #{tpu_custom_call.1} parent=0
    #allocation2 [shape = 'u8[16384]{0}', space=vmem, size = 0x4000, scoped, tag = 'input window, operand 0, single buffered']
    #allocation3 [shape = 's32[1]{0}', space=sflag, size = 0x4, scoped, tag = 'scoped memory for tpu_custom_call.1']
    #allocation4 [shape = 's32[1]{0}', space=sflag, size = 0x4, scoped, tag = 'scoped memory for tpu_custom_call.1']
    #allocation5 [shape = 'u8[131072]{0}', space=vmem, size = 0x20000, scoped, tag = 'output window, operand 0, single buffered']
    %6 = vsyncpa [#allocation3], 0
    %7 = vsyncpa [#allocation4], 0
    // Predicated region
    $region2: #{tpu_custom_call.1} parent=1 // pred_check
      _
    $region3: #{tpu_custom_call.1} parent=1 // pred_check_branch
      %9 = sbr.rel (0) target = $region5
    $region4: #{tpu_custom_call.1} parent=1 // pred_region
      %s11 = ssub.s32 512, 512
      %12 = vsyncadd [#allocation3], %s11
      %s14 = sshll.u32 [#allocation2], 4
      %s15 = int_to_ptr.vmem [resolvable:$true] %s14
      %17 = dma.hbm_to_vmem [thread:$0]  %s0, 512, %s15, [#allocation3]
    $region5: #{tpu_custom_call.1} parent=1 // pred_fallthru
      _
    // Predicated region
    $region6: #{tpu_custom_call.1} parent=1 // pred_check
      _
    $region7: #{tpu_custom_call.1} parent=1 // pred_check_branch
      %19 = sbr.rel (0) target = $region9
    $region8: #{tpu_custom_call.1} parent=1 // pred_region
      %20 = dma.done [#allocation3], 512
    $region9: #{tpu_custom_call.1} parent=1 // pred_fallthru
      _
    %v21 = vld [vmem:[#allocation2] sm:$0x77]
    %v22 = vld [vmem:[#allocation2 + $0x8] sm:$0x77]
    %v23 = vld [vmem:[#allocation2 + $0x10] sm:$0x77]
    %v24 = vld [vmem:[#allocation2 + $0x18] sm:$0x77]
    %v29 = vcombine.high %v21, %v21
    %v30 = vcombine.high %v22, %v22
    %v31 = vcombine.high %v23, %v23
    %v32 = vcombine.high %v24, %v24
    %37 = vst [vmem:[#allocation5] sm:$0x7] %v21
    %38 = vst [vmem:[#allocation5 + $0x8] sm:$0x7] %v29
    %39 = vst [vmem:[#allocation5 + $0x10] sm:$0x7] %v22
    %40 = vst [vmem:[#allocation5 + $0x18] sm:$0x7] %v30
    %41 = vst [vmem:[#allocation5 + $0x20] sm:$0x7] %v23
    %42 = vst [vmem:[#allocation5 + $0x28] sm:$0x7] %v31
    %43 = vst [vmem:[#allocation5 + $0x30] sm:$0x7] %v24
    %44 = vst [vmem:[#allocation5 + $0x38] sm:$0x7] %v32
    %v45 = vand.u32 2147483647, %v21
    %vm46 = vcmp.le.f32.partialorder %v45, 0.7853982
    %vm47 = vcmp.lt.s32.totalorder %v21, 0
    %v48 = vand.u32 %v21, 2139095040
    %v49 = vshrl.u32 %v48, 23
    %v50 = vsub.s32 %v49, 127
    %v51 = vand.u32 2147483647, %v21
    %v52 = vand.u32 %v51, 8388607
    %v53 = vor.u32 %v52, 8388608
    %v54 = vsub.s32 0, %v53
    %v55 = vadd.s32 %v50, 1
    %vm56 = vcmp.gt.s32.totalorder %v55, 0
    %v57 = vsel %vm56, %v55, 0
    %v58 = vshrl.u32 %v57, 5
    %v59 = vand.u32 %v57, 31
    %v60 = vsub.s32 32, %v59
    %v61 = vshrl.u32 683565275, %v60
    %v62 = vshll.u32 683565275, %v59
    %v63 = vshrl.u32 2475754826, %v60
    %v64 = vor.u32 %v62, %v63
    %v65 = vshll.u32 2475754826, %v59
    %v66 = vshrl.u32 2131351028, %v60
    %v67 = vor.u32 %v65, %v66
    %v68 = vshll.u32 2131351028, %v59
    %v69 = vshrl.u32 2102212464, %v60
    %v70 = vor.u32 %v68, %v69
    %v71 = vshll.u32 2102212464, %v59
    %v72 = vshrl.u32 920167782, %v60
    %v73 = vor.u32 %v71, %v72
    %v74 = vshll.u32 920167782, %v59
    %v75 = vshrl.u32 1326507024, %v60
    %v76 = vor.u32 %v74, %v75
    %vm77 = vcmp.lt.s32.totalorder %v58, 1
    %vm78 = vcmp.lt.s32.totalorder %v58, 2
    %vm79 = vcmp.lt.s32.totalorder %v58, 3
    %vm80 = vcmp.lt.s32.totalorder %v58, 4
    %v81 = vsel %vm77, %v61, %v64
    %v82 = vsel %vm80, %v70, 2102212464
    %v83 = vsel %vm79, %v67, %v82
    %v84 = vsel %vm78, %v81, %v83
    %v85 = vsel %vm77, %v64, %v67
    %v86 = vsel %vm80, %v73, 920167782
    %v87 = vsel %vm79, %v70, %v86
    %v88 = vsel %vm78, %v85, %v87
    %v89 = vsel %vm77, %v67, %v70
    %v90 = vsel %vm80, %v76, 1326507024
    %v91 = vsel %vm79, %v73, %v90
    %v92 = vsel %vm78, %v89, %v91
    %v93 = vshll.u32 %v53, 8
    %v94 = vmul.u32.u64.compose %v93, %v92
    %v95 = vextract.low.u32 %v94
    %v96 = vextract.high.u32 %v94
    %v97 = vmul.u32.u64.compose %v93, %v88
    %v98 = vextract.low.u32 %v97
    %v99 = vextract.high.u32 %v97
    %v100 = vmul.u32 %v93, %v84
    %v101 = vadd.s32 %v96, %v98
    %vm102 = vc.u32 %v96, %v98
    %v103 = vadd.s32 %v99, 1
    %v104 = vsel %vm102, %v103, %v99
    %v105 = vadd.s32 %v100, %v104
    %v106 = vadd.s32 %v105, 536870912
    %v107 = vshrl.u32 %v106, 30
    %v108 = vshll.u32 %v107, 30
    %v109 = vsub.s32 %v105, %v108
    %vm110 = vcmp.lt.s32.totalorder %v109, 0
    %v111 = vsub.s32 0, %v109
    %v112 = vsel %vm110, %v111, %v109
    %v113 = vclz %v112
    %v114 = vsub.s32 %v113, 2
    %vm115 = vcmp.gt.s32.totalorder 0, %v114
    %v116 = vsel %vm115, 0, %v114
    %v117 = vsub.s32 32, %v116
    %v118 = vshll.u32 %v109, %v116
    %v119 = vshrl.u32 %v101, %v117
    %v120 = vor.u32 %v118, %v119
    %v121 = vsub.s32 4294967266, %v116
    %v122 = vadd.s32 %v121, 127
    %v123 = vshll.u32 %v122, 23
    %v124 = vor.u32 4788187, %v123
    %v125 = vand.u32 2147483647, %v124
    %v127 = vcvt.s32.f32 %v120
    %v128 = vmul.f32 %v127, %v125
    %v129 = vxor.u32 %v128, 2147483648
    %v130 = vsel %vm47, %v129, %v128
    %v131 = vsub.s32 4, %v107
    %v132 = vsel %vm47, %v131, %v107
    %v133 = vsel %vm46, %v21, %v130
    %v134 = vsel %vm46, 0, %v132
    %v135 = vcosq.f32.pop %v133
    %v136 = vsinq.f32.pop %v133
    %vm137 = vweird.f32 %v21
    %v138 = vadd.s32 %v134, 3
    %v139 = vand.u32 %v138, 3
    %vm140 = vcmp.lt.s32.totalorder %v139, 2
    %vm141 = vcmp.eq.s32.totalorder %v139, 0
    %v142 = vxor.u32 %v136, 2147483648
    %v143 = vsel %vm141, %v135, %v142
    %vm144 = vcmp.eq.s32.totalorder %v139, 2
    %v145 = vxor.u32 %v135, 2147483648
    %v146 = vsel %vm144, %v145, %v136
    %v147 = vsel %vm140, %v143, %v146
    %v148 = vsel %vm137, nan, %v147
    %v149 = vand.u32 2147483647, %v22
    %vm150 = vcmp.le.f32.partialorder %v149, 0.7853982
    %vm151 = vcmp.lt.s32.totalorder %v22, 0
    %v152 = vand.u32 %v22, 2139095040
    %v153 = vshrl.u32 %v152, 23
    %v154 = vsub.s32 %v153, 127
    %v155 = vand.u32 2147483647, %v22
    %v156 = vand.u32 %v155, 8388607
    %v157 = vor.u32 %v156, 8388608
    %v158 = vsub.s32 0, %v157
    %v159 = vadd.s32 %v154, 1
    %vm160 = vcmp.gt.s32.totalorder %v159, 0
    %v161 = vsel %vm160, %v159, 0
    %v162 = vshrl.u32 %v161, 5
    %v163 = vand.u32 %v161, 31
    %v164 = vsub.s32 32, %v163
    %v165 = vshrl.u32 683565275, %v164
    %v166 = vshll.u32 683565275, %v163
    %v167 = vshrl.u32 2475754826, %v164
    %v168 = vor.u32 %v166, %v167
    %v169 = vshll.u32 2475754826, %v163
    %v170 = vshrl.u32 2131351028, %v164
    %v171 = vor.u32 %v169, %v170
    %v172 = vshll.u32 2131351028, %v163
    %v173 = vshrl.u32 2102212464, %v164
    %v174 = vor.u32 %v172, %v173
    %v175 = vshll.u32 2102212464, %v163
    %v176 = vshrl.u32 920167782, %v164
    %v177 = vor.u32 %v175, %v176
    %v178 = vshll.u32 920167782, %v163
    %v179 = vshrl.u32 1326507024, %v164
    %v180 = vor.u32 %v178, %v179
    %vm181 = vcmp.lt.s32.totalorder %v162, 1
    %vm182 = vcmp.lt.s32.totalorder %v162, 2
    %vm183 = vcmp.lt.s32.totalorder %v162, 3
    %vm184 = vcmp.lt.s32.totalorder %v162, 4
    %v185 = vsel %vm181, %v165, %v168
    %v186 = vsel %vm184, %v174, 2102212464
    %v187 = vsel %vm183, %v171, %v186
    %v188 = vsel %vm182, %v185, %v187
    %v189 = vsel %vm181, %v168, %v171
    %v190 = vsel %vm184, %v177, 920167782
    %v191 = vsel %vm183, %v174, %v190
    %v192 = vsel %vm182, %v189, %v191
    %v193 = vsel %vm181, %v171, %v174
    %v194 = vsel %vm184, %v180, 1326507024
    %v195 = vsel %vm183, %v177, %v194
    %v196 = vsel %vm182, %v193, %v195
    %v197 = vshll.u32 %v157, 8
    %v198 = vmul.u32.u64.compose %v197, %v196
    %v199 = vextract.low.u32 %v198
    %v200 = vextract.high.u32 %v198
    %v201 = vmul.u32.u64.compose %v197, %v192
    %v202 = vextract.low.u32 %v201
    %v203 = vextract.high.u32 %v201
    %v204 = vmul.u32 %v197, %v188
    %v205 = vadd.s32 %v200, %v202
    %vm206 = vc.u32 %v200, %v202
    %v207 = vadd.s32 %v203, 1
    %v208 = vsel %vm206, %v207, %v203
    %v209 = vadd.s32 %v204, %v208
    %v210 = vadd.s32 %v209, 536870912
    %v211 = vshrl.u32 %v210, 30
    %v212 = vshll.u32 %v211, 30
    %v213 = vsub.s32 %v209, %v212
    %vm214 = vcmp.lt.s32.totalorder %v213, 0
    %v215 = vsub.s32 0, %v213
    %v216 = vsel %vm214, %v215, %v213
    %v217 = vclz %v216
    %v218 = vsub.s32 %v217, 2
    %vm219 = vcmp.gt.s32.totalorder 0, %v218
    %v220 = vsel %vm219, 0, %v218
    %v221 = vsub.s32 32, %v220
    %v222 = vshll.u32 %v213, %v220
    %v223 = vshrl.u32 %v205, %v221
    %v224 = vor.u32 %v222, %v223
    %v225 = vsub.s32 4294967266, %v220
    %v226 = vadd.s32 %v225, 127
    %v227 = vshll.u32 %v226, 23
    %v228 = vor.u32 4788187, %v227
    %v229 = vand.u32 2147483647, %v228
    %v231 = vcvt.s32.f32 %v224
    %v232 = vmul.f32 %v231, %v229
    %v233 = vxor.u32 %v232, 2147483648
    %v234 = vsel %vm151, %v233, %v232
    %v235 = vsub.s32 4, %v211
    %v236 = vsel %vm151, %v235, %v211
    %v237 = vsel %vm150, %v22, %v234
    %v238 = vsel %vm150, 0, %v236
    %v239 = vcosq.f32.pop %v237
    %v240 = vsinq.f32.pop %v237
    %vm241 = vweird.f32 %v22
    %v242 = vadd.s32 %v238, 3
    %v243 = vand.u32 %v242, 3
    %vm244 = vcmp.lt.s32.totalorder %v243, 2
    %vm245 = vcmp.eq.s32.totalorder %v243, 0
    %v246 = vxor.u32 %v240, 2147483648
    %v247 = vsel %vm245, %v239, %v246
    %vm248 = vcmp.eq.s32.totalorder %v243, 2
    %v249 = vxor.u32 %v239, 2147483648
    %v250 = vsel %vm248, %v249, %v240
    %v251 = vsel %vm244, %v247, %v250
    %v252 = vsel %vm241, nan, %v251
    %v253 = vand.u32 2147483647, %v23
    %vm254 = vcmp.le.f32.partialorder %v253, 0.7853982
    %vm255 = vcmp.lt.s32.totalorder %v23, 0
    %v256 = vand.u32 %v23, 2139095040
    %v257 = vshrl.u32 %v256, 23
    %v258 = vsub.s32 %v257, 127
    %v259 = vand.u32 2147483647, %v23
    %v260 = vand.u32 %v259, 8388607
    %v261 = vor.u32 %v260, 8388608
    %v262 = vsub.s32 0, %v261
    %v263 = vadd.s32 %v258, 1
    %vm264 = vcmp.gt.s32.totalorder %v263, 0
    %v265 = vsel %vm264, %v263, 0
    %v266 = vshrl.u32 %v265, 5
    %v267 = vand.u32 %v265, 31
    %v268 = vsub.s32 32, %v267
    %v269 = vshrl.u32 683565275, %v268
    %v270 = vshll.u32 683565275, %v267
    %v271 = vshrl.u32 2475754826, %v268
    %v272 = vor.u32 %v270, %v271
    %v273 = vshll.u32 2475754826, %v267
    %v274 = vshrl.u32 2131351028, %v268
    %v275 = vor.u32 %v273, %v274
    %v276 = vshll.u32 2131351028, %v267
    %v277 = vshrl.u32 2102212464, %v268
    %v278 = vor.u32 %v276, %v277
    %v279 = vshll.u32 2102212464, %v267
    %v280 = vshrl.u32 920167782, %v268
    %v281 = vor.u32 %v279, %v280
    %v282 = vshll.u32 920167782, %v267
    %v283 = vshrl.u32 1326507024, %v268
    %v284 = vor.u32 %v282, %v283
    %vm285 = vcmp.lt.s32.totalorder %v266, 1
    %vm286 = vcmp.lt.s32.totalorder %v266, 2
    %vm287 = vcmp.lt.s32.totalorder %v266, 3
    %vm288 = vcmp.lt.s32.totalorder %v266, 4
    %v289 = vsel %vm285, %v269, %v272
    %v290 = vsel %vm288, %v278, 2102212464
    %v291 = vsel %vm287, %v275, %v290
    %v292 = vsel %vm286, %v289, %v291
    %v293 = vsel %vm285, %v272, %v275
    %v294 = vsel %vm288, %v281, 920167782
    %v295 = vsel %vm287, %v278, %v294
    %v296 = vsel %vm286, %v293, %v295
    %v297 = vsel %vm285, %v275, %v278
    %v298 = vsel %vm288, %v284, 1326507024
    %v299 = vsel %vm287, %v281, %v298
    %v300 = vsel %vm286, %v297, %v299
    %v301 = vshll.u32 %v261, 8
    %v302 = vmul.u32.u64.compose %v301, %v300
    %v303 = vextract.low.u32 %v302
    %v304 = vextract.high.u32 %v302
    %v305 = vmul.u32.u64.compose %v301, %v296
    %v306 = vextract.low.u32 %v305
    %v307 = vextract.high.u32 %v305
    %v308 = vmul.u32 %v301, %v292
    %v309 = vadd.s32 %v304, %v306
    %vm310 = vc.u32 %v304, %v306
    %v311 = vadd.s32 %v307, 1
    %v312 = vsel %vm310, %v311, %v307
    %v313 = vadd.s32 %v308, %v312
    %v314 = vadd.s32 %v313, 536870912
    %v315 = vshrl.u32 %v314, 30
    %v316 = vshll.u32 %v315, 30
    %v317 = vsub.s32 %v313, %v316
    %vm318 = vcmp.lt.s32.totalorder %v317, 0
    %v319 = vsub.s32 0, %v317
    %v320 = vsel %vm318, %v319, %v317
    %v321 = vclz %v320
    %v322 = vsub.s32 %v321, 2
    %vm323 = vcmp.gt.s32.totalorder 0, %v322
    %v324 = vsel %vm323, 0, %v322
    %v325 = vsub.s32 32, %v324
    %v326 = vshll.u32 %v317, %v324
    %v327 = vshrl.u32 %v309, %v325
    %v328 = vor.u32 %v326, %v327
    %v329 = vsub.s32 4294967266, %v324
    %v330 = vadd.s32 %v329, 127
    %v331 = vshll.u32 %v330, 23
    %v332 = vor.u32 4788187, %v331
    %v333 = vand.u32 2147483647, %v332
    %v335 = vcvt.s32.f32 %v328
    %v336 = vmul.f32 %v335, %v333
    %v337 = vxor.u32 %v336, 2147483648
    %v338 = vsel %vm255, %v337, %v336
    %v339 = vsub.s32 4, %v315
    %v340 = vsel %vm255, %v339, %v315
    %v341 = vsel %vm254, %v23, %v338
    %v342 = vsel %vm254, 0, %v340
    %v343 = vcosq.f32.pop %v341
    %v344 = vsinq.f32.pop %v341
    %vm345 = vweird.f32 %v23
    %v346 = vadd.s32 %v342, 3
    %v347 = vand.u32 %v346, 3
    %vm348 = vcmp.lt.s32.totalorder %v347, 2
    %vm349 = vcmp.eq.s32.totalorder %v347, 0
    %v350 = vxor.u32 %v344, 2147483648
    %v351 = vsel %vm349, %v343, %v350
    %vm352 = vcmp.eq.s32.totalorder %v347, 2
    %v353 = vxor.u32 %v343, 2147483648
    %v354 = vsel %vm352, %v353, %v344
    %v355 = vsel %vm348, %v351, %v354
    %v356 = vsel %vm345, nan, %v355
    %v357 = vand.u32 2147483647, %v24
    %vm358 = vcmp.le.f32.partialorder %v357, 0.7853982
    %vm359 = vcmp.lt.s32.totalorder %v24, 0
    %v360 = vand.u32 %v24, 2139095040
    %v361 = vshrl.u32 %v360, 23
    %v362 = vsub.s32 %v361, 127
    %v363 = vand.u32 2147483647, %v24
    %v364 = vand.u32 %v363, 8388607
    %v365 = vor.u32 %v364, 8388608
    %v366 = vsub.s32 0, %v365
    %v367 = vadd.s32 %v362, 1
    %vm368 = vcmp.gt.s32.totalorder %v367, 0
    %v369 = vsel %vm368, %v367, 0
    %v370 = vshrl.u32 %v369, 5
    %v371 = vand.u32 %v369, 31
    %v372 = vsub.s32 32, %v371
    %v373 = vshrl.u32 683565275, %v372
    %v374 = vshll.u32 683565275, %v371
    %v375 = vshrl.u32 2475754826, %v372
    %v376 = vor.u32 %v374, %v375
    %v377 = vshll.u32 2475754826, %v371
    %v378 = vshrl.u32 2131351028, %v372
    %v379 = vor.u32 %v377, %v378
    %v380 = vshll.u32 2131351028, %v371
    %v381 = vshrl.u32 2102212464, %v372
    %v382 = vor.u32 %v380, %v381
    %v383 = vshll.u32 2102212464, %v371
    %v384 = vshrl.u32 920167782, %v372
    %v385 = vor.u32 %v383, %v384
    %v386 = vshll.u32 920167782, %v371
    %v387 = vshrl.u32 1326507024, %v372
    %v388 = vor.u32 %v386, %v387
    %vm389 = vcmp.lt.s32.totalorder %v370, 1
    %vm390 = vcmp.lt.s32.totalorder %v370, 2
    %vm391 = vcmp.lt.s32.totalorder %v370, 3
    %vm392 = vcmp.lt.s32.totalorder %v370, 4
    %v393 = vsel %vm389, %v373, %v376
    %v394 = vsel %vm392, %v382, 2102212464
    %v395 = vsel %vm391, %v379, %v394
    %v396 = vsel %vm390, %v393, %v395
    %v397 = vsel %vm389, %v376, %v379
    %v398 = vsel %vm392, %v385, 920167782
    %v399 = vsel %vm391, %v382, %v398
    %v400 = vsel %vm390, %v397, %v399
    %v401 = vsel %vm389, %v379, %v382
    %v402 = vsel %vm392, %v388, 1326507024
    %v403 = vsel %vm391, %v385, %v402
    %v404 = vsel %vm390, %v401, %v403
    %v405 = vshll.u32 %v365, 8
    %v406 = vmul.u32.u64.compose %v405, %v404
    %v407 = vextract.low.u32 %v406
    %v408 = vextract.high.u32 %v406
    %v409 = vmul.u32.u64.compose %v405, %v400
    %v410 = vextract.low.u32 %v409
    %v411 = vextract.high.u32 %v409
    %v412 = vmul.u32 %v405, %v396
    %v413 = vadd.s32 %v408, %v410
    %vm414 = vc.u32 %v408, %v410
    %v415 = vadd.s32 %v411, 1
    %v416 = vsel %vm414, %v415, %v411
    %v417 = vadd.s32 %v412, %v416
    %v418 = vadd.s32 %v417, 536870912
    %v419 = vshrl.u32 %v418, 30
    %v420 = vshll.u32 %v419, 30
    %v421 = vsub.s32 %v417, %v420
    %vm422 = vcmp.lt.s32.totalorder %v421, 0
    %v423 = vsub.s32 0, %v421
    %v424 = vsel %vm422, %v423, %v421
    %v425 = vclz %v424
    %v426 = vsub.s32 %v425, 2
    %vm427 = vcmp.gt.s32.totalorder 0, %v426
    %v428 = vsel %vm427, 0, %v426
    %v429 = vsub.s32 32, %v428
    %v430 = vshll.u32 %v421, %v428
    %v431 = vshrl.u32 %v413, %v429
    %v432 = vor.u32 %v430, %v431
    %v433 = vsub.s32 4294967266, %v428
    %v434 = vadd.s32 %v433, 127
    %v435 = vshll.u32 %v434, 23
    %v436 = vor.u32 4788187, %v435
    %v437 = vand.u32 2147483647, %v436
    %v439 = vcvt.s32.f32 %v432
    %v440 = vmul.f32 %v439, %v437
    %v441 = vxor.u32 %v440, 2147483648
    %v442 = vsel %vm359, %v441, %v440
    %v443 = vsub.s32 4, %v419
    %v444 = vsel %vm359, %v443, %v419
    %v445 = vsel %vm358, %v24, %v442
    %v446 = vsel %vm358, 0, %v444
    %v447 = vcosq.f32.pop %v445
    %v448 = vsinq.f32.pop %v445
    %vm449 = vweird.f32 %v24
    %v450 = vadd.s32 %v446, 3
    %v451 = vand.u32 %v450, 3
    %vm452 = vcmp.lt.s32.totalorder %v451, 2
    %vm453 = vcmp.eq.s32.totalorder %v451, 0
    %v454 = vxor.u32 %v448, 2147483648
    %v455 = vsel %vm453, %v447, %v454
    %vm456 = vcmp.eq.s32.totalorder %v451, 2
    %v457 = vxor.u32 %v447, 2147483648
    %v458 = vsel %vm456, %v457, %v448
    %v459 = vsel %vm452, %v455, %v458
    %v460 = vsel %vm449, nan, %v459
    %v465 = vcombine.high %v148, %v148
    %v466 = vcombine.high %v252, %v252
    %v467 = vcombine.high %v356, %v356
    %v468 = vcombine.high %v460, %v460
    %v469 = vrot.slane %v148, 5
    %v470 = vrot.slane %v465, 5
    %v471 = vrot.slane %v252, 5
    %v472 = vrot.slane %v466, 5
    %v473 = vrot.slane %v356, 5
    %v474 = vrot.slane %v467, 5
    %v475 = vrot.slane %v460, 5
    %v476 = vrot.slane %v468, 5
    %485 = vst [vmem:[#allocation5] sm:$0x38] %v469
    %486 = vst [vmem:[#allocation5 + $0x8] sm:$0x38] %v470
    %487 = vst [vmem:[#allocation5 + $0x10] sm:$0x38] %v471
    %488 = vst [vmem:[#allocation5 + $0x18] sm:$0x38] %v472
    %489 = vst [vmem:[#allocation5 + $0x20] sm:$0x38] %v473
    %490 = vst [vmem:[#allocation5 + $0x28] sm:$0x38] %v474
    %491 = vst [vmem:[#allocation5 + $0x30] sm:$0x38] %v475
    %492 = vst [vmem:[#allocation5 + $0x38] sm:$0x38] %v476
    %v493 = vand.u32 2147483647, %v21
    %vm494 = vcmp.le.f32.partialorder %v493, 0.7853982
    %vm495 = vcmp.lt.s32.totalorder %v21, 0
    %v496 = vand.u32 %v21, 2139095040
    %v497 = vshrl.u32 %v496, 23
    %v498 = vsub.s32 %v497, 127
    %v499 = vand.u32 2147483647, %v21
    %v500 = vand.u32 %v499, 8388607
    %v501 = vor.u32 %v500, 8388608
    %v502 = vsub.s32 0, %v501
    %v503 = vadd.s32 %v498, 1
    %vm504 = vcmp.gt.s32.totalorder %v503, 0
    %v505 = vsel %vm504, %v503, 0
    %v506 = vshrl.u32 %v505, 5
    %v507 = vand.u32 %v505, 31
    %v508 = vsub.s32 32, %v507
    %v509 = vshrl.u32 683565275, %v508
    %v510 = vshll.u32 683565275, %v507
    %v511 = vshrl.u32 2475754826, %v508
    %v512 = vor.u32 %v510, %v511
    %v513 = vshll.u32 2475754826, %v507
    %v514 = vshrl.u32 2131351028, %v508
    %v515 = vor.u32 %v513, %v514
    %v516 = vshll.u32 2131351028, %v507
    %v517 = vshrl.u32 2102212464, %v508
    %v518 = vor.u32 %v516, %v517
    %v519 = vshll.u32 2102212464, %v507
    %v520 = vshrl.u32 920167782, %v508
    %v521 = vor.u32 %v519, %v520
    %v522 = vshll.u32 920167782, %v507
    %v523 = vshrl.u32 1326507024, %v508
    %v524 = vor.u32 %v522, %v523
    %vm525 = vcmp.lt.s32.totalorder %v506, 1
    %vm526 = vcmp.lt.s32.totalorder %v506, 2
    %vm527 = vcmp.lt.s32.totalorder %v506, 3
    %vm528 = vcmp.lt.s32.totalorder %v506, 4
    %v529 = vsel %vm525, %v509, %v512
    %v530 = vsel %vm528, %v518, 2102212464
    %v531 = vsel %vm527, %v515, %v530
    %v532 = vsel %vm526, %v529, %v531
    %v533 = vsel %vm525, %v512, %v515
    %v534 = vsel %vm528, %v521, 920167782
    %v535 = vsel %vm527, %v518, %v534
    %v536 = vsel %vm526, %v533, %v535
    %v537 = vsel %vm525, %v515, %v518
    %v538 = vsel %vm528, %v524, 1326507024
    %v539 = vsel %vm527, %v521, %v538
    %v540 = vsel %vm526, %v537, %v539
    %v541 = vshll.u32 %v501, 8
    %v542 = vmul.u32.u64.compose %v541, %v540
    %v543 = vextract.low.u32 %v542
    %v544 = vextract.high.u32 %v542
    %v545 = vmul.u32.u64.compose %v541, %v536
    %v546 = vextract.low.u32 %v545
    %v547 = vextract.high.u32 %v545
    %v548 = vmul.u32 %v541, %v532
    %v549 = vadd.s32 %v544, %v546
    %vm550 = vc.u32 %v544, %v546
    %v551 = vadd.s32 %v547, 1
    %v552 = vsel %vm550, %v551, %v547
    %v553 = vadd.s32 %v548, %v552
    %v554 = vadd.s32 %v553, 536870912
    %v555 = vshrl.u32 %v554, 30
    %v556 = vshll.u32 %v555, 30
    %v557 = vsub.s32 %v553, %v556
    %vm558 = vcmp.lt.s32.totalorder %v557, 0
    %v559 = vsub.s32 0, %v557
    %v560 = vsel %vm558, %v559, %v557
    %v561 = vclz %v560
    %v562 = vsub.s32 %v561, 2
    %vm563 = vcmp.gt.s32.totalorder 0, %v562
    %v564 = vsel %vm563, 0, %v562
    %v565 = vsub.s32 32, %v564
    %v566 = vshll.u32 %v557, %v564
    %v567 = vshrl.u32 %v549, %v565
    %v568 = vor.u32 %v566, %v567
    %v569 = vsub.s32 4294967266, %v564
    %v570 = vadd.s32 %v569, 127
    %v571 = vshll.u32 %v570, 23
    %v572 = vor.u32 4788187, %v571
    %v573 = vand.u32 2147483647, %v572
    %v575 = vcvt.s32.f32 %v568
    %v576 = vmul.f32 %v575, %v573
    %v577 = vxor.u32 %v576, 2147483648
    %v578 = vsel %vm495, %v577, %v576
    %v579 = vsub.s32 4, %v555
    %v580 = vsel %vm495, %v579, %v555
    %v581 = vsel %vm494, %v21, %v578
    %v582 = vsel %vm494, 0, %v580
    %v583 = vcosq.f32.pop %v581
    %v584 = vsinq.f32.pop %v581
    %vm585 = vweird.f32 %v21
    %v586 = vand.u32 %v582, 3
    %vm587 = vcmp.lt.s32.totalorder %v586, 2
    %vm588 = vcmp.eq.s32.totalorder %v586, 0
    %v589 = vxor.u32 %v584, 2147483648
    %v590 = vsel %vm588, %v583, %v589
    %vm591 = vcmp.eq.s32.totalorder %v586, 2
    %v592 = vxor.u32 %v583, 2147483648
    %v593 = vsel %vm591, %v592, %v584
    %v594 = vsel %vm587, %v590, %v593
    %v595 = vsel %vm585, nan, %v594
    %v596 = vand.u32 2147483647, %v22
    %vm597 = vcmp.le.f32.partialorder %v596, 0.7853982
    %vm598 = vcmp.lt.s32.totalorder %v22, 0
    %v599 = vand.u32 %v22, 2139095040
    %v600 = vshrl.u32 %v599, 23
    %v601 = vsub.s32 %v600, 127
    %v602 = vand.u32 2147483647, %v22
    %v603 = vand.u32 %v602, 8388607
    %v604 = vor.u32 %v603, 8388608
    %v605 = vsub.s32 0, %v604
    %v606 = vadd.s32 %v601, 1
    %vm607 = vcmp.gt.s32.totalorder %v606, 0
    %v608 = vsel %vm607, %v606, 0
    %v609 = vshrl.u32 %v608, 5
    %v610 = vand.u32 %v608, 31
    %v611 = vsub.s32 32, %v610
    %v612 = vshrl.u32 683565275, %v611
    %v613 = vshll.u32 683565275, %v610
    %v614 = vshrl.u32 2475754826, %v611
    %v615 = vor.u32 %v613, %v614
    %v616 = vshll.u32 2475754826, %v610
    %v617 = vshrl.u32 2131351028, %v611
    %v618 = vor.u32 %v616, %v617
    %v619 = vshll.u32 2131351028, %v610
    %v620 = vshrl.u32 2102212464, %v611
    %v621 = vor.u32 %v619, %v620
    %v622 = vshll.u32 2102212464, %v610
    %v623 = vshrl.u32 920167782, %v611
    %v624 = vor.u32 %v622, %v623
    %v625 = vshll.u32 920167782, %v610
    %v626 = vshrl.u32 1326507024, %v611
    %v627 = vor.u32 %v625, %v626
    %vm628 = vcmp.lt.s32.totalorder %v609, 1
    %vm629 = vcmp.lt.s32.totalorder %v609, 2
    %vm630 = vcmp.lt.s32.totalorder %v609, 3
    %vm631 = vcmp.lt.s32.totalorder %v609, 4
    %v632 = vsel %vm628, %v612, %v615
    %v633 = vsel %vm631, %v621, 2102212464
    %v634 = vsel %vm630, %v618, %v633
    %v635 = vsel %vm629, %v632, %v634
    %v636 = vsel %vm628, %v615, %v618
    %v637 = vsel %vm631, %v624, 920167782
    %v638 = vsel %vm630, %v621, %v637
    %v639 = vsel %vm629, %v636, %v638
    %v640 = vsel %vm628, %v618, %v621
    %v641 = vsel %vm631, %v627, 1326507024
    %v642 = vsel %vm630, %v624, %v641
    %v643 = vsel %vm629, %v640, %v642
    %v644 = vshll.u32 %v604, 8
    %v645 = vmul.u32.u64.compose %v644, %v643
    %v646 = vextract.low.u32 %v645
    %v647 = vextract.high.u32 %v645
    %v648 = vmul.u32.u64.compose %v644, %v639
    %v649 = vextract.low.u32 %v648
    %v650 = vextract.high.u32 %v648
    %v651 = vmul.u32 %v644, %v635
    %v652 = vadd.s32 %v647, %v649
    %vm653 = vc.u32 %v647, %v649
    %v654 = vadd.s32 %v650, 1
    %v655 = vsel %vm653, %v654, %v650
    %v656 = vadd.s32 %v651, %v655
    %v657 = vadd.s32 %v656, 536870912
    %v658 = vshrl.u32 %v657, 30
    %v659 = vshll.u32 %v658, 30
    %v660 = vsub.s32 %v656, %v659
    %vm661 = vcmp.lt.s32.totalorder %v660, 0
    %v662 = vsub.s32 0, %v660
    %v663 = vsel %vm661, %v662, %v660
    %v664 = vclz %v663
    %v665 = vsub.s32 %v664, 2
    %vm666 = vcmp.gt.s32.totalorder 0, %v665
    %v667 = vsel %vm666, 0, %v665
    %v668 = vsub.s32 32, %v667
    %v669 = vshll.u32 %v660, %v667
    %v670 = vshrl.u32 %v652, %v668
    %v671 = vor.u32 %v669, %v670
    %v672 = vsub.s32 4294967266, %v667
    %v673 = vadd.s32 %v672, 127
    %v674 = vshll.u32 %v673, 23
    %v675 = vor.u32 4788187, %v674
    %v676 = vand.u32 2147483647, %v675
    %v678 = vcvt.s32.f32 %v671
    %v679 = vmul.f32 %v678, %v676
    %v680 = vxor.u32 %v679, 2147483648
    %v681 = vsel %vm598, %v680, %v679
    %v682 = vsub.s32 4, %v658
    %v683 = vsel %vm598, %v682, %v658
    %v684 = vsel %vm597, %v22, %v681
    %v685 = vsel %vm597, 0, %v683
    %v686 = vcosq.f32.pop %v684
    %v687 = vsinq.f32.pop %v684
    %vm688 = vweird.f32 %v22
    %v689 = vand.u32 %v685, 3
    %vm690 = vcmp.lt.s32.totalorder %v689, 2
    %vm691 = vcmp.eq.s32.totalorder %v689, 0
    %v692 = vxor.u32 %v687, 2147483648
    %v693 = vsel %vm691, %v686, %v692
    %vm694 = vcmp.eq.s32.totalorder %v689, 2
    %v695 = vxor.u32 %v686, 2147483648
    %v696 = vsel %vm694, %v695, %v687
    %v697 = vsel %vm690, %v693, %v696
    %v698 = vsel %vm688, nan, %v697
    %v699 = vand.u32 2147483647, %v23
    %vm700 = vcmp.le.f32.partialorder %v699, 0.7853982
    %vm701 = vcmp.lt.s32.totalorder %v23, 0
    %v702 = vand.u32 %v23, 2139095040
    %v703 = vshrl.u32 %v702, 23
    %v704 = vsub.s32 %v703, 127
    %v705 = vand.u32 2147483647, %v23
    %v706 = vand.u32 %v705, 8388607
    %v707 = vor.u32 %v706, 8388608
    %v708 = vsub.s32 0, %v707
    %v709 = vadd.s32 %v704, 1
    %vm710 = vcmp.gt.s32.totalorder %v709, 0
    %v711 = vsel %vm710, %v709, 0
    %v712 = vshrl.u32 %v711, 5
    %v713 = vand.u32 %v711, 31
    %v714 = vsub.s32 32, %v713
    %v715 = vshrl.u32 683565275, %v714
    %v716 = vshll.u32 683565275, %v713
    %v717 = vshrl.u32 2475754826, %v714
    %v718 = vor.u32 %v716, %v717
    %v719 = vshll.u32 2475754826, %v713
    %v720 = vshrl.u32 2131351028, %v714
    %v721 = vor.u32 %v719, %v720
    %v722 = vshll.u32 2131351028, %v713
    %v723 = vshrl.u32 2102212464, %v714
    %v724 = vor.u32 %v722, %v723
    %v725 = vshll.u32 2102212464, %v713
    %v726 = vshrl.u32 920167782, %v714
    %v727 = vor.u32 %v725, %v726
    %v728 = vshll.u32 920167782, %v713
    %v729 = vshrl.u32 1326507024, %v714
    %v730 = vor.u32 %v728, %v729
    %vm731 = vcmp.lt.s32.totalorder %v712, 1
    %vm732 = vcmp.lt.s32.totalorder %v712, 2
    %vm733 = vcmp.lt.s32.totalorder %v712, 3
    %vm734 = vcmp.lt.s32.totalorder %v712, 4
    %v735 = vsel %vm731, %v715, %v718
    %v736 = vsel %vm734, %v724, 2102212464
    %v737 = vsel %vm733, %v721, %v736
    %v738 = vsel %vm732, %v735, %v737
    %v739 = vsel %vm731, %v718, %v721
    %v740 = vsel %vm734, %v727, 920167782
    %v741 = vsel %vm733, %v724, %v740
    %v742 = vsel %vm732, %v739, %v741
    %v743 = vsel %vm731, %v721, %v724
    %v744 = vsel %vm734, %v730, 1326507024
    %v745 = vsel %vm733, %v727, %v744
    %v746 = vsel %vm732, %v743, %v745
    %v747 = vshll.u32 %v707, 8
    %v748 = vmul.u32.u64.compose %v747, %v746
    %v749 = vextract.low.u32 %v748
    %v750 = vextract.high.u32 %v748
    %v751 = vmul.u32.u64.compose %v747, %v742
    %v752 = vextract.low.u32 %v751
    %v753 = vextract.high.u32 %v751
    %v754 = vmul.u32 %v747, %v738
    %v755 = vadd.s32 %v750, %v752
    %vm756 = vc.u32 %v750, %v752
    %v757 = vadd.s32 %v753, 1
    %v758 = vsel %vm756, %v757, %v753
    %v759 = vadd.s32 %v754, %v758
    %v760 = vadd.s32 %v759, 536870912
    %v761 = vshrl.u32 %v760, 30
    %v762 = vshll.u32 %v761, 30
    %v763 = vsub.s32 %v759, %v762
    %vm764 = vcmp.lt.s32.totalorder %v763, 0
    %v765 = vsub.s32 0, %v763
    %v766 = vsel %vm764, %v765, %v763
    %v767 = vclz %v766
    %v768 = vsub.s32 %v767, 2
    %vm769 = vcmp.gt.s32.totalorder 0, %v768
    %v770 = vsel %vm769, 0, %v768
    %v771 = vsub.s32 32, %v770
    %v772 = vshll.u32 %v763, %v770
    %v773 = vshrl.u32 %v755, %v771
    %v774 = vor.u32 %v772, %v773
    %v775 = vsub.s32 4294967266, %v770
    %v776 = vadd.s32 %v775, 127
    %v777 = vshll.u32 %v776, 23
    %v778 = vor.u32 4788187, %v777
    %v779 = vand.u32 2147483647, %v778
    %v781 = vcvt.s32.f32 %v774
    %v782 = vmul.f32 %v781, %v779
    %v783 = vxor.u32 %v782, 2147483648
    %v784 = vsel %vm701, %v783, %v782
    %v785 = vsub.s32 4, %v761
    %v786 = vsel %vm701, %v785, %v761
    %v787 = vsel %vm700, %v23, %v784
    %v788 = vsel %vm700, 0, %v786
    %v789 = vcosq.f32.pop %v787
    %v790 = vsinq.f32.pop %v787
    %vm791 = vweird.f32 %v23
    %v792 = vand.u32 %v788, 3
    %vm793 = vcmp.lt.s32.totalorder %v792, 2
    %vm794 = vcmp.eq.s32.totalorder %v792, 0
    %v795 = vxor.u32 %v790, 2147483648
    %v796 = vsel %vm794, %v789, %v795
    %vm797 = vcmp.eq.s32.totalorder %v792, 2
    %v798 = vxor.u32 %v789, 2147483648
    %v799 = vsel %vm797, %v798, %v790
    %v800 = vsel %vm793, %v796, %v799
    %v801 = vsel %vm791, nan, %v800
    %v802 = vand.u32 2147483647, %v24
    %vm803 = vcmp.le.f32.partialorder %v802, 0.7853982
    %vm804 = vcmp.lt.s32.totalorder %v24, 0
    %v805 = vand.u32 %v24, 2139095040
    %v806 = vshrl.u32 %v805, 23
    %v807 = vsub.s32 %v806, 127
    %v808 = vand.u32 2147483647, %v24
    %v809 = vand.u32 %v808, 8388607
    %v810 = vor.u32 %v809, 8388608
    %v811 = vsub.s32 0, %v810
    %v812 = vadd.s32 %v807, 1
    %vm813 = vcmp.gt.s32.totalorder %v812, 0
    %v814 = vsel %vm813, %v812, 0
    %v815 = vshrl.u32 %v814, 5
    %v816 = vand.u32 %v814, 31
    %v817 = vsub.s32 32, %v816
    %v818 = vshrl.u32 683565275, %v817
    %v819 = vshll.u32 683565275, %v816
    %v820 = vshrl.u32 2475754826, %v817
    %v821 = vor.u32 %v819, %v820
    %v822 = vshll.u32 2475754826, %v816
    %v823 = vshrl.u32 2131351028, %v817
    %v824 = vor.u32 %v822, %v823
    %v825 = vshll.u32 2131351028, %v816
    %v826 = vshrl.u32 2102212464, %v817
    %v827 = vor.u32 %v825, %v826
    %v828 = vshll.u32 2102212464, %v816
    %v829 = vshrl.u32 920167782, %v817
    %v830 = vor.u32 %v828, %v829
    %v831 = vshll.u32 920167782, %v816
    %v832 = vshrl.u32 1326507024, %v817
    %v833 = vor.u32 %v831, %v832
    %vm834 = vcmp.lt.s32.totalorder %v815, 1
    %vm835 = vcmp.lt.s32.totalorder %v815, 2
    %vm836 = vcmp.lt.s32.totalorder %v815, 3
    %vm837 = vcmp.lt.s32.totalorder %v815, 4
    %v838 = vsel %vm834, %v818, %v821
    %v839 = vsel %vm837, %v827, 2102212464
    %v840 = vsel %vm836, %v824, %v839
    %v841 = vsel %vm835, %v838, %v840
    %v842 = vsel %vm834, %v821, %v824
    %v843 = vsel %vm837, %v830, 920167782
    %v844 = vsel %vm836, %v827, %v843
    %v845 = vsel %vm835, %v842, %v844
    %v846 = vsel %vm834, %v824, %v827
    %v847 = vsel %vm837, %v833, 1326507024
    %v848 = vsel %vm836, %v830, %v847
    %v849 = vsel %vm835, %v846, %v848
    %v850 = vshll.u32 %v810, 8
    %v851 = vmul.u32.u64.compose %v850, %v849
    %v852 = vextract.low.u32 %v851
    %v853 = vextract.high.u32 %v851
    %v854 = vmul.u32.u64.compose %v850, %v845
    %v855 = vextract.low.u32 %v854
    %v856 = vextract.high.u32 %v854
    %v857 = vmul.u32 %v850, %v841
    %v858 = vadd.s32 %v853, %v855
    %vm859 = vc.u32 %v853, %v855
    %v860 = vadd.s32 %v856, 1
    %v861 = vsel %vm859, %v860, %v856
    %v862 = vadd.s32 %v857, %v861
    %v863 = vadd.s32 %v862, 536870912
    %v864 = vshrl.u32 %v863, 30
    %v865 = vshll.u32 %v864, 30
    %v866 = vsub.s32 %v862, %v865
    %vm867 = vcmp.lt.s32.totalorder %v866, 0
    %v868 = vsub.s32 0, %v866
    %v869 = vsel %vm867, %v868, %v866
    %v870 = vclz %v869
    %v871 = vsub.s32 %v870, 2
    %vm872 = vcmp.gt.s32.totalorder 0, %v871
    %v873 = vsel %vm872, 0, %v871
    %v874 = vsub.s32 32, %v873
    %v875 = vshll.u32 %v866, %v873
    %v876 = vshrl.u32 %v858, %v874
    %v877 = vor.u32 %v875, %v876
    %v878 = vsub.s32 4294967266, %v873
    %v879 = vadd.s32 %v878, 127
    %v880 = vshll.u32 %v879, 23
    %v881 = vor.u32 4788187, %v880
    %v882 = vand.u32 2147483647, %v881
    %v884 = vcvt.s32.f32 %v877
    %v885 = vmul.f32 %v884, %v882
    %v886 = vxor.u32 %v885, 2147483648
    %v887 = vsel %vm804, %v886, %v885
    %v888 = vsub.s32 4, %v864
    %v889 = vsel %vm804, %v888, %v864
    %v890 = vsel %vm803, %v24, %v887
    %v891 = vsel %vm803, 0, %v889
    %v892 = vcosq.f32.pop %v890
    %v893 = vsinq.f32.pop %v890
    %vm894 = vweird.f32 %v24
    %v895 = vand.u32 %v891, 3
    %vm896 = vcmp.lt.s32.totalorder %v895, 2
    %vm897 = vcmp.eq.s32.totalorder %v895, 0
    %v898 = vxor.u32 %v893, 2147483648
    %v899 = vsel %vm897, %v892, %v898
    %vm900 = vcmp.eq.s32.totalorder %v895, 2
    %v901 = vxor.u32 %v892, 2147483648
    %v902 = vsel %vm900, %v901, %v893
    %v903 = vsel %vm896, %v899, %v902
    %v904 = vsel %vm894, nan, %v903
    %v909 = vcombine.high %v595, %v595
    %v910 = vcombine.high %v698, %v698
    %v911 = vcombine.high %v801, %v801
    %v912 = vcombine.high %v904, %v904
    %v913 = vrot.slane %v595, 2
    %v914 = vrot.slane %v909, 2
    %v915 = vrot.slane %v698, 2
    %v916 = vrot.slane %v910, 2
    %v917 = vrot.slane %v801, 2
    %v918 = vrot.slane %v911, 2
    %v919 = vrot.slane %v904, 2
    %v920 = vrot.slane %v912, 2
    %929 = vst [vmem:[#allocation5] sm:$0xc0] %v913
    %930 = vst [vmem:[#allocation5 + $0x8] sm:$0xc0] %v914
    %931 = vst [vmem:[#allocation5 + $0x10] sm:$0xc0] %v915
    %932 = vst [vmem:[#allocation5 + $0x18] sm:$0xc0] %v916
    %933 = vst [vmem:[#allocation5 + $0x20] sm:$0xc0] %v917
    %934 = vst [vmem:[#allocation5 + $0x28] sm:$0xc0] %v918
    %935 = vst [vmem:[#allocation5 + $0x30] sm:$0xc0] %v919
    %936 = vst [vmem:[#allocation5 + $0x38] sm:$0xc0] %v920
    %937 = vst [vmem:[#allocation5 + $0x40] sm:$0x1] %v913
    %938 = vst [vmem:[#allocation5 + $0x48] sm:$0x1] %v914
    %939 = vst [vmem:[#allocation5 + $0x50] sm:$0x1] %v915
    %940 = vst [vmem:[#allocation5 + $0x58] sm:$0x1] %v916
    %941 = vst [vmem:[#allocation5 + $0x60] sm:$0x1] %v917
    %942 = vst [vmem:[#allocation5 + $0x68] sm:$0x1] %v918
    %943 = vst [vmem:[#allocation5 + $0x70] sm:$0x1] %v919
    %944 = vst [vmem:[#allocation5 + $0x78] sm:$0x1] %v920
    %v945 = vmul.f32 %v21, 2.0
    %v946 = vmul.f32 %v22, 2.0
    %v947 = vmul.f32 %v23, 2.0
    %v948 = vmul.f32 %v24, 2.0
    %v949 = vand.u32 2147483647, %v945
    %vm950 = vcmp.le.f32.partialorder %v949, 0.7853982
    %vm951 = vcmp.lt.s32.totalorder %v945, 0
    %v952 = vand.u32 %v945, 2139095040
    %v953 = vshrl.u32 %v952, 23
    %v954 = vsub.s32 %v953, 127
    %v955 = vand.u32 2147483647, %v945
    %v956 = vand.u32 %v955, 8388607
    %v957 = vor.u32 %v956, 8388608
    %v958 = vsub.s32 0, %v957
    %v959 = vadd.s32 %v954, 1
    %vm960 = vcmp.gt.s32.totalorder %v959, 0
    %v961 = vsel %vm960, %v959, 0
    %v962 = vshrl.u32 %v961, 5
    %v963 = vand.u32 %v961, 31
    %v964 = vsub.s32 32, %v963
    %v965 = vshrl.u32 683565275, %v964
    %v966 = vshll.u32 683565275, %v963
    %v967 = vshrl.u32 2475754826, %v964
    %v968 = vor.u32 %v966, %v967
    %v969 = vshll.u32 2475754826, %v963
    %v970 = vshrl.u32 2131351028, %v964
    %v971 = vor.u32 %v969, %v970
    %v972 = vshll.u32 2131351028, %v963
    %v973 = vshrl.u32 2102212464, %v964
    %v974 = vor.u32 %v972, %v973
    %v975 = vshll.u32 2102212464, %v963
    %v976 = vshrl.u32 920167782, %v964
    %v977 = vor.u32 %v975, %v976
    %v978 = vshll.u32 920167782, %v963
    %v979 = vshrl.u32 1326507024, %v964
    %v980 = vor.u32 %v978, %v979
    %vm981 = vcmp.lt.s32.totalorder %v962, 1
    %vm982 = vcmp.lt.s32.totalorder %v962, 2
    %vm983 = vcmp.lt.s32.totalorder %v962, 3
    %vm984 = vcmp.lt.s32.totalorder %v962, 4
    %v985 = vsel %vm981, %v965, %v968
    %v986 = vsel %vm984, %v974, 2102212464
    %v987 = vsel %vm983, %v971, %v986
    %v988 = vsel %vm982, %v985, %v987
    %v989 = vsel %vm981, %v968, %v971
    %v990 = vsel %vm984, %v977, 920167782
    %v991 = vsel %vm983, %v974, %v990
    %v992 = vsel %vm982, %v989, %v991
    %v993 = vsel %vm981, %v971, %v974
    %v994 = vsel %vm984, %v980, 1326507024
    %v995 = vsel %vm983, %v977, %v994
    %v996 = vsel %vm982, %v993, %v995
    %v997 = vshll.u32 %v957, 8
    %v998 = vmul.u32.u64.compose %v997, %v996
    %v999 = vextract.low.u32 %v998
    %v1000 = vextract.high.u32 %v998
    %v1001 = vmul.u32.u64.compose %v997, %v992
    %v1002 = vextract.low.u32 %v1001
    %v1003 = vextract.high.u32 %v1001
    %v1004 = vmul.u32 %v997, %v988
    %v1005 = vadd.s32 %v1000, %v1002
    %vm1006 = vc.u32 %v1000, %v1002
    %v1007 = vadd.s32 %v1003, 1
    %v1008 = vsel %vm1006, %v1007, %v1003
    %v1009 = vadd.s32 %v1004, %v1008
    %v1010 = vadd.s32 %v1009, 536870912
    %v1011 = vshrl.u32 %v1010, 30
    %v1012 = vshll.u32 %v1011, 30
    %v1013 = vsub.s32 %v1009, %v1012
    %vm1014 = vcmp.lt.s32.totalorder %v1013, 0
    %v1015 = vsub.s32 0, %v1013
    %v1016 = vsel %vm1014, %v1015, %v1013
    %v1017 = vclz %v1016
    %v1018 = vsub.s32 %v1017, 2
    %vm1019 = vcmp.gt.s32.totalorder 0, %v1018
    %v1020 = vsel %vm1019, 0, %v1018
    %v1021 = vsub.s32 32, %v1020
    %v1022 = vshll.u32 %v1013, %v1020
    %v1023 = vshrl.u32 %v1005, %v1021
    %v1024 = vor.u32 %v1022, %v1023
    %v1025 = vsub.s32 4294967266, %v1020
    %v1026 = vadd.s32 %v1025, 127
    %v1027 = vshll.u32 %v1026, 23
    %v1028 = vor.u32 4788187, %v1027
    %v1029 = vand.u32 2147483647, %v1028
    %v1031 = vcvt.s32.f32 %v1024
    %v1032 = vmul.f32 %v1031, %v1029
    %v1033 = vxor.u32 %v1032, 2147483648
    %v1034 = vsel %vm951, %v1033, %v1032
    %v1035 = vsub.s32 4, %v1011
    %v1036 = vsel %vm951, %v1035, %v1011
    %v1037 = vsel %vm950, %v945, %v1034
    %v1038 = vsel %vm950, 0, %v1036
    %v1039 = vcosq.f32.pop %v1037
    %v1040 = vsinq.f32.pop %v1037
    %vm1041 = vweird.f32 %v945
    %v1042 = vadd.s32 %v1038, 3
    %v1043 = vand.u32 %v1042, 3
    %vm1044 = vcmp.lt.s32.totalorder %v1043, 2
    %vm1045 = vcmp.eq.s32.totalorder %v1043, 0
    %v1046 = vxor.u32 %v1040, 2147483648
    %v1047 = vsel %vm1045, %v1039, %v1046
    %vm1048 = vcmp.eq.s32.totalorder %v1043, 2
    %v1049 = vxor.u32 %v1039, 2147483648
    %v1050 = vsel %vm1048, %v1049, %v1040
    %v1051 = vsel %vm1044, %v1047, %v1050
    %v1052 = vsel %vm1041, nan, %v1051
    %v1053 = vand.u32 2147483647, %v946
    %vm1054 = vcmp.le.f32.partialorder %v1053, 0.7853982
    %vm1055 = vcmp.lt.s32.totalorder %v946, 0
    %v1056 = vand.u32 %v946, 2139095040
    %v1057 = vshrl.u32 %v1056, 23
    %v1058 = vsub.s32 %v1057, 127
    %v1059 = vand.u32 2147483647, %v946
    %v1060 = vand.u32 %v1059, 8388607
    %v1061 = vor.u32 %v1060, 8388608
    %v1062 = vsub.s32 0, %v1061
    %v1063 = vadd.s32 %v1058, 1
    %vm1064 = vcmp.gt.s32.totalorder %v1063, 0
    %v1065 = vsel %vm1064, %v1063, 0
    %v1066 = vshrl.u32 %v1065, 5
    %v1067 = vand.u32 %v1065, 31
    %v1068 = vsub.s32 32, %v1067
    %v1069 = vshrl.u32 683565275, %v1068
    %v1070 = vshll.u32 683565275, %v1067
    %v1071 = vshrl.u32 2475754826, %v1068
    %v1072 = vor.u32 %v1070, %v1071
    %v1073 = vshll.u32 2475754826, %v1067
    %v1074 = vshrl.u32 2131351028, %v1068
    %v1075 = vor.u32 %v1073, %v1074
    %v1076 = vshll.u32 2131351028, %v1067
    %v1077 = vshrl.u32 2102212464, %v1068
    %v1078 = vor.u32 %v1076, %v1077
    %v1079 = vshll.u32 2102212464, %v1067
    %v1080 = vshrl.u32 920167782, %v1068
    %v1081 = vor.u32 %v1079, %v1080
    %v1082 = vshll.u32 920167782, %v1067
    %v1083 = vshrl.u32 1326507024, %v1068
    %v1084 = vor.u32 %v1082, %v1083
    %vm1085 = vcmp.lt.s32.totalorder %v1066, 1
    %vm1086 = vcmp.lt.s32.totalorder %v1066, 2
    %vm1087 = vcmp.lt.s32.totalorder %v1066, 3
    %vm1088 = vcmp.lt.s32.totalorder %v1066, 4
    %v1089 = vsel %vm1085, %v1069, %v1072
    %v1090 = vsel %vm1088, %v1078, 2102212464
    %v1091 = vsel %vm1087, %v1075, %v1090
    %v1092 = vsel %vm1086, %v1089, %v1091
    %v1093 = vsel %vm1085, %v1072, %v1075
    %v1094 = vsel %vm1088, %v1081, 920167782
    %v1095 = vsel %vm1087, %v1078, %v1094
    %v1096 = vsel %vm1086, %v1093, %v1095
    %v1097 = vsel %vm1085, %v1075, %v1078
    %v1098 = vsel %vm1088, %v1084, 1326507024
    %v1099 = vsel %vm1087, %v1081, %v1098
    %v1100 = vsel %vm1086, %v1097, %v1099
    %v1101 = vshll.u32 %v1061, 8
    %v1102 = vmul.u32.u64.compose %v1101, %v1100
    %v1103 = vextract.low.u32 %v1102
    %v1104 = vextract.high.u32 %v1102
    %v1105 = vmul.u32.u64.compose %v1101, %v1096
    %v1106 = vextract.low.u32 %v1105
    %v1107 = vextract.high.u32 %v1105
    %v1108 = vmul.u32 %v1101, %v1092
    %v1109 = vadd.s32 %v1104, %v1106
    %vm1110 = vc.u32 %v1104, %v1106
    %v1111 = vadd.s32 %v1107, 1
    %v1112 = vsel %vm1110, %v1111, %v1107
    %v1113 = vadd.s32 %v1108, %v1112
    %v1114 = vadd.s32 %v1113, 536870912
    %v1115 = vshrl.u32 %v1114, 30
    %v1116 = vshll.u32 %v1115, 30
    %v1117 = vsub.s32 %v1113, %v1116
    %vm1118 = vcmp.lt.s32.totalorder %v1117, 0
    %v1119 = vsub.s32 0, %v1117
    %v1120 = vsel %vm1118, %v1119, %v1117
    %v1121 = vclz %v1120
    %v1122 = vsub.s32 %v1121, 2
    %vm1123 = vcmp.gt.s32.totalorder 0, %v1122
    %v1124 = vsel %vm1123, 0, %v1122
    %v1125 = vsub.s32 32, %v1124
    %v1126 = vshll.u32 %v1117, %v1124
    %v1127 = vshrl.u32 %v1109, %v1125
    %v1128 = vor.u32 %v1126, %v1127
    %v1129 = vsub.s32 4294967266, %v1124
    %v1130 = vadd.s32 %v1129, 127
    %v1131 = vshll.u32 %v1130, 23
    %v1132 = vor.u32 4788187, %v1131
    %v1133 = vand.u32 2147483647, %v1132
    %v1135 = vcvt.s32.f32 %v1128
    %v1136 = vmul.f32 %v1135, %v1133
    %v1137 = vxor.u32 %v1136, 2147483648
    %v1138 = vsel %vm1055, %v1137, %v1136
    %v1139 = vsub.s32 4, %v1115
    %v1140 = vsel %vm1055, %v1139, %v1115
    %v1141 = vsel %vm1054, %v946, %v1138
    %v1142 = vsel %vm1054, 0, %v1140
    %v1143 = vcosq.f32.pop %v1141
    %v1144 = vsinq.f32.pop %v1141
    %vm1145 = vweird.f32 %v946
    %v1146 = vadd.s32 %v1142, 3
    %v1147 = vand.u32 %v1146, 3
    %vm1148 = vcmp.lt.s32.totalorder %v1147, 2
    %vm1149 = vcmp.eq.s32.totalorder %v1147, 0
    %v1150 = vxor.u32 %v1144, 2147483648
    %v1151 = vsel %vm1149, %v1143, %v1150
    %vm1152 = vcmp.eq.s32.totalorder %v1147, 2
    %v1153 = vxor.u32 %v1143, 2147483648
    %v1154 = vsel %vm1152, %v1153, %v1144
    %v1155 = vsel %vm1148, %v1151, %v1154
    %v1156 = vsel %vm1145, nan, %v1155
    %v1157 = vand.u32 2147483647, %v947
    %vm1158 = vcmp.le.f32.partialorder %v1157, 0.7853982
    %vm1159 = vcmp.lt.s32.totalorder %v947, 0
    %v1160 = vand.u32 %v947, 2139095040
    %v1161 = vshrl.u32 %v1160, 23
    %v1162 = vsub.s32 %v1161, 127
    %v1163 = vand.u32 2147483647, %v947
    %v1164 = vand.u32 %v1163, 8388607
    %v1165 = vor.u32 %v1164, 8388608
    %v1166 = vsub.s32 0, %v1165
    %v1167 = vadd.s32 %v1162, 1
    %vm1168 = vcmp.gt.s32.totalorder %v1167, 0
    %v1169 = vsel %vm1168, %v1167, 0
    %v1170 = vshrl.u32 %v1169, 5
    %v1171 = vand.u32 %v1169, 31
    %v1172 = vsub.s32 32, %v1171
    %v1173 = vshrl.u32 683565275, %v1172
    %v1174 = vshll.u32 683565275, %v1171
    %v1175 = vshrl.u32 2475754826, %v1172
    %v1176 = vor.u32 %v1174, %v1175
    %v1177 = vshll.u32 2475754826, %v1171
    %v1178 = vshrl.u32 2131351028, %v1172
    %v1179 = vor.u32 %v1177, %v1178
    %v1180 = vshll.u32 2131351028, %v1171
    %v1181 = vshrl.u32 2102212464, %v1172
    %v1182 = vor.u32 %v1180, %v1181
    %v1183 = vshll.u32 2102212464, %v1171
    %v1184 = vshrl.u32 920167782, %v1172
    %v1185 = vor.u32 %v1183, %v1184
    %v1186 = vshll.u32 920167782, %v1171
    %v1187 = vshrl.u32 1326507024, %v1172
    %v1188 = vor.u32 %v1186, %v1187
    %vm1189 = vcmp.lt.s32.totalorder %v1170, 1
    %vm1190 = vcmp.lt.s32.totalorder %v1170, 2
    %vm1191 = vcmp.lt.s32.totalorder %v1170, 3
    %vm1192 = vcmp.lt.s32.totalorder %v1170, 4
    %v1193 = vsel %vm1189, %v1173, %v1176
    %v1194 = vsel %vm1192, %v1182, 2102212464
    %v1195 = vsel %vm1191, %v1179, %v1194
    %v1196 = vsel %vm1190, %v1193, %v1195
    %v1197 = vsel %vm1189, %v1176, %v1179
    %v1198 = vsel %vm1192, %v1185, 920167782
    %v1199 = vsel %vm1191, %v1182, %v1198
    %v1200 = vsel %vm1190, %v1197, %v1199
    %v1201 = vsel %vm1189, %v1179, %v1182
    %v1202 = vsel %vm1192, %v1188, 1326507024
    %v1203 = vsel %vm1191, %v1185, %v1202
    %v1204 = vsel %vm1190, %v1201, %v1203
    %v1205 = vshll.u32 %v1165, 8
    %v1206 = vmul.u32.u64.compose %v1205, %v1204
    %v1207 = vextract.low.u32 %v1206
    %v1208 = vextract.high.u32 %v1206
    %v1209 = vmul.u32.u64.compose %v1205, %v1200
    %v1210 = vextract.low.u32 %v1209
    %v1211 = vextract.high.u32 %v1209
    %v1212 = vmul.u32 %v1205, %v1196
    %v1213 = vadd.s32 %v1208, %v1210
    %vm1214 = vc.u32 %v1208, %v1210
    %v1215 = vadd.s32 %v1211, 1
    %v1216 = vsel %vm1214, %v1215, %v1211
    %v1217 = vadd.s32 %v1212, %v1216
    %v1218 = vadd.s32 %v1217, 536870912
    %v1219 = vshrl.u32 %v1218, 30
    %v1220 = vshll.u32 %v1219, 30
    %v1221 = vsub.s32 %v1217, %v1220
    %vm1222 = vcmp.lt.s32.totalorder %v1221, 0
    %v1223 = vsub.s32 0, %v1221
    %v1224 = vsel %vm1222, %v1223, %v1221
    %v1225 = vclz %v1224
    %v1226 = vsub.s32 %v1225, 2
    %vm1227 = vcmp.gt.s32.totalorder 0, %v1226
    %v1228 = vsel %vm1227, 0, %v1226
    %v1229 = vsub.s32 32, %v1228
    %v1230 = vshll.u32 %v1221, %v1228
    %v1231 = vshrl.u32 %v1213, %v1229
    %v1232 = vor.u32 %v1230, %v1231
    %v1233 = vsub.s32 4294967266, %v1228
    %v1234 = vadd.s32 %v1233, 127
    %v1235 = vshll.u32 %v1234, 23
    %v1236 = vor.u32 4788187, %v1235
    %v1237 = vand.u32 2147483647, %v1236
    %v1239 = vcvt.s32.f32 %v1232
    %v1240 = vmul.f32 %v1239, %v1237
    %v1241 = vxor.u32 %v1240, 2147483648
    %v1242 = vsel %vm1159, %v1241, %v1240
    %v1243 = vsub.s32 4, %v1219
    %v1244 = vsel %vm1159, %v1243, %v1219
    %v1245 = vsel %vm1158, %v947, %v1242
    %v1246 = vsel %vm1158, 0, %v1244
    %v1247 = vcosq.f32.pop %v1245
    %v1248 = vsinq.f32.pop %v1245
    %vm1249 = vweird.f32 %v947
    %v1250 = vadd.s32 %v1246, 3
    %v1251 = vand.u32 %v1250, 3
    %vm1252 = vcmp.lt.s32.totalorder %v1251, 2
    %vm1253 = vcmp.eq.s32.totalorder %v1251, 0
    %v1254 = vxor.u32 %v1248, 2147483648
    %v1255 = vsel %vm1253, %v1247, %v1254
    %vm1256 = vcmp.eq.s32.totalorder %v1251, 2
    %v1257 = vxor.u32 %v1247, 2147483648
    %v1258 = vsel %vm1256, %v1257, %v1248
    %v1259 = vsel %vm1252, %v1255, %v1258
    %v1260 = vsel %vm1249, nan, %v1259
    %v1261 = vand.u32 2147483647, %v948
    %vm1262 = vcmp.le.f32.partialorder %v1261, 0.7853982
    %vm1263 = vcmp.lt.s32.totalorder %v948, 0
    %v1264 = vand.u32 %v948, 2139095040
    %v1265 = vshrl.u32 %v1264, 23
    %v1266 = vsub.s32 %v1265, 127
    %v1267 = vand.u32 2147483647, %v948
    %v1268 = vand.u32 %v1267, 8388607
    %v1269 = vor.u32 %v1268, 8388608
    %v1270 = vsub.s32 0, %v1269
    %v1271 = vadd.s32 %v1266, 1
    %vm1272 = vcmp.gt.s32.totalorder %v1271, 0
    %v1273 = vsel %vm1272, %v1271, 0
    %v1274 = vshrl.u32 %v1273, 5
    %v1275 = vand.u32 %v1273, 31
    %v1276 = vsub.s32 32, %v1275
    %v1277 = vshrl.u32 683565275, %v1276
    %v1278 = vshll.u32 683565275, %v1275
    %v1279 = vshrl.u32 2475754826, %v1276
    %v1280 = vor.u32 %v1278, %v1279
    %v1281 = vshll.u32 2475754826, %v1275
    %v1282 = vshrl.u32 2131351028, %v1276
    %v1283 = vor.u32 %v1281, %v1282
    %v1284 = vshll.u32 2131351028, %v1275
    %v1285 = vshrl.u32 2102212464, %v1276
    %v1286 = vor.u32 %v1284, %v1285
    %v1287 = vshll.u32 2102212464, %v1275
    %v1288 = vshrl.u32 920167782, %v1276
    %v1289 = vor.u32 %v1287, %v1288
    %v1290 = vshll.u32 920167782, %v1275
    %v1291 = vshrl.u32 1326507024, %v1276
    %v1292 = vor.u32 %v1290, %v1291
    %vm1293 = vcmp.lt.s32.totalorder %v1274, 1
    %vm1294 = vcmp.lt.s32.totalorder %v1274, 2
    %vm1295 = vcmp.lt.s32.totalorder %v1274, 3
    %vm1296 = vcmp.lt.s32.totalorder %v1274, 4
    %v1297 = vsel %vm1293, %v1277, %v1280
    %v1298 = vsel %vm1296, %v1286, 2102212464
    %v1299 = vsel %vm1295, %v1283, %v1298
    %v1300 = vsel %vm1294, %v1297, %v1299
    %v1301 = vsel %vm1293, %v1280, %v1283
    %v1302 = vsel %vm1296, %v1289, 920167782
    %v1303 = vsel %vm1295, %v1286, %v1302
    %v1304 = vsel %vm1294, %v1301, %v1303
    %v1305 = vsel %vm1293, %v1283, %v1286
    %v1306 = vsel %vm1296, %v1292, 1326507024
    %v1307 = vsel %vm1295, %v1289, %v1306
    %v1308 = vsel %vm1294, %v1305, %v1307
    %v1309 = vshll.u32 %v1269, 8
    %v1310 = vmul.u32.u64.compose %v1309, %v1308
    %v1311 = vextract.low.u32 %v1310
    %v1312 = vextract.high.u32 %v1310
    %v1313 = vmul.u32.u64.compose %v1309, %v1304
    %v1314 = vextract.low.u32 %v1313
    %v1315 = vextract.high.u32 %v1313
    %v1316 = vmul.u32 %v1309, %v1300
    %v1317 = vadd.s32 %v1312, %v1314
    %vm1318 = vc.u32 %v1312, %v1314
    %v1319 = vadd.s32 %v1315, 1
    %v1320 = vsel %vm1318, %v1319, %v1315
    %v1321 = vadd.s32 %v1316, %v1320
    %v1322 = vadd.s32 %v1321, 536870912
    %v1323 = vshrl.u32 %v1322, 30
    %v1324 = vshll.u32 %v1323, 30
    %v1325 = vsub.s32 %v1321, %v1324
    %vm1326 = vcmp.lt.s32.totalorder %v1325, 0
    %v1327 = vsub.s32 0, %v1325
    %v1328 = vsel %vm1326, %v1327, %v1325
    %v1329 = vclz %v1328
    %v1330 = vsub.s32 %v1329, 2
    %vm1331 = vcmp.gt.s32.totalorder 0, %v1330
    %v1332 = vsel %vm1331, 0, %v1330
    %v1333 = vsub.s32 32, %v1332
    %v1334 = vshll.u32 %v1325, %v1332
    %v1335 = vshrl.u32 %v1317, %v1333
    %v1336 = vor.u32 %v1334, %v1335
    %v1337 = vsub.s32 4294967266, %v1332
    %v1338 = vadd.s32 %v1337, 127
    %v1339 = vshll.u32 %v1338, 23
    %v1340 = vor.u32 4788187, %v1339
    %v1341 = vand.u32 2147483647, %v1340
    %v1343 = vcvt.s32.f32 %v1336
    %v1344 = vmul.f32 %v1343, %v1341
    %v1345 = vxor.u32 %v1344, 2147483648
    %v1346 = vsel %vm1263, %v1345, %v1344
    %v1347 = vsub.s32 4, %v1323
    %v1348 = vsel %vm1263, %v1347, %v1323
    %v1349 = vsel %vm1262, %v948, %v1346
    %v1350 = vsel %vm1262, 0, %v1348
    %v1351 = vcosq.f32.pop %v1349
    %v1352 = vsinq.f32.pop %v1349
    %vm1353 = vweird.f32 %v948
    %v1354 = vadd.s32 %v1350, 3
    %v1355 = vand.u32 %v1354, 3
    %vm1356 = vcmp.lt.s32.totalorder %v1355, 2
    %vm1357 = vcmp.eq.s32.totalorder %v1355, 0
    %v1358 = vxor.u32 %v1352, 2147483648
    %v1359 = vsel %vm1357, %v1351, %v1358
    %vm1360 = vcmp.eq.s32.totalorder %v1355, 2
    %v1361 = vxor.u32 %v1351, 2147483648
    %v1362 = vsel %vm1360, %v1361, %v1352
    %v1363 = vsel %vm1356, %v1359, %v1362
    %v1364 = vsel %vm1353, nan, %v1363
    %v1369 = vcombine.high %v1052, %v1052
    %v1370 = vcombine.high %v1156, %v1156
    %v1371 = vcombine.high %v1260, %v1260
    %v1372 = vcombine.high %v1364, %v1364
    %v1373 = vrot.slane %v1052, 7
    %v1374 = vrot.slane %v1369, 7
    %v1375 = vrot.slane %v1156, 7
    %v1376 = vrot.slane %v1370, 7
    %v1377 = vrot.slane %v1260, 7
    %v1378 = vrot.slane %v1371, 7
    %v1379 = vrot.slane %v1364, 7
    %v1380 = vrot.slane %v1372, 7
    %1389 = vst [vmem:[#allocation5 + $0x40] sm:$0xe] %v1373
    %1390 = vst [vmem:[#allocation5 + $0x48] sm:$0xe] %v1374
    %1391 = vst [vmem:[#allocation5 + $0x50] sm:$0xe] %v1375
    %1392 = vst [vmem:[#allocation5 + $0x58] sm:$0xe] %v1376
    %1393 = vst [vmem:[#allocation5 + $0x60] sm:$0xe] %v1377
    %1394 = vst [vmem:[#allocation5 + $0x68] sm:$0xe] %v1378
    %1395 = vst [vmem:[#allocation5 + $0x70] sm:$0xe] %v1379
    %1396 = vst [vmem:[#allocation5 + $0x78] sm:$0xe] %v1380
    %v1397 = vand.u32 2147483647, %v945
    %vm1398 = vcmp.le.f32.partialorder %v1397, 0.7853982
    %vm1399 = vcmp.lt.s32.totalorder %v945, 0
    %v1400 = vand.u32 %v945, 2139095040
    %v1401 = vshrl.u32 %v1400, 23
    %v1402 = vsub.s32 %v1401, 127
    %v1403 = vand.u32 2147483647, %v945
    %v1404 = vand.u32 %v1403, 8388607
    %v1405 = vor.u32 %v1404, 8388608
    %v1406 = vsub.s32 0, %v1405
    %v1407 = vadd.s32 %v1402, 1
    %vm1408 = vcmp.gt.s32.totalorder %v1407, 0
    %v1409 = vsel %vm1408, %v1407, 0
    %v1410 = vshrl.u32 %v1409, 5
    %v1411 = vand.u32 %v1409, 31
    %v1412 = vsub.s32 32, %v1411
    %v1413 = vshrl.u32 683565275, %v1412
    %v1414 = vshll.u32 683565275, %v1411
    %v1415 = vshrl.u32 2475754826, %v1412
    %v1416 = vor.u32 %v1414, %v1415
    %v1417 = vshll.u32 2475754826, %v1411
    %v1418 = vshrl.u32 2131351028, %v1412
    %v1419 = vor.u32 %v1417, %v1418
    %v1420 = vshll.u32 2131351028, %v1411
    %v1421 = vshrl.u32 2102212464, %v1412
    %v1422 = vor.u32 %v1420, %v1421
    %v1423 = vshll.u32 2102212464, %v1411
    %v1424 = vshrl.u32 920167782, %v1412
    %v1425 = vor.u32 %v1423, %v1424
    %v1426 = vshll.u32 920167782, %v1411
    %v1427 = vshrl.u32 1326507024, %v1412
    %v1428 = vor.u32 %v1426, %v1427
    %vm1429 = vcmp.lt.s32.totalorder %v1410, 1
    %vm1430 = vcmp.lt.s32.totalorder %v1410, 2
    %vm1431 = vcmp.lt.s32.totalorder %v1410, 3
    %vm1432 = vcmp.lt.s32.totalorder %v1410, 4
    %v1433 = vsel %vm1429, %v1413, %v1416
    %v1434 = vsel %vm1432, %v1422, 2102212464
    %v1435 = vsel %vm1431, %v1419, %v1434
    %v1436 = vsel %vm1430, %v1433, %v1435
    %v1437 = vsel %vm1429, %v1416, %v1419
    %v1438 = vsel %vm1432, %v1425, 920167782
    %v1439 = vsel %vm1431, %v1422, %v1438
    %v1440 = vsel %vm1430, %v1437, %v1439
    %v1441 = vsel %vm1429, %v1419, %v1422
    %v1442 = vsel %vm1432, %v1428, 1326507024
    %v1443 = vsel %vm1431, %v1425, %v1442
    %v1444 = vsel %vm1430, %v1441, %v1443
    %v1445 = vshll.u32 %v1405, 8
    %v1446 = vmul.u32.u64.compose %v1445, %v1444
    %v1447 = vextract.low.u32 %v1446
    %v1448 = vextract.high.u32 %v1446
    %v1449 = vmul.u32.u64.compose %v1445, %v1440
    %v1450 = vextract.low.u32 %v1449
    %v1451 = vextract.high.u32 %v1449
    %v1452 = vmul.u32 %v1445, %v1436
    %v1453 = vadd.s32 %v1448, %v1450
    %vm1454 = vc.u32 %v1448, %v1450
    %v1455 = vadd.s32 %v1451, 1
    %v1456 = vsel %vm1454, %v1455, %v1451
    %v1457 = vadd.s32 %v1452, %v1456
    %v1458 = vadd.s32 %v1457, 536870912
    %v1459 = vshrl.u32 %v1458, 30
    %v1460 = vshll.u32 %v1459, 30
    %v1461 = vsub.s32 %v1457, %v1460
    %vm1462 = vcmp.lt.s32.totalorder %v1461, 0
    %v1463 = vsub.s32 0, %v1461
    %v1464 = vsel %vm1462, %v1463, %v1461
    %v1465 = vclz %v1464
    %v1466 = vsub.s32 %v1465, 2
    %vm1467 = vcmp.gt.s32.totalorder 0, %v1466
    %v1468 = vsel %vm1467, 0, %v1466
    %v1469 = vsub.s32 32, %v1468
    %v1470 = vshll.u32 %v1461, %v1468
    %v1471 = vshrl.u32 %v1453, %v1469
    %v1472 = vor.u32 %v1470, %v1471
    %v1473 = vsub.s32 4294967266, %v1468
    %v1474 = vadd.s32 %v1473, 127
    %v1475 = vshll.u32 %v1474, 23
    %v1476 = vor.u32 4788187, %v1475
    %v1477 = vand.u32 2147483647, %v1476
    %v1479 = vcvt.s32.f32 %v1472
    %v1480 = vmul.f32 %v1479, %v1477
    %v1481 = vxor.u32 %v1480, 2147483648
    %v1482 = vsel %vm1399, %v1481, %v1480
    %v1483 = vsub.s32 4, %v1459
    %v1484 = vsel %vm1399, %v1483, %v1459
    %v1485 = vsel %vm1398, %v945, %v1482
    %v1486 = vsel %vm1398, 0, %v1484
    %v1487 = vcosq.f32.pop %v1485
    %v1488 = vsinq.f32.pop %v1485
    %vm1489 = vweird.f32 %v945
    %v1490 = vand.u32 %v1486, 3
    %vm1491 = vcmp.lt.s32.totalorder %v1490, 2
    %vm1492 = vcmp.eq.s32.totalorder %v1490, 0
    %v1493 = vxor.u32 %v1488, 2147483648
    %v1494 = vsel %vm1492, %v1487, %v1493
    %vm1495 = vcmp.eq.s32.totalorder %v1490, 2
    %v1496 = vxor.u32 %v1487, 2147483648
    %v1497 = vsel %vm1495, %v1496, %v1488
    %v1498 = vsel %vm1491, %v1494, %v1497
    %v1499 = vsel %vm1489, nan, %v1498
    %v1500 = vand.u32 2147483647, %v946
    %vm1501 = vcmp.le.f32.partialorder %v1500, 0.7853982
    %vm1502 = vcmp.lt.s32.totalorder %v946, 0
    %v1503 = vand.u32 %v946, 2139095040
    %v1504 = vshrl.u32 %v1503, 23
    %v1505 = vsub.s32 %v1504, 127
    %v1506 = vand.u32 2147483647, %v946
    %v1507 = vand.u32 %v1506, 8388607
    %v1508 = vor.u32 %v1507, 8388608
    %v1509 = vsub.s32 0, %v1508
    %v1510 = vadd.s32 %v1505, 1
    %vm1511 = vcmp.gt.s32.totalorder %v1510, 0
    %v1512 = vsel %vm1511, %v1510, 0
    %v1513 = vshrl.u32 %v1512, 5
    %v1514 = vand.u32 %v1512, 31
    %v1515 = vsub.s32 32, %v1514
    %v1516 = vshrl.u32 683565275, %v1515
    %v1517 = vshll.u32 683565275, %v1514
    %v1518 = vshrl.u32 2475754826, %v1515
    %v1519 = vor.u32 %v1517, %v1518
    %v1520 = vshll.u32 2475754826, %v1514
    %v1521 = vshrl.u32 2131351028, %v1515
    %v1522 = vor.u32 %v1520, %v1521
    %v1523 = vshll.u32 2131351028, %v1514
    %v1524 = vshrl.u32 2102212464, %v1515
    %v1525 = vor.u32 %v1523, %v1524
    %v1526 = vshll.u32 2102212464, %v1514
    %v1527 = vshrl.u32 920167782, %v1515
    %v1528 = vor.u32 %v1526, %v1527
    %v1529 = vshll.u32 920167782, %v1514
    %v1530 = vshrl.u32 1326507024, %v1515
    %v1531 = vor.u32 %v1529, %v1530
    %vm1532 = vcmp.lt.s32.totalorder %v1513, 1
    %vm1533 = vcmp.lt.s32.totalorder %v1513, 2
    %vm1534 = vcmp.lt.s32.totalorder %v1513, 3
    %vm1535 = vcmp.lt.s32.totalorder %v1513, 4
    %v1536 = vsel %vm1532, %v1516, %v1519
    %v1537 = vsel %vm1535, %v1525, 2102212464
    %v1538 = vsel %vm1534, %v1522, %v1537
    %v1539 = vsel %vm1533, %v1536, %v1538
    %v1540 = vsel %vm1532, %v1519, %v1522
    %v1541 = vsel %vm1535, %v1528, 920167782
    %v1542 = vsel %vm1534, %v1525, %v1541
    %v1543 = vsel %vm1533, %v1540, %v1542
    %v1544 = vsel %vm1532, %v1522, %v1525
    %v1545 = vsel %vm1535, %v1531, 1326507024
    %v1546 = vsel %vm1534, %v1528, %v1545
    %v1547 = vsel %vm1533, %v1544, %v1546
    %v1548 = vshll.u32 %v1508, 8
    %v1549 = vmul.u32.u64.compose %v1548, %v1547
    %v1550 = vextract.low.u32 %v1549
    %v1551 = vextract.high.u32 %v1549
    %v1552 = vmul.u32.u64.compose %v1548, %v1543
    %v1553 = vextract.low.u32 %v1552
    %v1554 = vextract.high.u32 %v1552
    %v1555 = vmul.u32 %v1548, %v1539
    %v1556 = vadd.s32 %v1551, %v1553
    %vm1557 = vc.u32 %v1551, %v1553
    %v1558 = vadd.s32 %v1554, 1
    %v1559 = vsel %vm1557, %v1558, %v1554
    %v1560 = vadd.s32 %v1555, %v1559
    %v1561 = vadd.s32 %v1560, 536870912
    %v1562 = vshrl.u32 %v1561, 30
    %v1563 = vshll.u32 %v1562, 30
    %v1564 = vsub.s32 %v1560, %v1563
    %vm1565 = vcmp.lt.s32.totalorder %v1564, 0
    %v1566 = vsub.s32 0, %v1564
    %v1567 = vsel %vm1565, %v1566, %v1564
    %v1568 = vclz %v1567
    %v1569 = vsub.s32 %v1568, 2
    %vm1570 = vcmp.gt.s32.totalorder 0, %v1569
    %v1571 = vsel %vm1570, 0, %v1569
    %v1572 = vsub.s32 32, %v1571
    %v1573 = vshll.u32 %v1564, %v1571
    %v1574 = vshrl.u32 %v1556, %v1572
    %v1575 = vor.u32 %v1573, %v1574
    %v1576 = vsub.s32 4294967266, %v1571
    %v1577 = vadd.s32 %v1576, 127
    %v1578 = vshll.u32 %v1577, 23
    %v1579 = vor.u32 4788187, %v1578
    %v1580 = vand.u32 2147483647, %v1579
    %v1582 = vcvt.s32.f32 %v1575
    %v1583 = vmul.f32 %v1582, %v1580
    %v1584 = vxor.u32 %v1583, 2147483648
    %v1585 = vsel %vm1502, %v1584, %v1583
    %v1586 = vsub.s32 4, %v1562
    %v1587 = vsel %vm1502, %v1586, %v1562
    %v1588 = vsel %vm1501, %v946, %v1585
    %v1589 = vsel %vm1501, 0, %v1587
    %v1590 = vcosq.f32.pop %v1588
    %v1591 = vsinq.f32.pop %v1588
    %vm1592 = vweird.f32 %v946
    %v1593 = vand.u32 %v1589, 3
    %vm1594 = vcmp.lt.s32.totalorder %v1593, 2
    %vm1595 = vcmp.eq.s32.totalorder %v1593, 0
    %v1596 = vxor.u32 %v1591, 2147483648
    %v1597 = vsel %vm1595, %v1590, %v1596
    %vm1598 = vcmp.eq.s32.totalorder %v1593, 2
    %v1599 = vxor.u32 %v1590, 2147483648
    %v1600 = vsel %vm1598, %v1599, %v1591
    %v1601 = vsel %vm1594, %v1597, %v1600
    %v1602 = vsel %vm1592, nan, %v1601
    %v1603 = vand.u32 2147483647, %v947
    %vm1604 = vcmp.le.f32.partialorder %v1603, 0.7853982
    %vm1605 = vcmp.lt.s32.totalorder %v947, 0
    %v1606 = vand.u32 %v947, 2139095040
    %v1607 = vshrl.u32 %v1606, 23
    %v1608 = vsub.s32 %v1607, 127
    %v1609 = vand.u32 2147483647, %v947
    %v1610 = vand.u32 %v1609, 8388607
    %v1611 = vor.u32 %v1610, 8388608
    %v1612 = vsub.s32 0, %v1611
    %v1613 = vadd.s32 %v1608, 1
    %vm1614 = vcmp.gt.s32.totalorder %v1613, 0
    %v1615 = vsel %vm1614, %v1613, 0
    %v1616 = vshrl.u32 %v1615, 5
    %v1617 = vand.u32 %v1615, 31
    %v1618 = vsub.s32 32, %v1617
    %v1619 = vshrl.u32 683565275, %v1618
    %v1620 = vshll.u32 683565275, %v1617
    %v1621 = vshrl.u32 2475754826, %v1618
    %v1622 = vor.u32 %v1620, %v1621
    %v1623 = vshll.u32 2475754826, %v1617
    %v1624 = vshrl.u32 2131351028, %v1618
    %v1625 = vor.u32 %v1623, %v1624
    %v1626 = vshll.u32 2131351028, %v1617
    %v1627 = vshrl.u32 2102212464, %v1618
    %v1628 = vor.u32 %v1626, %v1627
    %v1629 = vshll.u32 2102212464, %v1617
    %v1630 = vshrl.u32 920167782, %v1618
    %v1631 = vor.u32 %v1629, %v1630
    %v1632 = vshll.u32 920167782, %v1617
    %v1633 = vshrl.u32 1326507024, %v1618
    %v1634 = vor.u32 %v1632, %v1633
    %vm1635 = vcmp.lt.s32.totalorder %v1616, 1
    %vm1636 = vcmp.lt.s32.totalorder %v1616, 2
    %vm1637 = vcmp.lt.s32.totalorder %v1616, 3
    %vm1638 = vcmp.lt.s32.totalorder %v1616, 4
    %v1639 = vsel %vm1635, %v1619, %v1622
    %v1640 = vsel %vm1638, %v1628, 2102212464
    %v1641 = vsel %vm1637, %v1625, %v1640
    %v1642 = vsel %vm1636, %v1639, %v1641
    %v1643 = vsel %vm1635, %v1622, %v1625
    %v1644 = vsel %vm1638, %v1631, 920167782
    %v1645 = vsel %vm1637, %v1628, %v1644
    %v1646 = vsel %vm1636, %v1643, %v1645
    %v1647 = vsel %vm1635, %v1625, %v1628
    %v1648 = vsel %vm1638, %v1634, 1326507024
    %v1649 = vsel %vm1637, %v1631, %v1648
    %v1650 = vsel %vm1636, %v1647, %v1649
    %v1651 = vshll.u32 %v1611, 8
    %v1652 = vmul.u32.u64.compose %v1651, %v1650
    %v1653 = vextract.low.u32 %v1652
    %v1654 = vextract.high.u32 %v1652
    %v1655 = vmul.u32.u64.compose %v1651, %v1646
    %v1656 = vextract.low.u32 %v1655
    %v1657 = vextract.high.u32 %v1655
    %v1658 = vmul.u32 %v1651, %v1642
    %v1659 = vadd.s32 %v1654, %v1656
    %vm1660 = vc.u32 %v1654, %v1656
    %v1661 = vadd.s32 %v1657, 1
    %v1662 = vsel %vm1660, %v1661, %v1657
    %v1663 = vadd.s32 %v1658, %v1662
    %v1664 = vadd.s32 %v1663, 536870912
    %v1665 = vshrl.u32 %v1664, 30
    %v1666 = vshll.u32 %v1665, 30
    %v1667 = vsub.s32 %v1663, %v1666
    %vm1668 = vcmp.lt.s32.totalorder %v1667, 0
    %v1669 = vsub.s32 0, %v1667
    %v1670 = vsel %vm1668, %v1669, %v1667
    %v1671 = vclz %v1670
    %v1672 = vsub.s32 %v1671, 2
    %vm1673 = vcmp.gt.s32.totalorder 0, %v1672
    %v1674 = vsel %vm1673, 0, %v1672
    %v1675 = vsub.s32 32, %v1674
    %v1676 = vshll.u32 %v1667, %v1674
    %v1677 = vshrl.u32 %v1659, %v1675
    %v1678 = vor.u32 %v1676, %v1677
    %v1679 = vsub.s32 4294967266, %v1674
    %v1680 = vadd.s32 %v1679, 127
    %v1681 = vshll.u32 %v1680, 23
    %v1682 = vor.u32 4788187, %v1681
    %v1683 = vand.u32 2147483647, %v1682
    %v1685 = vcvt.s32.f32 %v1678
    %v1686 = vmul.f32 %v1685, %v1683
    %v1687 = vxor.u32 %v1686, 2147483648
    %v1688 = vsel %vm1605, %v1687, %v1686
    %v1689 = vsub.s32 4, %v1665
    %v1690 = vsel %vm1605, %v1689, %v1665
    %v1691 = vsel %vm1604, %v947, %v1688
    %v1692 = vsel %vm1604, 0, %v1690
    %v1693 = vcosq.f32.pop %v1691
    %v1694 = vsinq.f32.pop %v1691
    %vm1695 = vweird.f32 %v947
    %v1696 = vand.u32 %v1692, 3
    %vm1697 = vcmp.lt.s32.totalorder %v1696, 2
    %vm1698 = vcmp.eq.s32.totalorder %v1696, 0
    %v1699 = vxor.u32 %v1694, 2147483648
    %v1700 = vsel %vm1698, %v1693, %v1699
    %vm1701 = vcmp.eq.s32.totalorder %v1696, 2
    %v1702 = vxor.u32 %v1693, 2147483648
    %v1703 = vsel %vm1701, %v1702, %v1694
    %v1704 = vsel %vm1697, %v1700, %v1703
    %v1705 = vsel %vm1695, nan, %v1704
    %v1706 = vand.u32 2147483647, %v948
    %vm1707 = vcmp.le.f32.partialorder %v1706, 0.7853982
    %vm1708 = vcmp.lt.s32.totalorder %v948, 0
    %v1709 = vand.u32 %v948, 2139095040
    %v1710 = vshrl.u32 %v1709, 23
    %v1711 = vsub.s32 %v1710, 127
    %v1712 = vand.u32 2147483647, %v948
    %v1713 = vand.u32 %v1712, 8388607
    %v1714 = vor.u32 %v1713, 8388608
    %v1715 = vsub.s32 0, %v1714
    %v1716 = vadd.s32 %v1711, 1
    %vm1717 = vcmp.gt.s32.totalorder %v1716, 0
    %v1718 = vsel %vm1717, %v1716, 0
    %v1719 = vshrl.u32 %v1718, 5
    %v1720 = vand.u32 %v1718, 31
    %v1721 = vsub.s32 32, %v1720
    %v1722 = vshrl.u32 683565275, %v1721
    %v1723 = vshll.u32 683565275, %v1720
    %v1724 = vshrl.u32 2475754826, %v1721
    %v1725 = vor.u32 %v1723, %v1724
    %v1726 = vshll.u32 2475754826, %v1720
    %v1727 = vshrl.u32 2131351028, %v1721
    %v1728 = vor.u32 %v1726, %v1727
    %v1729 = vshll.u32 2131351028, %v1720
    %v1730 = vshrl.u32 2102212464, %v1721
    %v1731 = vor.u32 %v1729, %v1730
    %v1732 = vshll.u32 2102212464, %v1720
    %v1733 = vshrl.u32 920167782, %v1721
    %v1734 = vor.u32 %v1732, %v1733
    %v1735 = vshll.u32 920167782, %v1720
    %v1736 = vshrl.u32 1326507024, %v1721
    %v1737 = vor.u32 %v1735, %v1736
    %vm1738 = vcmp.lt.s32.totalorder %v1719, 1
    %vm1739 = vcmp.lt.s32.totalorder %v1719, 2
    %vm1740 = vcmp.lt.s32.totalorder %v1719, 3
    %vm1741 = vcmp.lt.s32.totalorder %v1719, 4
    %v1742 = vsel %vm1738, %v1722, %v1725
    %v1743 = vsel %vm1741, %v1731, 2102212464
    %v1744 = vsel %vm1740, %v1728, %v1743
    %v1745 = vsel %vm1739, %v1742, %v1744
    %v1746 = vsel %vm1738, %v1725, %v1728
    %v1747 = vsel %vm1741, %v1734, 920167782
    %v1748 = vsel %vm1740, %v1731, %v1747
    %v1749 = vsel %vm1739, %v1746, %v1748
    %v1750 = vsel %vm1738, %v1728, %v1731
    %v1751 = vsel %vm1741, %v1737, 1326507024
    %v1752 = vsel %vm1740, %v1734, %v1751
    %v1753 = vsel %vm1739, %v1750, %v1752
    %v1754 = vshll.u32 %v1714, 8
    %v1755 = vmul.u32.u64.compose %v1754, %v1753
    %v1756 = vextract.low.u32 %v1755
    %v1757 = vextract.high.u32 %v1755
    %v1758 = vmul.u32.u64.compose %v1754, %v1749
    %v1759 = vextract.low.u32 %v1758
    %v1760 = vextract.high.u32 %v1758
    %v1761 = vmul.u32 %v1754, %v1745
    %v1762 = vadd.s32 %v1757, %v1759
    %vm1763 = vc.u32 %v1757, %v1759
    %v1764 = vadd.s32 %v1760, 1
    %v1765 = vsel %vm1763, %v1764, %v1760
    %v1766 = vadd.s32 %v1761, %v1765
    %v1767 = vadd.s32 %v1766, 536870912
    %v1768 = vshrl.u32 %v1767, 30
    %v1769 = vshll.u32 %v1768, 30
    %v1770 = vsub.s32 %v1766, %v1769
    %vm1771 = vcmp.lt.s32.totalorder %v1770, 0
    %v1772 = vsub.s32 0, %v1770
    %v1773 = vsel %vm1771, %v1772, %v1770
    %v1774 = vclz %v1773
    %v1775 = vsub.s32 %v1774, 2
    %vm1776 = vcmp.gt.s32.totalorder 0, %v1775
    %v1777 = vsel %vm1776, 0, %v1775
    %v1778 = vsub.s32 32, %v1777
    %v1779 = vshll.u32 %v1770, %v1777
    %v1780 = vshrl.u32 %v1762, %v1778
    %v1781 = vor.u32 %v1779, %v1780
    %v1782 = vsub.s32 4294967266, %v1777
    %v1783 = vadd.s32 %v1782, 127
    %v1784 = vshll.u32 %v1783, 23
    %v1785 = vor.u32 4788187, %v1784
    %v1786 = vand.u32 2147483647, %v1785
    %v1788 = vcvt.s32.f32 %v1781
    %v1789 = vmul.f32 %v1788, %v1786
    %v1790 = vxor.u32 %v1789, 2147483648
    %v1791 = vsel %vm1708, %v1790, %v1789
    %v1792 = vsub.s32 4, %v1768
    %v1793 = vsel %vm1708, %v1792, %v1768
    %v1794 = vsel %vm1707, %v948, %v1791
    %v1795 = vsel %vm1707, 0, %v1793
    %v1796 = vcosq.f32.pop %v1794
    %v1797 = vsinq.f32.pop %v1794
    %vm1798 = vweird.f32 %v948
    %v1799 = vand.u32 %v1795, 3
    %vm1800 = vcmp.lt.s32.totalorder %v1799, 2
    %vm1801 = vcmp.eq.s32.totalorder %v1799, 0
    %v1802 = vxor.u32 %v1797, 2147483648
    %v1803 = vsel %vm1801, %v1796, %v1802
    %vm1804 = vcmp.eq.s32.totalorder %v1799, 2
    %v1805 = vxor.u32 %v1796, 2147483648
    %v1806 = vsel %vm1804, %v1805, %v1797
    %v1807 = vsel %vm1800, %v1803, %v1806
    %v1808 = vsel %vm1798, nan, %v1807
    %v1813 = vcombine.low %v1499, %v1499
    %v1814 = vcombine.low %v1602, %v1602
    %v1815 = vcombine.low %v1705, %v1705
    %v1816 = vcombine.low %v1808, %v1808
    %1821 = vst [vmem:[#allocation5 + $0x40] sm:$0x70] %v1813
    %1822 = vst [vmem:[#allocation5 + $0x48] sm:$0x70] %v1499
    %1823 = vst [vmem:[#allocation5 + $0x50] sm:$0x70] %v1814
    %1824 = vst [vmem:[#allocation5 + $0x58] sm:$0x70] %v1602
    %1825 = vst [vmem:[#allocation5 + $0x60] sm:$0x70] %v1815
    %1826 = vst [vmem:[#allocation5 + $0x68] sm:$0x70] %v1705
    %1827 = vst [vmem:[#allocation5 + $0x70] sm:$0x70] %v1816
    %1828 = vst [vmem:[#allocation5 + $0x78] sm:$0x70] %v1808
    %v1829 = vmul.f32 %v21, 4.0
    %v1830 = vmul.f32 %v22, 4.0
    %v1831 = vmul.f32 %v23, 4.0
    %v1832 = vmul.f32 %v24, 4.0
    %v1833 = vand.u32 2147483647, %v1829
    %vm1834 = vcmp.le.f32.partialorder %v1833, 0.7853982
    %vm1835 = vcmp.lt.s32.totalorder %v1829, 0
    %v1836 = vand.u32 %v1829, 2139095040
    %v1837 = vshrl.u32 %v1836, 23
    %v1838 = vsub.s32 %v1837, 127
    %v1839 = vand.u32 2147483647, %v1829
    %v1840 = vand.u32 %v1839, 8388607
    %v1841 = vor.u32 %v1840, 8388608
    %v1842 = vsub.s32 0, %v1841
    %v1843 = vadd.s32 %v1838, 1
    %vm1844 = vcmp.gt.s32.totalorder %v1843, 0
    %v1845 = vsel %vm1844, %v1843, 0
    %v1846 = vshrl.u32 %v1845, 5
    %v1847 = vand.u32 %v1845, 31
    %v1848 = vsub.s32 32, %v1847
    %v1849 = vshrl.u32 683565275, %v1848
    %v1850 = vshll.u32 683565275, %v1847
    %v1851 = vshrl.u32 2475754826, %v1848
    %v1852 = vor.u32 %v1850, %v1851
    %v1853 = vshll.u32 2475754826, %v1847
    %v1854 = vshrl.u32 2131351028, %v1848
    %v1855 = vor.u32 %v1853, %v1854
    %v1856 = vshll.u32 2131351028, %v1847
    %v1857 = vshrl.u32 2102212464, %v1848
    %v1858 = vor.u32 %v1856, %v1857
    %v1859 = vshll.u32 2102212464, %v1847
    %v1860 = vshrl.u32 920167782, %v1848
    %v1861 = vor.u32 %v1859, %v1860
    %v1862 = vshll.u32 920167782, %v1847
    %v1863 = vshrl.u32 1326507024, %v1848
    %v1864 = vor.u32 %v1862, %v1863
    %vm1865 = vcmp.lt.s32.totalorder %v1846, 1
    %vm1866 = vcmp.lt.s32.totalorder %v1846, 2
    %vm1867 = vcmp.lt.s32.totalorder %v1846, 3
    %vm1868 = vcmp.lt.s32.totalorder %v1846, 4
    %v1869 = vsel %vm1865, %v1849, %v1852
    %v1870 = vsel %vm1868, %v1858, 2102212464
    %v1871 = vsel %vm1867, %v1855, %v1870
    %v1872 = vsel %vm1866, %v1869, %v1871
    %v1873 = vsel %vm1865, %v1852, %v1855
    %v1874 = vsel %vm1868, %v1861, 920167782
    %v1875 = vsel %vm1867, %v1858, %v1874
    %v1876 = vsel %vm1866, %v1873, %v1875
    %v1877 = vsel %vm1865, %v1855, %v1858
    %v1878 = vsel %vm1868, %v1864, 1326507024
    %v1879 = vsel %vm1867, %v1861, %v1878
    %v1880 = vsel %vm1866, %v1877, %v1879
    %v1881 = vshll.u32 %v1841, 8
    %v1882 = vmul.u32.u64.compose %v1881, %v1880
    %v1883 = vextract.low.u32 %v1882
    %v1884 = vextract.high.u32 %v1882
    %v1885 = vmul.u32.u64.compose %v1881, %v1876
    %v1886 = vextract.low.u32 %v1885
    %v1887 = vextract.high.u32 %v1885
    %v1888 = vmul.u32 %v1881, %v1872
    %v1889 = vadd.s32 %v1884, %v1886
    %vm1890 = vc.u32 %v1884, %v1886
    %v1891 = vadd.s32 %v1887, 1
    %v1892 = vsel %vm1890, %v1891, %v1887
    %v1893 = vadd.s32 %v1888, %v1892
    %v1894 = vadd.s32 %v1893, 536870912
    %v1895 = vshrl.u32 %v1894, 30
    %v1896 = vshll.u32 %v1895, 30
    %v1897 = vsub.s32 %v1893, %v1896
    %vm1898 = vcmp.lt.s32.totalorder %v1897, 0
    %v1899 = vsub.s32 0, %v1897
    %v1900 = vsel %vm1898, %v1899, %v1897
    %v1901 = vclz %v1900
    %v1902 = vsub.s32 %v1901, 2
    %vm1903 = vcmp.gt.s32.totalorder 0, %v1902
    %v1904 = vsel %vm1903, 0, %v1902
    %v1905 = vsub.s32 32, %v1904
    %v1906 = vshll.u32 %v1897, %v1904
    %v1907 = vshrl.u32 %v1889, %v1905
    %v1908 = vor.u32 %v1906, %v1907
    %v1909 = vsub.s32 4294967266, %v1904
    %v1910 = vadd.s32 %v1909, 127
    %v1911 = vshll.u32 %v1910, 23
    %v1912 = vor.u32 4788187, %v1911
    %v1913 = vand.u32 2147483647, %v1912
    %v1915 = vcvt.s32.f32 %v1908
    %v1916 = vmul.f32 %v1915, %v1913
    %v1917 = vxor.u32 %v1916, 2147483648
    %v1918 = vsel %vm1835, %v1917, %v1916
    %v1919 = vsub.s32 4, %v1895
    %v1920 = vsel %vm1835, %v1919, %v1895
    %v1921 = vsel %vm1834, %v1829, %v1918
    %v1922 = vsel %vm1834, 0, %v1920
    %v1923 = vcosq.f32.pop %v1921
    %v1924 = vsinq.f32.pop %v1921
    %vm1925 = vweird.f32 %v1829
    %v1926 = vadd.s32 %v1922, 3
    %v1927 = vand.u32 %v1926, 3
    %vm1928 = vcmp.lt.s32.totalorder %v1927, 2
    %vm1929 = vcmp.eq.s32.totalorder %v1927, 0
    %v1930 = vxor.u32 %v1924, 2147483648
    %v1931 = vsel %vm1929, %v1923, %v1930
    %vm1932 = vcmp.eq.s32.totalorder %v1927, 2
    %v1933 = vxor.u32 %v1923, 2147483648
    %v1934 = vsel %vm1932, %v1933, %v1924
    %v1935 = vsel %vm1928, %v1931, %v1934
    %v1936 = vsel %vm1925, nan, %v1935
    %v1937 = vand.u32 2147483647, %v1830
    %vm1938 = vcmp.le.f32.partialorder %v1937, 0.7853982
    %vm1939 = vcmp.lt.s32.totalorder %v1830, 0
    %v1940 = vand.u32 %v1830, 2139095040
    %v1941 = vshrl.u32 %v1940, 23
    %v1942 = vsub.s32 %v1941, 127
    %v1943 = vand.u32 2147483647, %v1830
    %v1944 = vand.u32 %v1943, 8388607
    %v1945 = vor.u32 %v1944, 8388608
    %v1946 = vsub.s32 0, %v1945
    %v1947 = vadd.s32 %v1942, 1
    %vm1948 = vcmp.gt.s32.totalorder %v1947, 0
    %v1949 = vsel %vm1948, %v1947, 0
    %v1950 = vshrl.u32 %v1949, 5
    %v1951 = vand.u32 %v1949, 31
    %v1952 = vsub.s32 32, %v1951
    %v1953 = vshrl.u32 683565275, %v1952
    %v1954 = vshll.u32 683565275, %v1951
    %v1955 = vshrl.u32 2475754826, %v1952
    %v1956 = vor.u32 %v1954, %v1955
    %v1957 = vshll.u32 2475754826, %v1951
    %v1958 = vshrl.u32 2131351028, %v1952
    %v1959 = vor.u32 %v1957, %v1958
    %v1960 = vshll.u32 2131351028, %v1951
    %v1961 = vshrl.u32 2102212464, %v1952
    %v1962 = vor.u32 %v1960, %v1961
    %v1963 = vshll.u32 2102212464, %v1951
    %v1964 = vshrl.u32 920167782, %v1952
    %v1965 = vor.u32 %v1963, %v1964
    %v1966 = vshll.u32 920167782, %v1951
    %v1967 = vshrl.u32 1326507024, %v1952
    %v1968 = vor.u32 %v1966, %v1967
    %vm1969 = vcmp.lt.s32.totalorder %v1950, 1
    %vm1970 = vcmp.lt.s32.totalorder %v1950, 2
    %vm1971 = vcmp.lt.s32.totalorder %v1950, 3
    %vm1972 = vcmp.lt.s32.totalorder %v1950, 4
    %v1973 = vsel %vm1969, %v1953, %v1956
    %v1974 = vsel %vm1972, %v1962, 2102212464
    %v1975 = vsel %vm1971, %v1959, %v1974
    %v1976 = vsel %vm1970, %v1973, %v1975
    %v1977 = vsel %vm1969, %v1956, %v1959
    %v1978 = vsel %vm1972, %v1965, 920167782
    %v1979 = vsel %vm1971, %v1962, %v1978
    %v1980 = vsel %vm1970, %v1977, %v1979
    %v1981 = vsel %vm1969, %v1959, %v1962
    %v1982 = vsel %vm1972, %v1968, 1326507024
    %v1983 = vsel %vm1971, %v1965, %v1982
    %v1984 = vsel %vm1970, %v1981, %v1983
    %v1985 = vshll.u32 %v1945, 8
    %v1986 = vmul.u32.u64.compose %v1985, %v1984
    %v1987 = vextract.low.u32 %v1986
    %v1988 = vextract.high.u32 %v1986
    %v1989 = vmul.u32.u64.compose %v1985, %v1980
    %v1990 = vextract.low.u32 %v1989
    %v1991 = vextract.high.u32 %v1989
    %v1992 = vmul.u32 %v1985, %v1976
    %v1993 = vadd.s32 %v1988, %v1990
    %vm1994 = vc.u32 %v1988, %v1990
    %v1995 = vadd.s32 %v1991, 1
    %v1996 = vsel %vm1994, %v1995, %v1991
    %v1997 = vadd.s32 %v1992, %v1996
    %v1998 = vadd.s32 %v1997, 536870912
    %v1999 = vshrl.u32 %v1998, 30
    %v2000 = vshll.u32 %v1999, 30
    %v2001 = vsub.s32 %v1997, %v2000
    %vm2002 = vcmp.lt.s32.totalorder %v2001, 0
    %v2003 = vsub.s32 0, %v2001
    %v2004 = vsel %vm2002, %v2003, %v2001
    %v2005 = vclz %v2004
    %v2006 = vsub.s32 %v2005, 2
    %vm2007 = vcmp.gt.s32.totalorder 0, %v2006
    %v2008 = vsel %vm2007, 0, %v2006
    %v2009 = vsub.s32 32, %v2008
    %v2010 = vshll.u32 %v2001, %v2008
    %v2011 = vshrl.u32 %v1993, %v2009
    %v2012 = vor.u32 %v2010, %v2011
    %v2013 = vsub.s32 4294967266, %v2008
    %v2014 = vadd.s32 %v2013, 127
    %v2015 = vshll.u32 %v2014, 23
    %v2016 = vor.u32 4788187, %v2015
    %v2017 = vand.u32 2147483647, %v2016
    %v2019 = vcvt.s32.f32 %v2012
    %v2020 = vmul.f32 %v2019, %v2017
    %v2021 = vxor.u32 %v2020, 2147483648
    %v2022 = vsel %vm1939, %v2021, %v2020
    %v2023 = vsub.s32 4, %v1999
    %v2024 = vsel %vm1939, %v2023, %v1999
    %v2025 = vsel %vm1938, %v1830, %v2022
    %v2026 = vsel %vm1938, 0, %v2024
    %v2027 = vcosq.f32.pop %v2025
    %v2028 = vsinq.f32.pop %v2025
    %vm2029 = vweird.f32 %v1830
    %v2030 = vadd.s32 %v2026, 3
    %v2031 = vand.u32 %v2030, 3
    %vm2032 = vcmp.lt.s32.totalorder %v2031, 2
    %vm2033 = vcmp.eq.s32.totalorder %v2031, 0
    %v2034 = vxor.u32 %v2028, 2147483648
    %v2035 = vsel %vm2033, %v2027, %v2034
    %vm2036 = vcmp.eq.s32.totalorder %v2031, 2
    %v2037 = vxor.u32 %v2027, 2147483648
    %v2038 = vsel %vm2036, %v2037, %v2028
    %v2039 = vsel %vm2032, %v2035, %v2038
    %v2040 = vsel %vm2029, nan, %v2039
    %v2041 = vand.u32 2147483647, %v1831
    %vm2042 = vcmp.le.f32.partialorder %v2041, 0.7853982
    %vm2043 = vcmp.lt.s32.totalorder %v1831, 0
    %v2044 = vand.u32 %v1831, 2139095040
    %v2045 = vshrl.u32 %v2044, 23
    %v2046 = vsub.s32 %v2045, 127
    %v2047 = vand.u32 2147483647, %v1831
    %v2048 = vand.u32 %v2047, 8388607
    %v2049 = vor.u32 %v2048, 8388608
    %v2050 = vsub.s32 0, %v2049
    %v2051 = vadd.s32 %v2046, 1
    %vm2052 = vcmp.gt.s32.totalorder %v2051, 0
    %v2053 = vsel %vm2052, %v2051, 0
    %v2054 = vshrl.u32 %v2053, 5
    %v2055 = vand.u32 %v2053, 31
    %v2056 = vsub.s32 32, %v2055
    %v2057 = vshrl.u32 683565275, %v2056
    %v2058 = vshll.u32 683565275, %v2055
    %v2059 = vshrl.u32 2475754826, %v2056
    %v2060 = vor.u32 %v2058, %v2059
    %v2061 = vshll.u32 2475754826, %v2055
    %v2062 = vshrl.u32 2131351028, %v2056
    %v2063 = vor.u32 %v2061, %v2062
    %v2064 = vshll.u32 2131351028, %v2055
    %v2065 = vshrl.u32 2102212464, %v2056
    %v2066 = vor.u32 %v2064, %v2065
    %v2067 = vshll.u32 2102212464, %v2055
    %v2068 = vshrl.u32 920167782, %v2056
    %v2069 = vor.u32 %v2067, %v2068
    %v2070 = vshll.u32 920167782, %v2055
    %v2071 = vshrl.u32 1326507024, %v2056
    %v2072 = vor.u32 %v2070, %v2071
    %vm2073 = vcmp.lt.s32.totalorder %v2054, 1
    %vm2074 = vcmp.lt.s32.totalorder %v2054, 2
    %vm2075 = vcmp.lt.s32.totalorder %v2054, 3
    %vm2076 = vcmp.lt.s32.totalorder %v2054, 4
    %v2077 = vsel %vm2073, %v2057, %v2060
    %v2078 = vsel %vm2076, %v2066, 2102212464
    %v2079 = vsel %vm2075, %v2063, %v2078
    %v2080 = vsel %vm2074, %v2077, %v2079
    %v2081 = vsel %vm2073, %v2060, %v2063
    %v2082 = vsel %vm2076, %v2069, 920167782
    %v2083 = vsel %vm2075, %v2066, %v2082
    %v2084 = vsel %vm2074, %v2081, %v2083
    %v2085 = vsel %vm2073, %v2063, %v2066
    %v2086 = vsel %vm2076, %v2072, 1326507024
    %v2087 = vsel %vm2075, %v2069, %v2086
    %v2088 = vsel %vm2074, %v2085, %v2087
    %v2089 = vshll.u32 %v2049, 8
    %v2090 = vmul.u32.u64.compose %v2089, %v2088
    %v2091 = vextract.low.u32 %v2090
    %v2092 = vextract.high.u32 %v2090
    %v2093 = vmul.u32.u64.compose %v2089, %v2084
    %v2094 = vextract.low.u32 %v2093
    %v2095 = vextract.high.u32 %v2093
    %v2096 = vmul.u32 %v2089, %v2080
    %v2097 = vadd.s32 %v2092, %v2094
    %vm2098 = vc.u32 %v2092, %v2094
    %v2099 = vadd.s32 %v2095, 1
    %v2100 = vsel %vm2098, %v2099, %v2095
    %v2101 = vadd.s32 %v2096, %v2100
    %v2102 = vadd.s32 %v2101, 536870912
    %v2103 = vshrl.u32 %v2102, 30
    %v2104 = vshll.u32 %v2103, 30
    %v2105 = vsub.s32 %v2101, %v2104
    %vm2106 = vcmp.lt.s32.totalorder %v2105, 0
    %v2107 = vsub.s32 0, %v2105
    %v2108 = vsel %vm2106, %v2107, %v2105
    %v2109 = vclz %v2108
    %v2110 = vsub.s32 %v2109, 2
    %vm2111 = vcmp.gt.s32.totalorder 0, %v2110
    %v2112 = vsel %vm2111, 0, %v2110
    %v2113 = vsub.s32 32, %v2112
    %v2114 = vshll.u32 %v2105, %v2112
    %v2115 = vshrl.u32 %v2097, %v2113
    %v2116 = vor.u32 %v2114, %v2115
    %v2117 = vsub.s32 4294967266, %v2112
    %v2118 = vadd.s32 %v2117, 127
    %v2119 = vshll.u32 %v2118, 23
    %v2120 = vor.u32 4788187, %v2119
    %v2121 = vand.u32 2147483647, %v2120
    %v2123 = vcvt.s32.f32 %v2116
    %v2124 = vmul.f32 %v2123, %v2121
    %v2125 = vxor.u32 %v2124, 2147483648
    %v2126 = vsel %vm2043, %v2125, %v2124
    %v2127 = vsub.s32 4, %v2103
    %v2128 = vsel %vm2043, %v2127, %v2103
    %v2129 = vsel %vm2042, %v1831, %v2126
    %v2130 = vsel %vm2042, 0, %v2128
    %v2131 = vcosq.f32.pop %v2129
    %v2132 = vsinq.f32.pop %v2129
    %vm2133 = vweird.f32 %v1831
    %v2134 = vadd.s32 %v2130, 3
    %v2135 = vand.u32 %v2134, 3
    %vm2136 = vcmp.lt.s32.totalorder %v2135, 2
    %vm2137 = vcmp.eq.s32.totalorder %v2135, 0
    %v2138 = vxor.u32 %v2132, 2147483648
    %v2139 = vsel %vm2137, %v2131, %v2138
    %vm2140 = vcmp.eq.s32.totalorder %v2135, 2
    %v2141 = vxor.u32 %v2131, 2147483648
    %v2142 = vsel %vm2140, %v2141, %v2132
    %v2143 = vsel %vm2136, %v2139, %v2142
    %v2144 = vsel %vm2133, nan, %v2143
    %v2145 = vand.u32 2147483647, %v1832
    %vm2146 = vcmp.le.f32.partialorder %v2145, 0.7853982
    %vm2147 = vcmp.lt.s32.totalorder %v1832, 0
    %v2148 = vand.u32 %v1832, 2139095040
    %v2149 = vshrl.u32 %v2148, 23
    %v2150 = vsub.s32 %v2149, 127
    %v2151 = vand.u32 2147483647, %v1832
    %v2152 = vand.u32 %v2151, 8388607
    %v2153 = vor.u32 %v2152, 8388608
    %v2154 = vsub.s32 0, %v2153
    %v2155 = vadd.s32 %v2150, 1
    %vm2156 = vcmp.gt.s32.totalorder %v2155, 0
    %v2157 = vsel %vm2156, %v2155, 0
    %v2158 = vshrl.u32 %v2157, 5
    %v2159 = vand.u32 %v2157, 31
    %v2160 = vsub.s32 32, %v2159
    %v2161 = vshrl.u32 683565275, %v2160
    %v2162 = vshll.u32 683565275, %v2159
    %v2163 = vshrl.u32 2475754826, %v2160
    %v2164 = vor.u32 %v2162, %v2163
    %v2165 = vshll.u32 2475754826, %v2159
    %v2166 = vshrl.u32 2131351028, %v2160
    %v2167 = vor.u32 %v2165, %v2166
    %v2168 = vshll.u32 2131351028, %v2159
    %v2169 = vshrl.u32 2102212464, %v2160
    %v2170 = vor.u32 %v2168, %v2169
    %v2171 = vshll.u32 2102212464, %v2159
    %v2172 = vshrl.u32 920167782, %v2160
    %v2173 = vor.u32 %v2171, %v2172
    %v2174 = vshll.u32 920167782, %v2159
    %v2175 = vshrl.u32 1326507024, %v2160
    %v2176 = vor.u32 %v2174, %v2175
    %vm2177 = vcmp.lt.s32.totalorder %v2158, 1
    %vm2178 = vcmp.lt.s32.totalorder %v2158, 2
    %vm2179 = vcmp.lt.s32.totalorder %v2158, 3
    %vm2180 = vcmp.lt.s32.totalorder %v2158, 4
    %v2181 = vsel %vm2177, %v2161, %v2164
    %v2182 = vsel %vm2180, %v2170, 2102212464
    %v2183 = vsel %vm2179, %v2167, %v2182
    %v2184 = vsel %vm2178, %v2181, %v2183
    %v2185 = vsel %vm2177, %v2164, %v2167
    %v2186 = vsel %vm2180, %v2173, 920167782
    %v2187 = vsel %vm2179, %v2170, %v2186
    %v2188 = vsel %vm2178, %v2185, %v2187
    %v2189 = vsel %vm2177, %v2167, %v2170
    %v2190 = vsel %vm2180, %v2176, 1326507024
    %v2191 = vsel %vm2179, %v2173, %v2190
    %v2192 = vsel %vm2178, %v2189, %v2191
    %v2193 = vshll.u32 %v2153, 8
    %v2194 = vmul.u32.u64.compose %v2193, %v2192
    %v2195 = vextract.low.u32 %v2194
    %v2196 = vextract.high.u32 %v2194
    %v2197 = vmul.u32.u64.compose %v2193, %v2188
    %v2198 = vextract.low.u32 %v2197
    %v2199 = vextract.high.u32 %v2197
    %v2200 = vmul.u32 %v2193, %v2184
    %v2201 = vadd.s32 %v2196, %v2198
    %vm2202 = vc.u32 %v2196, %v2198
    %v2203 = vadd.s32 %v2199, 1
    %v2204 = vsel %vm2202, %v2203, %v2199
    %v2205 = vadd.s32 %v2200, %v2204
    %v2206 = vadd.s32 %v2205, 536870912
    %v2207 = vshrl.u32 %v2206, 30
    %v2208 = vshll.u32 %v2207, 30
    %v2209 = vsub.s32 %v2205, %v2208
    %vm2210 = vcmp.lt.s32.totalorder %v2209, 0
    %v2211 = vsub.s32 0, %v2209
    %v2212 = vsel %vm2210, %v2211, %v2209
    %v2213 = vclz %v2212
    %v2214 = vsub.s32 %v2213, 2
    %vm2215 = vcmp.gt.s32.totalorder 0, %v2214
    %v2216 = vsel %vm2215, 0, %v2214
    %v2217 = vsub.s32 32, %v2216
    %v2218 = vshll.u32 %v2209, %v2216
    %v2219 = vshrl.u32 %v2201, %v2217
    %v2220 = vor.u32 %v2218, %v2219
    %v2221 = vsub.s32 4294967266, %v2216
    %v2222 = vadd.s32 %v2221, 127
    %v2223 = vshll.u32 %v2222, 23
    %v2224 = vor.u32 4788187, %v2223
    %v2225 = vand.u32 2147483647, %v2224
    %v2227 = vcvt.s32.f32 %v2220
    %v2228 = vmul.f32 %v2227, %v2225
    %v2229 = vxor.u32 %v2228, 2147483648
    %v2230 = vsel %vm2147, %v2229, %v2228
    %v2231 = vsub.s32 4, %v2207
    %v2232 = vsel %vm2147, %v2231, %v2207
    %v2233 = vsel %vm2146, %v1832, %v2230
    %v2234 = vsel %vm2146, 0, %v2232
    %v2235 = vcosq.f32.pop %v2233
    %v2236 = vsinq.f32.pop %v2233
    %vm2237 = vweird.f32 %v1832
    %v2238 = vadd.s32 %v2234, 3
    %v2239 = vand.u32 %v2238, 3
    %vm2240 = vcmp.lt.s32.totalorder %v2239, 2
    %vm2241 = vcmp.eq.s32.totalorder %v2239, 0
    %v2242 = vxor.u32 %v2236, 2147483648
    %v2243 = vsel %vm2241, %v2235, %v2242
    %vm2244 = vcmp.eq.s32.totalorder %v2239, 2
    %v2245 = vxor.u32 %v2235, 2147483648
    %v2246 = vsel %vm2244, %v2245, %v2236
    %v2247 = vsel %vm2240, %v2243, %v2246
    %v2248 = vsel %vm2237, nan, %v2247
    %v2253 = vcombine.high %v1936, %v1936
    %v2254 = vcombine.high %v2040, %v2040
    %v2255 = vcombine.high %v2144, %v2144
    %v2256 = vcombine.high %v2248, %v2248
    %v2257 = vrot.slane %v1936, 1
    %v2258 = vrot.slane %v2253, 1
    %v2259 = vrot.slane %v2040, 1
    %v2260 = vrot.slane %v2254, 1
    %v2261 = vrot.slane %v2144, 1
    %v2262 = vrot.slane %v2255, 1
    %v2263 = vrot.slane %v2248, 1
    %v2264 = vrot.slane %v2256, 1
    %2273 = vst [vmem:[#allocation5 + $0x40] sm:$0x80] %v2257
    %2274 = vst [vmem:[#allocation5 + $0x48] sm:$0x80] %v2258
    %2275 = vst [vmem:[#allocation5 + $0x50] sm:$0x80] %v2259
    %2276 = vst [vmem:[#allocation5 + $0x58] sm:$0x80] %v2260
    %2277 = vst [vmem:[#allocation5 + $0x60] sm:$0x80] %v2261
    %2278 = vst [vmem:[#allocation5 + $0x68] sm:$0x80] %v2262
    %2279 = vst [vmem:[#allocation5 + $0x70] sm:$0x80] %v2263
    %2280 = vst [vmem:[#allocation5 + $0x78] sm:$0x80] %v2264
    %2281 = vst [vmem:[#allocation5 + $0x80] sm:$0x3] %v2257
    %2282 = vst [vmem:[#allocation5 + $0x88] sm:$0x3] %v2258
    %2283 = vst [vmem:[#allocation5 + $0x90] sm:$0x3] %v2259
    %2284 = vst [vmem:[#allocation5 + $0x98] sm:$0x3] %v2260
    %2285 = vst [vmem:[#allocation5 + $0xa0] sm:$0x3] %v2261
    %2286 = vst [vmem:[#allocation5 + $0xa8] sm:$0x3] %v2262
    %2287 = vst [vmem:[#allocation5 + $0xb0] sm:$0x3] %v2263
    %2288 = vst [vmem:[#allocation5 + $0xb8] sm:$0x3] %v2264
    %v2289 = vand.u32 2147483647, %v1829
    %vm2290 = vcmp.le.f32.partialorder %v2289, 0.7853982
    %vm2291 = vcmp.lt.s32.totalorder %v1829, 0
    %v2292 = vand.u32 %v1829, 2139095040
    %v2293 = vshrl.u32 %v2292, 23
    %v2294 = vsub.s32 %v2293, 127
    %v2295 = vand.u32 2147483647, %v1829
    %v2296 = vand.u32 %v2295, 8388607
    %v2297 = vor.u32 %v2296, 8388608
    %v2298 = vsub.s32 0, %v2297
    %v2299 = vadd.s32 %v2294, 1
    %vm2300 = vcmp.gt.s32.totalorder %v2299, 0
    %v2301 = vsel %vm2300, %v2299, 0
    %v2302 = vshrl.u32 %v2301, 5
    %v2303 = vand.u32 %v2301, 31
    %v2304 = vsub.s32 32, %v2303
    %v2305 = vshrl.u32 683565275, %v2304
    %v2306 = vshll.u32 683565275, %v2303
    %v2307 = vshrl.u32 2475754826, %v2304
    %v2308 = vor.u32 %v2306, %v2307
    %v2309 = vshll.u32 2475754826, %v2303
    %v2310 = vshrl.u32 2131351028, %v2304
    %v2311 = vor.u32 %v2309, %v2310
    %v2312 = vshll.u32 2131351028, %v2303
    %v2313 = vshrl.u32 2102212464, %v2304
    %v2314 = vor.u32 %v2312, %v2313
    %v2315 = vshll.u32 2102212464, %v2303
    %v2316 = vshrl.u32 920167782, %v2304
    %v2317 = vor.u32 %v2315, %v2316
    %v2318 = vshll.u32 920167782, %v2303
    %v2319 = vshrl.u32 1326507024, %v2304
    %v2320 = vor.u32 %v2318, %v2319
    %vm2321 = vcmp.lt.s32.totalorder %v2302, 1
    %vm2322 = vcmp.lt.s32.totalorder %v2302, 2
    %vm2323 = vcmp.lt.s32.totalorder %v2302, 3
    %vm2324 = vcmp.lt.s32.totalorder %v2302, 4
    %v2325 = vsel %vm2321, %v2305, %v2308
    %v2326 = vsel %vm2324, %v2314, 2102212464
    %v2327 = vsel %vm2323, %v2311, %v2326
    %v2328 = vsel %vm2322, %v2325, %v2327
    %v2329 = vsel %vm2321, %v2308, %v2311
    %v2330 = vsel %vm2324, %v2317, 920167782
    %v2331 = vsel %vm2323, %v2314, %v2330
    %v2332 = vsel %vm2322, %v2329, %v2331
    %v2333 = vsel %vm2321, %v2311, %v2314
    %v2334 = vsel %vm2324, %v2320, 1326507024
    %v2335 = vsel %vm2323, %v2317, %v2334
    %v2336 = vsel %vm2322, %v2333, %v2335
    %v2337 = vshll.u32 %v2297, 8
    %v2338 = vmul.u32.u64.compose %v2337, %v2336
    %v2339 = vextract.low.u32 %v2338
    %v2340 = vextract.high.u32 %v2338
    %v2341 = vmul.u32.u64.compose %v2337, %v2332
    %v2342 = vextract.low.u32 %v2341
    %v2343 = vextract.high.u32 %v2341
    %v2344 = vmul.u32 %v2337, %v2328
    %v2345 = vadd.s32 %v2340, %v2342
    %vm2346 = vc.u32 %v2340, %v2342
    %v2347 = vadd.s32 %v2343, 1
    %v2348 = vsel %vm2346, %v2347, %v2343
    %v2349 = vadd.s32 %v2344, %v2348
    %v2350 = vadd.s32 %v2349, 536870912
    %v2351 = vshrl.u32 %v2350, 30
    %v2352 = vshll.u32 %v2351, 30
    %v2353 = vsub.s32 %v2349, %v2352
    %vm2354 = vcmp.lt.s32.totalorder %v2353, 0
    %v2355 = vsub.s32 0, %v2353
    %v2356 = vsel %vm2354, %v2355, %v2353
    %v2357 = vclz %v2356
    %v2358 = vsub.s32 %v2357, 2
    %vm2359 = vcmp.gt.s32.totalorder 0, %v2358
    %v2360 = vsel %vm2359, 0, %v2358
    %v2361 = vsub.s32 32, %v2360
    %v2362 = vshll.u32 %v2353, %v2360
    %v2363 = vshrl.u32 %v2345, %v2361
    %v2364 = vor.u32 %v2362, %v2363
    %v2365 = vsub.s32 4294967266, %v2360
    %v2366 = vadd.s32 %v2365, 127
    %v2367 = vshll.u32 %v2366, 23
    %v2368 = vor.u32 4788187, %v2367
    %v2369 = vand.u32 2147483647, %v2368
    %v2371 = vcvt.s32.f32 %v2364
    %v2372 = vmul.f32 %v2371, %v2369
    %v2373 = vxor.u32 %v2372, 2147483648
    %v2374 = vsel %vm2291, %v2373, %v2372
    %v2375 = vsub.s32 4, %v2351
    %v2376 = vsel %vm2291, %v2375, %v2351
    %v2377 = vsel %vm2290, %v1829, %v2374
    %v2378 = vsel %vm2290, 0, %v2376
    %v2379 = vcosq.f32.pop %v2377
    %v2380 = vsinq.f32.pop %v2377
    %vm2381 = vweird.f32 %v1829
    %v2382 = vand.u32 %v2378, 3
    %vm2383 = vcmp.lt.s32.totalorder %v2382, 2
    %vm2384 = vcmp.eq.s32.totalorder %v2382, 0
    %v2385 = vxor.u32 %v2380, 2147483648
    %v2386 = vsel %vm2384, %v2379, %v2385
    %vm2387 = vcmp.eq.s32.totalorder %v2382, 2
    %v2388 = vxor.u32 %v2379, 2147483648
    %v2389 = vsel %vm2387, %v2388, %v2380
    %v2390 = vsel %vm2383, %v2386, %v2389
    %v2391 = vsel %vm2381, nan, %v2390
    %v2392 = vand.u32 2147483647, %v1830
    %vm2393 = vcmp.le.f32.partialorder %v2392, 0.7853982
    %vm2394 = vcmp.lt.s32.totalorder %v1830, 0
    %v2395 = vand.u32 %v1830, 2139095040
    %v2396 = vshrl.u32 %v2395, 23
    %v2397 = vsub.s32 %v2396, 127
    %v2398 = vand.u32 2147483647, %v1830
    %v2399 = vand.u32 %v2398, 8388607
    %v2400 = vor.u32 %v2399, 8388608
    %v2401 = vsub.s32 0, %v2400
    %v2402 = vadd.s32 %v2397, 1
    %vm2403 = vcmp.gt.s32.totalorder %v2402, 0
    %v2404 = vsel %vm2403, %v2402, 0
    %v2405 = vshrl.u32 %v2404, 5
    %v2406 = vand.u32 %v2404, 31
    %v2407 = vsub.s32 32, %v2406
    %v2408 = vshrl.u32 683565275, %v2407
    %v2409 = vshll.u32 683565275, %v2406
    %v2410 = vshrl.u32 2475754826, %v2407
    %v2411 = vor.u32 %v2409, %v2410
    %v2412 = vshll.u32 2475754826, %v2406
    %v2413 = vshrl.u32 2131351028, %v2407
    %v2414 = vor.u32 %v2412, %v2413
    %v2415 = vshll.u32 2131351028, %v2406
    %v2416 = vshrl.u32 2102212464, %v2407
    %v2417 = vor.u32 %v2415, %v2416
    %v2418 = vshll.u32 2102212464, %v2406
    %v2419 = vshrl.u32 920167782, %v2407
    %v2420 = vor.u32 %v2418, %v2419
    %v2421 = vshll.u32 920167782, %v2406
    %v2422 = vshrl.u32 1326507024, %v2407
    %v2423 = vor.u32 %v2421, %v2422
    %vm2424 = vcmp.lt.s32.totalorder %v2405, 1
    %vm2425 = vcmp.lt.s32.totalorder %v2405, 2
    %vm2426 = vcmp.lt.s32.totalorder %v2405, 3
    %vm2427 = vcmp.lt.s32.totalorder %v2405, 4
    %v2428 = vsel %vm2424, %v2408, %v2411
    %v2429 = vsel %vm2427, %v2417, 2102212464
    %v2430 = vsel %vm2426, %v2414, %v2429
    %v2431 = vsel %vm2425, %v2428, %v2430
    %v2432 = vsel %vm2424, %v2411, %v2414
    %v2433 = vsel %vm2427, %v2420, 920167782
    %v2434 = vsel %vm2426, %v2417, %v2433
    %v2435 = vsel %vm2425, %v2432, %v2434
    %v2436 = vsel %vm2424, %v2414, %v2417
    %v2437 = vsel %vm2427, %v2423, 1326507024
    %v2438 = vsel %vm2426, %v2420, %v2437
    %v2439 = vsel %vm2425, %v2436, %v2438
    %v2440 = vshll.u32 %v2400, 8
    %v2441 = vmul.u32.u64.compose %v2440, %v2439
    %v2442 = vextract.low.u32 %v2441
    %v2443 = vextract.high.u32 %v2441
    %v2444 = vmul.u32.u64.compose %v2440, %v2435
    %v2445 = vextract.low.u32 %v2444
    %v2446 = vextract.high.u32 %v2444
    %v2447 = vmul.u32 %v2440, %v2431
    %v2448 = vadd.s32 %v2443, %v2445
    %vm2449 = vc.u32 %v2443, %v2445
    %v2450 = vadd.s32 %v2446, 1
    %v2451 = vsel %vm2449, %v2450, %v2446
    %v2452 = vadd.s32 %v2447, %v2451
    %v2453 = vadd.s32 %v2452, 536870912
    %v2454 = vshrl.u32 %v2453, 30
    %v2455 = vshll.u32 %v2454, 30
    %v2456 = vsub.s32 %v2452, %v2455
    %vm2457 = vcmp.lt.s32.totalorder %v2456, 0
    %v2458 = vsub.s32 0, %v2456
    %v2459 = vsel %vm2457, %v2458, %v2456
    %v2460 = vclz %v2459
    %v2461 = vsub.s32 %v2460, 2
    %vm2462 = vcmp.gt.s32.totalorder 0, %v2461
    %v2463 = vsel %vm2462, 0, %v2461
    %v2464 = vsub.s32 32, %v2463
    %v2465 = vshll.u32 %v2456, %v2463
    %v2466 = vshrl.u32 %v2448, %v2464
    %v2467 = vor.u32 %v2465, %v2466
    %v2468 = vsub.s32 4294967266, %v2463
    %v2469 = vadd.s32 %v2468, 127
    %v2470 = vshll.u32 %v2469, 23
    %v2471 = vor.u32 4788187, %v2470
    %v2472 = vand.u32 2147483647, %v2471
    %v2474 = vcvt.s32.f32 %v2467
    %v2475 = vmul.f32 %v2474, %v2472
    %v2476 = vxor.u32 %v2475, 2147483648
    %v2477 = vsel %vm2394, %v2476, %v2475
    %v2478 = vsub.s32 4, %v2454
    %v2479 = vsel %vm2394, %v2478, %v2454
    %v2480 = vsel %vm2393, %v1830, %v2477
    %v2481 = vsel %vm2393, 0, %v2479
    %v2482 = vcosq.f32.pop %v2480
    %v2483 = vsinq.f32.pop %v2480
    %vm2484 = vweird.f32 %v1830
    %v2485 = vand.u32 %v2481, 3
    %vm2486 = vcmp.lt.s32.totalorder %v2485, 2
    %vm2487 = vcmp.eq.s32.totalorder %v2485, 0
    %v2488 = vxor.u32 %v2483, 2147483648
    %v2489 = vsel %vm2487, %v2482, %v2488
    %vm2490 = vcmp.eq.s32.totalorder %v2485, 2
    %v2491 = vxor.u32 %v2482, 2147483648
    %v2492 = vsel %vm2490, %v2491, %v2483
    %v2493 = vsel %vm2486, %v2489, %v2492
    %v2494 = vsel %vm2484, nan, %v2493
    %v2495 = vand.u32 2147483647, %v1831
    %vm2496 = vcmp.le.f32.partialorder %v2495, 0.7853982
    %vm2497 = vcmp.lt.s32.totalorder %v1831, 0
    %v2498 = vand.u32 %v1831, 2139095040
    %v2499 = vshrl.u32 %v2498, 23
    %v2500 = vsub.s32 %v2499, 127
    %v2501 = vand.u32 2147483647, %v1831
    %v2502 = vand.u32 %v2501, 8388607
    %v2503 = vor.u32 %v2502, 8388608
    %v2504 = vsub.s32 0, %v2503
    %v2505 = vadd.s32 %v2500, 1
    %vm2506 = vcmp.gt.s32.totalorder %v2505, 0
    %v2507 = vsel %vm2506, %v2505, 0
    %v2508 = vshrl.u32 %v2507, 5
    %v2509 = vand.u32 %v2507, 31
    %v2510 = vsub.s32 32, %v2509
    %v2511 = vshrl.u32 683565275, %v2510
    %v2512 = vshll.u32 683565275, %v2509
    %v2513 = vshrl.u32 2475754826, %v2510
    %v2514 = vor.u32 %v2512, %v2513
    %v2515 = vshll.u32 2475754826, %v2509
    %v2516 = vshrl.u32 2131351028, %v2510
    %v2517 = vor.u32 %v2515, %v2516
    %v2518 = vshll.u32 2131351028, %v2509
    %v2519 = vshrl.u32 2102212464, %v2510
    %v2520 = vor.u32 %v2518, %v2519
    %v2521 = vshll.u32 2102212464, %v2509
    %v2522 = vshrl.u32 920167782, %v2510
    %v2523 = vor.u32 %v2521, %v2522
    %v2524 = vshll.u32 920167782, %v2509
    %v2525 = vshrl.u32 1326507024, %v2510
    %v2526 = vor.u32 %v2524, %v2525
    %vm2527 = vcmp.lt.s32.totalorder %v2508, 1
    %vm2528 = vcmp.lt.s32.totalorder %v2508, 2
    %vm2529 = vcmp.lt.s32.totalorder %v2508, 3
    %vm2530 = vcmp.lt.s32.totalorder %v2508, 4
    %v2531 = vsel %vm2527, %v2511, %v2514
    %v2532 = vsel %vm2530, %v2520, 2102212464
    %v2533 = vsel %vm2529, %v2517, %v2532
    %v2534 = vsel %vm2528, %v2531, %v2533
    %v2535 = vsel %vm2527, %v2514, %v2517
    %v2536 = vsel %vm2530, %v2523, 920167782
    %v2537 = vsel %vm2529, %v2520, %v2536
    %v2538 = vsel %vm2528, %v2535, %v2537
    %v2539 = vsel %vm2527, %v2517, %v2520
    %v2540 = vsel %vm2530, %v2526, 1326507024
    %v2541 = vsel %vm2529, %v2523, %v2540
    %v2542 = vsel %vm2528, %v2539, %v2541
    %v2543 = vshll.u32 %v2503, 8
    %v2544 = vmul.u32.u64.compose %v2543, %v2542
    %v2545 = vextract.low.u32 %v2544
    %v2546 = vextract.high.u32 %v2544
    %v2547 = vmul.u32.u64.compose %v2543, %v2538
    %v2548 = vextract.low.u32 %v2547
    %v2549 = vextract.high.u32 %v2547
    %v2550 = vmul.u32 %v2543, %v2534
    %v2551 = vadd.s32 %v2546, %v2548
    %vm2552 = vc.u32 %v2546, %v2548
    %v2553 = vadd.s32 %v2549, 1
    %v2554 = vsel %vm2552, %v2553, %v2549
    %v2555 = vadd.s32 %v2550, %v2554
    %v2556 = vadd.s32 %v2555, 536870912
    %v2557 = vshrl.u32 %v2556, 30
    %v2558 = vshll.u32 %v2557, 30
    %v2559 = vsub.s32 %v2555, %v2558
    %vm2560 = vcmp.lt.s32.totalorder %v2559, 0
    %v2561 = vsub.s32 0, %v2559
    %v2562 = vsel %vm2560, %v2561, %v2559
    %v2563 = vclz %v2562
    %v2564 = vsub.s32 %v2563, 2
    %vm2565 = vcmp.gt.s32.totalorder 0, %v2564
    %v2566 = vsel %vm2565, 0, %v2564
    %v2567 = vsub.s32 32, %v2566
    %v2568 = vshll.u32 %v2559, %v2566
    %v2569 = vshrl.u32 %v2551, %v2567
    %v2570 = vor.u32 %v2568, %v2569
    %v2571 = vsub.s32 4294967266, %v2566
    %v2572 = vadd.s32 %v2571, 127
    %v2573 = vshll.u32 %v2572, 23
    %v2574 = vor.u32 4788187, %v2573
    %v2575 = vand.u32 2147483647, %v2574
    %v2577 = vcvt.s32.f32 %v2570
    %v2578 = vmul.f32 %v2577, %v2575
    %v2579 = vxor.u32 %v2578, 2147483648
    %v2580 = vsel %vm2497, %v2579, %v2578
    %v2581 = vsub.s32 4, %v2557
    %v2582 = vsel %vm2497, %v2581, %v2557
    %v2583 = vsel %vm2496, %v1831, %v2580
    %v2584 = vsel %vm2496, 0, %v2582
    %v2585 = vcosq.f32.pop %v2583
    %v2586 = vsinq.f32.pop %v2583
    %vm2587 = vweird.f32 %v1831
    %v2588 = vand.u32 %v2584, 3
    %vm2589 = vcmp.lt.s32.totalorder %v2588, 2
    %vm2590 = vcmp.eq.s32.totalorder %v2588, 0
    %v2591 = vxor.u32 %v2586, 2147483648
    %v2592 = vsel %vm2590, %v2585, %v2591
    %vm2593 = vcmp.eq.s32.totalorder %v2588, 2
    %v2594 = vxor.u32 %v2585, 2147483648
    %v2595 = vsel %vm2593, %v2594, %v2586
    %v2596 = vsel %vm2589, %v2592, %v2595
    %v2597 = vsel %vm2587, nan, %v2596
    %v2598 = vand.u32 2147483647, %v1832
    %vm2599 = vcmp.le.f32.partialorder %v2598, 0.7853982
    %vm2600 = vcmp.lt.s32.totalorder %v1832, 0
    %v2601 = vand.u32 %v1832, 2139095040
    %v2602 = vshrl.u32 %v2601, 23
    %v2603 = vsub.s32 %v2602, 127
    %v2604 = vand.u32 2147483647, %v1832
    %v2605 = vand.u32 %v2604, 8388607
    %v2606 = vor.u32 %v2605, 8388608
    %v2607 = vsub.s32 0, %v2606
    %v2608 = vadd.s32 %v2603, 1
    %vm2609 = vcmp.gt.s32.totalorder %v2608, 0
    %v2610 = vsel %vm2609, %v2608, 0
    %v2611 = vshrl.u32 %v2610, 5
    %v2612 = vand.u32 %v2610, 31
    %v2613 = vsub.s32 32, %v2612
    %v2614 = vshrl.u32 683565275, %v2613
    %v2615 = vshll.u32 683565275, %v2612
    %v2616 = vshrl.u32 2475754826, %v2613
    %v2617 = vor.u32 %v2615, %v2616
    %v2618 = vshll.u32 2475754826, %v2612
    %v2619 = vshrl.u32 2131351028, %v2613
    %v2620 = vor.u32 %v2618, %v2619
    %v2621 = vshll.u32 2131351028, %v2612
    %v2622 = vshrl.u32 2102212464, %v2613
    %v2623 = vor.u32 %v2621, %v2622
    %v2624 = vshll.u32 2102212464, %v2612
    %v2625 = vshrl.u32 920167782, %v2613
    %v2626 = vor.u32 %v2624, %v2625
    %v2627 = vshll.u32 920167782, %v2612
    %v2628 = vshrl.u32 1326507024, %v2613
    %v2629 = vor.u32 %v2627, %v2628
    %vm2630 = vcmp.lt.s32.totalorder %v2611, 1
    %vm2631 = vcmp.lt.s32.totalorder %v2611, 2
    %vm2632 = vcmp.lt.s32.totalorder %v2611, 3
    %vm2633 = vcmp.lt.s32.totalorder %v2611, 4
    %v2634 = vsel %vm2630, %v2614, %v2617
    %v2635 = vsel %vm2633, %v2623, 2102212464
    %v2636 = vsel %vm2632, %v2620, %v2635
    %v2637 = vsel %vm2631, %v2634, %v2636
    %v2638 = vsel %vm2630, %v2617, %v2620
    %v2639 = vsel %vm2633, %v2626, 920167782
    %v2640 = vsel %vm2632, %v2623, %v2639
    %v2641 = vsel %vm2631, %v2638, %v2640
    %v2642 = vsel %vm2630, %v2620, %v2623
    %v2643 = vsel %vm2633, %v2629, 1326507024
    %v2644 = vsel %vm2632, %v2626, %v2643
    %v2645 = vsel %vm2631, %v2642, %v2644
    %v2646 = vshll.u32 %v2606, 8
    %v2647 = vmul.u32.u64.compose %v2646, %v2645
    %v2648 = vextract.low.u32 %v2647
    %v2649 = vextract.high.u32 %v2647
    %v2650 = vmul.u32.u64.compose %v2646, %v2641
    %v2651 = vextract.low.u32 %v2650
    %v2652 = vextract.high.u32 %v2650
    %v2653 = vmul.u32 %v2646, %v2637
    %v2654 = vadd.s32 %v2649, %v2651
    %vm2655 = vc.u32 %v2649, %v2651
    %v2656 = vadd.s32 %v2652, 1
    %v2657 = vsel %vm2655, %v2656, %v2652
    %v2658 = vadd.s32 %v2653, %v2657
    %v2659 = vadd.s32 %v2658, 536870912
    %v2660 = vshrl.u32 %v2659, 30
    %v2661 = vshll.u32 %v2660, 30
    %v2662 = vsub.s32 %v2658, %v2661
    %vm2663 = vcmp.lt.s32.totalorder %v2662, 0
    %v2664 = vsub.s32 0, %v2662
    %v2665 = vsel %vm2663, %v2664, %v2662
    %v2666 = vclz %v2665
    %v2667 = vsub.s32 %v2666, 2
    %vm2668 = vcmp.gt.s32.totalorder 0, %v2667
    %v2669 = vsel %vm2668, 0, %v2667
    %v2670 = vsub.s32 32, %v2669
    %v2671 = vshll.u32 %v2662, %v2669
    %v2672 = vshrl.u32 %v2654, %v2670
    %v2673 = vor.u32 %v2671, %v2672
    %v2674 = vsub.s32 4294967266, %v2669
    %v2675 = vadd.s32 %v2674, 127
    %v2676 = vshll.u32 %v2675, 23
    %v2677 = vor.u32 4788187, %v2676
    %v2678 = vand.u32 2147483647, %v2677
    %v2680 = vcvt.s32.f32 %v2673
    %v2681 = vmul.f32 %v2680, %v2678
    %v2682 = vxor.u32 %v2681, 2147483648
    %v2683 = vsel %vm2600, %v2682, %v2681
    %v2684 = vsub.s32 4, %v2660
    %v2685 = vsel %vm2600, %v2684, %v2660
    %v2686 = vsel %vm2599, %v1832, %v2683
    %v2687 = vsel %vm2599, 0, %v2685
    %v2688 = vcosq.f32.pop %v2686
    %v2689 = vsinq.f32.pop %v2686
    %vm2690 = vweird.f32 %v1832
    %v2691 = vand.u32 %v2687, 3
    %vm2692 = vcmp.lt.s32.totalorder %v2691, 2
    %vm2693 = vcmp.eq.s32.totalorder %v2691, 0
    %v2694 = vxor.u32 %v2689, 2147483648
    %v2695 = vsel %vm2693, %v2688, %v2694
    %vm2696 = vcmp.eq.s32.totalorder %v2691, 2
    %v2697 = vxor.u32 %v2688, 2147483648
    %v2698 = vsel %vm2696, %v2697, %v2689
    %v2699 = vsel %vm2692, %v2695, %v2698
    %v2700 = vsel %vm2690, nan, %v2699
    %v2705 = vcombine.high %v2391, %v2391
    %v2706 = vcombine.high %v2494, %v2494
    %v2707 = vcombine.high %v2597, %v2597
    %v2708 = vcombine.high %v2700, %v2700
    %v2709 = vrot.slane %v2391, 6
    %v2710 = vrot.slane %v2705, 6
    %v2711 = vrot.slane %v2494, 6
    %v2712 = vrot.slane %v2706, 6
    %v2713 = vrot.slane %v2597, 6
    %v2714 = vrot.slane %v2707, 6
    %v2715 = vrot.slane %v2700, 6
    %v2716 = vrot.slane %v2708, 6
    %2725 = vst [vmem:[#allocation5 + $0x80] sm:$0x1c] %v2709
    %2726 = vst [vmem:[#allocation5 + $0x88] sm:$0x1c] %v2710
    %2727 = vst [vmem:[#allocation5 + $0x90] sm:$0x1c] %v2711
    %2728 = vst [vmem:[#allocation5 + $0x98] sm:$0x1c] %v2712
    %2729 = vst [vmem:[#allocation5 + $0xa0] sm:$0x1c] %v2713
    %2730 = vst [vmem:[#allocation5 + $0xa8] sm:$0x1c] %v2714
    %2731 = vst [vmem:[#allocation5 + $0xb0] sm:$0x1c] %v2715
    %2732 = vst [vmem:[#allocation5 + $0xb8] sm:$0x1c] %v2716
    %v2733 = vmul.f32 %v21, 8.0
    %v2734 = vmul.f32 %v22, 8.0
    %v2735 = vmul.f32 %v23, 8.0
    %v2736 = vmul.f32 %v24, 8.0
    %v2737 = vand.u32 2147483647, %v2733
    %vm2738 = vcmp.le.f32.partialorder %v2737, 0.7853982
    %vm2739 = vcmp.lt.s32.totalorder %v2733, 0
    %v2740 = vand.u32 %v2733, 2139095040
    %v2741 = vshrl.u32 %v2740, 23
    %v2742 = vsub.s32 %v2741, 127
    %v2743 = vand.u32 2147483647, %v2733
    %v2744 = vand.u32 %v2743, 8388607
    %v2745 = vor.u32 %v2744, 8388608
    %v2746 = vsub.s32 0, %v2745
    %v2747 = vadd.s32 %v2742, 1
    %vm2748 = vcmp.gt.s32.totalorder %v2747, 0
    %v2749 = vsel %vm2748, %v2747, 0
    %v2750 = vshrl.u32 %v2749, 5
    %v2751 = vand.u32 %v2749, 31
    %v2752 = vsub.s32 32, %v2751
    %v2753 = vshrl.u32 683565275, %v2752
    %v2754 = vshll.u32 683565275, %v2751
    %v2755 = vshrl.u32 2475754826, %v2752
    %v2756 = vor.u32 %v2754, %v2755
    %v2757 = vshll.u32 2475754826, %v2751
    %v2758 = vshrl.u32 2131351028, %v2752
    %v2759 = vor.u32 %v2757, %v2758
    %v2760 = vshll.u32 2131351028, %v2751
    %v2761 = vshrl.u32 2102212464, %v2752
    %v2762 = vor.u32 %v2760, %v2761
    %v2763 = vshll.u32 2102212464, %v2751
    %v2764 = vshrl.u32 920167782, %v2752
    %v2765 = vor.u32 %v2763, %v2764
    %v2766 = vshll.u32 920167782, %v2751
    %v2767 = vshrl.u32 1326507024, %v2752
    %v2768 = vor.u32 %v2766, %v2767
    %vm2769 = vcmp.lt.s32.totalorder %v2750, 1
    %vm2770 = vcmp.lt.s32.totalorder %v2750, 2
    %vm2771 = vcmp.lt.s32.totalorder %v2750, 3
    %vm2772 = vcmp.lt.s32.totalorder %v2750, 4
    %v2773 = vsel %vm2769, %v2753, %v2756
    %v2774 = vsel %vm2772, %v2762, 2102212464
    %v2775 = vsel %vm2771, %v2759, %v2774
    %v2776 = vsel %vm2770, %v2773, %v2775
    %v2777 = vsel %vm2769, %v2756, %v2759
    %v2778 = vsel %vm2772, %v2765, 920167782
    %v2779 = vsel %vm2771, %v2762, %v2778
    %v2780 = vsel %vm2770, %v2777, %v2779
    %v2781 = vsel %vm2769, %v2759, %v2762
    %v2782 = vsel %vm2772, %v2768, 1326507024
    %v2783 = vsel %vm2771, %v2765, %v2782
    %v2784 = vsel %vm2770, %v2781, %v2783
    %v2785 = vshll.u32 %v2745, 8
    %v2786 = vmul.u32.u64.compose %v2785, %v2784
    %v2787 = vextract.low.u32 %v2786
    %v2788 = vextract.high.u32 %v2786
    %v2789 = vmul.u32.u64.compose %v2785, %v2780
    %v2790 = vextract.low.u32 %v2789
    %v2791 = vextract.high.u32 %v2789
    %v2792 = vmul.u32 %v2785, %v2776
    %v2793 = vadd.s32 %v2788, %v2790
    %vm2794 = vc.u32 %v2788, %v2790
    %v2795 = vadd.s32 %v2791, 1
    %v2796 = vsel %vm2794, %v2795, %v2791
    %v2797 = vadd.s32 %v2792, %v2796
    %v2798 = vadd.s32 %v2797, 536870912
    %v2799 = vshrl.u32 %v2798, 30
    %v2800 = vshll.u32 %v2799, 30
    %v2801 = vsub.s32 %v2797, %v2800
    %vm2802 = vcmp.lt.s32.totalorder %v2801, 0
    %v2803 = vsub.s32 0, %v2801
    %v2804 = vsel %vm2802, %v2803, %v2801
    %v2805 = vclz %v2804
    %v2806 = vsub.s32 %v2805, 2
    %vm2807 = vcmp.gt.s32.totalorder 0, %v2806
    %v2808 = vsel %vm2807, 0, %v2806
    %v2809 = vsub.s32 32, %v2808
    %v2810 = vshll.u32 %v2801, %v2808
    %v2811 = vshrl.u32 %v2793, %v2809
    %v2812 = vor.u32 %v2810, %v2811
    %v2813 = vsub.s32 4294967266, %v2808
    %v2814 = vadd.s32 %v2813, 127
    %v2815 = vshll.u32 %v2814, 23
    %v2816 = vor.u32 4788187, %v2815
    %v2817 = vand.u32 2147483647, %v2816
    %v2819 = vcvt.s32.f32 %v2812
    %v2820 = vmul.f32 %v2819, %v2817
    %v2821 = vxor.u32 %v2820, 2147483648
    %v2822 = vsel %vm2739, %v2821, %v2820
    %v2823 = vsub.s32 4, %v2799
    %v2824 = vsel %vm2739, %v2823, %v2799
    %v2825 = vsel %vm2738, %v2733, %v2822
    %v2826 = vsel %vm2738, 0, %v2824
    %v2827 = vcosq.f32.pop %v2825
    %v2828 = vsinq.f32.pop %v2825
    %vm2829 = vweird.f32 %v2733
    %v2830 = vadd.s32 %v2826, 3
    %v2831 = vand.u32 %v2830, 3
    %vm2832 = vcmp.lt.s32.totalorder %v2831, 2
    %vm2833 = vcmp.eq.s32.totalorder %v2831, 0
    %v2834 = vxor.u32 %v2828, 2147483648
    %v2835 = vsel %vm2833, %v2827, %v2834
    %vm2836 = vcmp.eq.s32.totalorder %v2831, 2
    %v2837 = vxor.u32 %v2827, 2147483648
    %v2838 = vsel %vm2836, %v2837, %v2828
    %v2839 = vsel %vm2832, %v2835, %v2838
    %v2840 = vsel %vm2829, nan, %v2839
    %v2841 = vand.u32 2147483647, %v2734
    %vm2842 = vcmp.le.f32.partialorder %v2841, 0.7853982
    %vm2843 = vcmp.lt.s32.totalorder %v2734, 0
    %v2844 = vand.u32 %v2734, 2139095040
    %v2845 = vshrl.u32 %v2844, 23
    %v2846 = vsub.s32 %v2845, 127
    %v2847 = vand.u32 2147483647, %v2734
    %v2848 = vand.u32 %v2847, 8388607
    %v2849 = vor.u32 %v2848, 8388608
    %v2850 = vsub.s32 0, %v2849
    %v2851 = vadd.s32 %v2846, 1
    %vm2852 = vcmp.gt.s32.totalorder %v2851, 0
    %v2853 = vsel %vm2852, %v2851, 0
    %v2854 = vshrl.u32 %v2853, 5
    %v2855 = vand.u32 %v2853, 31
    %v2856 = vsub.s32 32, %v2855
    %v2857 = vshrl.u32 683565275, %v2856
    %v2858 = vshll.u32 683565275, %v2855
    %v2859 = vshrl.u32 2475754826, %v2856
    %v2860 = vor.u32 %v2858, %v2859
    %v2861 = vshll.u32 2475754826, %v2855
    %v2862 = vshrl.u32 2131351028, %v2856
    %v2863 = vor.u32 %v2861, %v2862
    %v2864 = vshll.u32 2131351028, %v2855
    %v2865 = vshrl.u32 2102212464, %v2856
    %v2866 = vor.u32 %v2864, %v2865
    %v2867 = vshll.u32 2102212464, %v2855
    %v2868 = vshrl.u32 920167782, %v2856
    %v2869 = vor.u32 %v2867, %v2868
    %v2870 = vshll.u32 920167782, %v2855
    %v2871 = vshrl.u32 1326507024, %v2856
    %v2872 = vor.u32 %v2870, %v2871
    %vm2873 = vcmp.lt.s32.totalorder %v2854, 1
    %vm2874 = vcmp.lt.s32.totalorder %v2854, 2
    %vm2875 = vcmp.lt.s32.totalorder %v2854, 3
    %vm2876 = vcmp.lt.s32.totalorder %v2854, 4
    %v2877 = vsel %vm2873, %v2857, %v2860
    %v2878 = vsel %vm2876, %v2866, 2102212464
    %v2879 = vsel %vm2875, %v2863, %v2878
    %v2880 = vsel %vm2874, %v2877, %v2879
    %v2881 = vsel %vm2873, %v2860, %v2863
    %v2882 = vsel %vm2876, %v2869, 920167782
    %v2883 = vsel %vm2875, %v2866, %v2882
    %v2884 = vsel %vm2874, %v2881, %v2883
    %v2885 = vsel %vm2873, %v2863, %v2866
    %v2886 = vsel %vm2876, %v2872, 1326507024
    %v2887 = vsel %vm2875, %v2869, %v2886
    %v2888 = vsel %vm2874, %v2885, %v2887
    %v2889 = vshll.u32 %v2849, 8
    %v2890 = vmul.u32.u64.compose %v2889, %v2888
    %v2891 = vextract.low.u32 %v2890
    %v2892 = vextract.high.u32 %v2890
    %v2893 = vmul.u32.u64.compose %v2889, %v2884
    %v2894 = vextract.low.u32 %v2893
    %v2895 = vextract.high.u32 %v2893
    %v2896 = vmul.u32 %v2889, %v2880
    %v2897 = vadd.s32 %v2892, %v2894
    %vm2898 = vc.u32 %v2892, %v2894
    %v2899 = vadd.s32 %v2895, 1
    %v2900 = vsel %vm2898, %v2899, %v2895
    %v2901 = vadd.s32 %v2896, %v2900
    %v2902 = vadd.s32 %v2901, 536870912
    %v2903 = vshrl.u32 %v2902, 30
    %v2904 = vshll.u32 %v2903, 30
    %v2905 = vsub.s32 %v2901, %v2904
    %vm2906 = vcmp.lt.s32.totalorder %v2905, 0
    %v2907 = vsub.s32 0, %v2905
    %v2908 = vsel %vm2906, %v2907, %v2905
    %v2909 = vclz %v2908
    %v2910 = vsub.s32 %v2909, 2
    %vm2911 = vcmp.gt.s32.totalorder 0, %v2910
    %v2912 = vsel %vm2911, 0, %v2910
    %v2913 = vsub.s32 32, %v2912
    %v2914 = vshll.u32 %v2905, %v2912
    %v2915 = vshrl.u32 %v2897, %v2913
    %v2916 = vor.u32 %v2914, %v2915
    %v2917 = vsub.s32 4294967266, %v2912
    %v2918 = vadd.s32 %v2917, 127
    %v2919 = vshll.u32 %v2918, 23
    %v2920 = vor.u32 4788187, %v2919
    %v2921 = vand.u32 2147483647, %v2920
    %v2923 = vcvt.s32.f32 %v2916
    %v2924 = vmul.f32 %v2923, %v2921
    %v2925 = vxor.u32 %v2924, 2147483648
    %v2926 = vsel %vm2843, %v2925, %v2924
    %v2927 = vsub.s32 4, %v2903
    %v2928 = vsel %vm2843, %v2927, %v2903
    %v2929 = vsel %vm2842, %v2734, %v2926
    %v2930 = vsel %vm2842, 0, %v2928
    %v2931 = vcosq.f32.pop %v2929
    %v2932 = vsinq.f32.pop %v2929
    %vm2933 = vweird.f32 %v2734
    %v2934 = vadd.s32 %v2930, 3
    %v2935 = vand.u32 %v2934, 3
    %vm2936 = vcmp.lt.s32.totalorder %v2935, 2
    %vm2937 = vcmp.eq.s32.totalorder %v2935, 0
    %v2938 = vxor.u32 %v2932, 2147483648
    %v2939 = vsel %vm2937, %v2931, %v2938
    %vm2940 = vcmp.eq.s32.totalorder %v2935, 2
    %v2941 = vxor.u32 %v2931, 2147483648
    %v2942 = vsel %vm2940, %v2941, %v2932
    %v2943 = vsel %vm2936, %v2939, %v2942
    %v2944 = vsel %vm2933, nan, %v2943
    %v2945 = vand.u32 2147483647, %v2735
    %vm2946 = vcmp.le.f32.partialorder %v2945, 0.7853982
    %vm2947 = vcmp.lt.s32.totalorder %v2735, 0
    %v2948 = vand.u32 %v2735, 2139095040
    %v2949 = vshrl.u32 %v2948, 23
    %v2950 = vsub.s32 %v2949, 127
    %v2951 = vand.u32 2147483647, %v2735
    %v2952 = vand.u32 %v2951, 8388607
    %v2953 = vor.u32 %v2952, 8388608
    %v2954 = vsub.s32 0, %v2953
    %v2955 = vadd.s32 %v2950, 1
    %vm2956 = vcmp.gt.s32.totalorder %v2955, 0
    %v2957 = vsel %vm2956, %v2955, 0
    %v2958 = vshrl.u32 %v2957, 5
    %v2959 = vand.u32 %v2957, 31
    %v2960 = vsub.s32 32, %v2959
    %v2961 = vshrl.u32 683565275, %v2960
    %v2962 = vshll.u32 683565275, %v2959
    %v2963 = vshrl.u32 2475754826, %v2960
    %v2964 = vor.u32 %v2962, %v2963
    %v2965 = vshll.u32 2475754826, %v2959
    %v2966 = vshrl.u32 2131351028, %v2960
    %v2967 = vor.u32 %v2965, %v2966
    %v2968 = vshll.u32 2131351028, %v2959
    %v2969 = vshrl.u32 2102212464, %v2960
    %v2970 = vor.u32 %v2968, %v2969
    %v2971 = vshll.u32 2102212464, %v2959
    %v2972 = vshrl.u32 920167782, %v2960
    %v2973 = vor.u32 %v2971, %v2972
    %v2974 = vshll.u32 920167782, %v2959
    %v2975 = vshrl.u32 1326507024, %v2960
    %v2976 = vor.u32 %v2974, %v2975
    %vm2977 = vcmp.lt.s32.totalorder %v2958, 1
    %vm2978 = vcmp.lt.s32.totalorder %v2958, 2
    %vm2979 = vcmp.lt.s32.totalorder %v2958, 3
    %vm2980 = vcmp.lt.s32.totalorder %v2958, 4
    %v2981 = vsel %vm2977, %v2961, %v2964
    %v2982 = vsel %vm2980, %v2970, 2102212464
    %v2983 = vsel %vm2979, %v2967, %v2982
    %v2984 = vsel %vm2978, %v2981, %v2983
    %v2985 = vsel %vm2977, %v2964, %v2967
    %v2986 = vsel %vm2980, %v2973, 920167782
    %v2987 = vsel %vm2979, %v2970, %v2986
    %v2988 = vsel %vm2978, %v2985, %v2987
    %v2989 = vsel %vm2977, %v2967, %v2970
    %v2990 = vsel %vm2980, %v2976, 1326507024
    %v2991 = vsel %vm2979, %v2973, %v2990
    %v2992 = vsel %vm2978, %v2989, %v2991
    %v2993 = vshll.u32 %v2953, 8
    %v2994 = vmul.u32.u64.compose %v2993, %v2992
    %v2995 = vextract.low.u32 %v2994
    %v2996 = vextract.high.u32 %v2994
    %v2997 = vmul.u32.u64.compose %v2993, %v2988
    %v2998 = vextract.low.u32 %v2997
    %v2999 = vextract.high.u32 %v2997
    %v3000 = vmul.u32 %v2993, %v2984
    %v3001 = vadd.s32 %v2996, %v2998
    %vm3002 = vc.u32 %v2996, %v2998
    %v3003 = vadd.s32 %v2999, 1
    %v3004 = vsel %vm3002, %v3003, %v2999
    %v3005 = vadd.s32 %v3000, %v3004
    %v3006 = vadd.s32 %v3005, 536870912
    %v3007 = vshrl.u32 %v3006, 30
    %v3008 = vshll.u32 %v3007, 30
    %v3009 = vsub.s32 %v3005, %v3008
    %vm3010 = vcmp.lt.s32.totalorder %v3009, 0
    %v3011 = vsub.s32 0, %v3009
    %v3012 = vsel %vm3010, %v3011, %v3009
    %v3013 = vclz %v3012
    %v3014 = vsub.s32 %v3013, 2
    %vm3015 = vcmp.gt.s32.totalorder 0, %v3014
    %v3016 = vsel %vm3015, 0, %v3014
    %v3017 = vsub.s32 32, %v3016
    %v3018 = vshll.u32 %v3009, %v3016
    %v3019 = vshrl.u32 %v3001, %v3017
    %v3020 = vor.u32 %v3018, %v3019
    %v3021 = vsub.s32 4294967266, %v3016
    %v3022 = vadd.s32 %v3021, 127
    %v3023 = vshll.u32 %v3022, 23
    %v3024 = vor.u32 4788187, %v3023
    %v3025 = vand.u32 2147483647, %v3024
    %v3027 = vcvt.s32.f32 %v3020
    %v3028 = vmul.f32 %v3027, %v3025
    %v3029 = vxor.u32 %v3028, 2147483648
    %v3030 = vsel %vm2947, %v3029, %v3028
    %v3031 = vsub.s32 4, %v3007
    %v3032 = vsel %vm2947, %v3031, %v3007
    %v3033 = vsel %vm2946, %v2735, %v3030
    %v3034 = vsel %vm2946, 0, %v3032
    %v3035 = vcosq.f32.pop %v3033
    %v3036 = vsinq.f32.pop %v3033
    %vm3037 = vweird.f32 %v2735
    %v3038 = vadd.s32 %v3034, 3
    %v3039 = vand.u32 %v3038, 3
    %vm3040 = vcmp.lt.s32.totalorder %v3039, 2
    %vm3041 = vcmp.eq.s32.totalorder %v3039, 0
    %v3042 = vxor.u32 %v3036, 2147483648
    %v3043 = vsel %vm3041, %v3035, %v3042
    %vm3044 = vcmp.eq.s32.totalorder %v3039, 2
    %v3045 = vxor.u32 %v3035, 2147483648
    %v3046 = vsel %vm3044, %v3045, %v3036
    %v3047 = vsel %vm3040, %v3043, %v3046
    %v3048 = vsel %vm3037, nan, %v3047
    %v3049 = vand.u32 2147483647, %v2736
    %vm3050 = vcmp.le.f32.partialorder %v3049, 0.7853982
    %vm3051 = vcmp.lt.s32.totalorder %v2736, 0
    %v3052 = vand.u32 %v2736, 2139095040
    %v3053 = vshrl.u32 %v3052, 23
    %v3054 = vsub.s32 %v3053, 127
    %v3055 = vand.u32 2147483647, %v2736
    %v3056 = vand.u32 %v3055, 8388607
    %v3057 = vor.u32 %v3056, 8388608
    %v3058 = vsub.s32 0, %v3057
    %v3059 = vadd.s32 %v3054, 1
    %vm3060 = vcmp.gt.s32.totalorder %v3059, 0
    %v3061 = vsel %vm3060, %v3059, 0
    %v3062 = vshrl.u32 %v3061, 5
    %v3063 = vand.u32 %v3061, 31
    %v3064 = vsub.s32 32, %v3063
    %v3065 = vshrl.u32 683565275, %v3064
    %v3066 = vshll.u32 683565275, %v3063
    %v3067 = vshrl.u32 2475754826, %v3064
    %v3068 = vor.u32 %v3066, %v3067
    %v3069 = vshll.u32 2475754826, %v3063
    %v3070 = vshrl.u32 2131351028, %v3064
    %v3071 = vor.u32 %v3069, %v3070
    %v3072 = vshll.u32 2131351028, %v3063
    %v3073 = vshrl.u32 2102212464, %v3064
    %v3074 = vor.u32 %v3072, %v3073
    %v3075 = vshll.u32 2102212464, %v3063
    %v3076 = vshrl.u32 920167782, %v3064
    %v3077 = vor.u32 %v3075, %v3076
    %v3078 = vshll.u32 920167782, %v3063
    %v3079 = vshrl.u32 1326507024, %v3064
    %v3080 = vor.u32 %v3078, %v3079
    %vm3081 = vcmp.lt.s32.totalorder %v3062, 1
    %vm3082 = vcmp.lt.s32.totalorder %v3062, 2
    %vm3083 = vcmp.lt.s32.totalorder %v3062, 3
    %vm3084 = vcmp.lt.s32.totalorder %v3062, 4
    %v3085 = vsel %vm3081, %v3065, %v3068
    %v3086 = vsel %vm3084, %v3074, 2102212464
    %v3087 = vsel %vm3083, %v3071, %v3086
    %v3088 = vsel %vm3082, %v3085, %v3087
    %v3089 = vsel %vm3081, %v3068, %v3071
    %v3090 = vsel %vm3084, %v3077, 920167782
    %v3091 = vsel %vm3083, %v3074, %v3090
    %v3092 = vsel %vm3082, %v3089, %v3091
    %v3093 = vsel %vm3081, %v3071, %v3074
    %v3094 = vsel %vm3084, %v3080, 1326507024
    %v3095 = vsel %vm3083, %v3077, %v3094
    %v3096 = vsel %vm3082, %v3093, %v3095
    %v3097 = vshll.u32 %v3057, 8
    %v3098 = vmul.u32.u64.compose %v3097, %v3096
    %v3099 = vextract.low.u32 %v3098
    %v3100 = vextract.high.u32 %v3098
    %v3101 = vmul.u32.u64.compose %v3097, %v3092
    %v3102 = vextract.low.u32 %v3101
    %v3103 = vextract.high.u32 %v3101
    %v3104 = vmul.u32 %v3097, %v3088
    %v3105 = vadd.s32 %v3100, %v3102
    %vm3106 = vc.u32 %v3100, %v3102
    %v3107 = vadd.s32 %v3103, 1
    %v3108 = vsel %vm3106, %v3107, %v3103
    %v3109 = vadd.s32 %v3104, %v3108
    %v3110 = vadd.s32 %v3109, 536870912
    %v3111 = vshrl.u32 %v3110, 30
    %v3112 = vshll.u32 %v3111, 30
    %v3113 = vsub.s32 %v3109, %v3112
    %vm3114 = vcmp.lt.s32.totalorder %v3113, 0
    %v3115 = vsub.s32 0, %v3113
    %v3116 = vsel %vm3114, %v3115, %v3113
    %v3117 = vclz %v3116
    %v3118 = vsub.s32 %v3117, 2
    %vm3119 = vcmp.gt.s32.totalorder 0, %v3118
    %v3120 = vsel %vm3119, 0, %v3118
    %v3121 = vsub.s32 32, %v3120
    %v3122 = vshll.u32 %v3113, %v3120
    %v3123 = vshrl.u32 %v3105, %v3121
    %v3124 = vor.u32 %v3122, %v3123
    %v3125 = vsub.s32 4294967266, %v3120
    %v3126 = vadd.s32 %v3125, 127
    %v3127 = vshll.u32 %v3126, 23
    %v3128 = vor.u32 4788187, %v3127
    %v3129 = vand.u32 2147483647, %v3128
    %v3131 = vcvt.s32.f32 %v3124
    %v3132 = vmul.f32 %v3131, %v3129
    %v3133 = vxor.u32 %v3132, 2147483648
    %v3134 = vsel %vm3051, %v3133, %v3132
    %v3135 = vsub.s32 4, %v3111
    %v3136 = vsel %vm3051, %v3135, %v3111
    %v3137 = vsel %vm3050, %v2736, %v3134
    %v3138 = vsel %vm3050, 0, %v3136
    %v3139 = vcosq.f32.pop %v3137
    %v3140 = vsinq.f32.pop %v3137
    %vm3141 = vweird.f32 %v2736
    %v3142 = vadd.s32 %v3138, 3
    %v3143 = vand.u32 %v3142, 3
    %vm3144 = vcmp.lt.s32.totalorder %v3143, 2
    %vm3145 = vcmp.eq.s32.totalorder %v3143, 0
    %v3146 = vxor.u32 %v3140, 2147483648
    %v3147 = vsel %vm3145, %v3139, %v3146
    %vm3148 = vcmp.eq.s32.totalorder %v3143, 2
    %v3149 = vxor.u32 %v3139, 2147483648
    %v3150 = vsel %vm3148, %v3149, %v3140
    %v3151 = vsel %vm3144, %v3147, %v3150
    %v3152 = vsel %vm3141, nan, %v3151
    %v3157 = vcombine.high %v2840, %v2840
    %v3158 = vcombine.high %v2944, %v2944
    %v3159 = vcombine.high %v3048, %v3048
    %v3160 = vcombine.high %v3152, %v3152
    %v3161 = vrot.slane %v2840, 3
    %v3162 = vrot.slane %v3157, 3
    %v3163 = vrot.slane %v2944, 3
    %v3164 = vrot.slane %v3158, 3
    %v3165 = vrot.slane %v3048, 3
    %v3166 = vrot.slane %v3159, 3
    %v3167 = vrot.slane %v3152, 3
    %v3168 = vrot.slane %v3160, 3
    %3177 = vst [vmem:[#allocation5 + $0x80] sm:$0xe0] %v3161
    %3178 = vst [vmem:[#allocation5 + $0x88] sm:$0xe0] %v3162
    %3179 = vst [vmem:[#allocation5 + $0x90] sm:$0xe0] %v3163
    %3180 = vst [vmem:[#allocation5 + $0x98] sm:$0xe0] %v3164
    %3181 = vst [vmem:[#allocation5 + $0xa0] sm:$0xe0] %v3165
    %3182 = vst [vmem:[#allocation5 + $0xa8] sm:$0xe0] %v3166
    %3183 = vst [vmem:[#allocation5 + $0xb0] sm:$0xe0] %v3167
    %3184 = vst [vmem:[#allocation5 + $0xb8] sm:$0xe0] %v3168
    %v3185 = vand.u32 2147483647, %v2733
    %vm3186 = vcmp.le.f32.partialorder %v3185, 0.7853982
    %vm3187 = vcmp.lt.s32.totalorder %v2733, 0
    %v3188 = vand.u32 %v2733, 2139095040
    %v3189 = vshrl.u32 %v3188, 23
    %v3190 = vsub.s32 %v3189, 127
    %v3191 = vand.u32 2147483647, %v2733
    %v3192 = vand.u32 %v3191, 8388607
    %v3193 = vor.u32 %v3192, 8388608
    %v3194 = vsub.s32 0, %v3193
    %v3195 = vadd.s32 %v3190, 1
    %vm3196 = vcmp.gt.s32.totalorder %v3195, 0
    %v3197 = vsel %vm3196, %v3195, 0
    %v3198 = vshrl.u32 %v3197, 5
    %v3199 = vand.u32 %v3197, 31
    %v3200 = vsub.s32 32, %v3199
    %v3201 = vshrl.u32 683565275, %v3200
    %v3202 = vshll.u32 683565275, %v3199
    %v3203 = vshrl.u32 2475754826, %v3200
    %v3204 = vor.u32 %v3202, %v3203
    %v3205 = vshll.u32 2475754826, %v3199
    %v3206 = vshrl.u32 2131351028, %v3200
    %v3207 = vor.u32 %v3205, %v3206
    %v3208 = vshll.u32 2131351028, %v3199
    %v3209 = vshrl.u32 2102212464, %v3200
    %v3210 = vor.u32 %v3208, %v3209
    %v3211 = vshll.u32 2102212464, %v3199
    %v3212 = vshrl.u32 920167782, %v3200
    %v3213 = vor.u32 %v3211, %v3212
    %v3214 = vshll.u32 920167782, %v3199
    %v3215 = vshrl.u32 1326507024, %v3200
    %v3216 = vor.u32 %v3214, %v3215
    %vm3217 = vcmp.lt.s32.totalorder %v3198, 1
    %vm3218 = vcmp.lt.s32.totalorder %v3198, 2
    %vm3219 = vcmp.lt.s32.totalorder %v3198, 3
    %vm3220 = vcmp.lt.s32.totalorder %v3198, 4
    %v3221 = vsel %vm3217, %v3201, %v3204
    %v3222 = vsel %vm3220, %v3210, 2102212464
    %v3223 = vsel %vm3219, %v3207, %v3222
    %v3224 = vsel %vm3218, %v3221, %v3223
    %v3225 = vsel %vm3217, %v3204, %v3207
    %v3226 = vsel %vm3220, %v3213, 920167782
    %v3227 = vsel %vm3219, %v3210, %v3226
    %v3228 = vsel %vm3218, %v3225, %v3227
    %v3229 = vsel %vm3217, %v3207, %v3210
    %v3230 = vsel %vm3220, %v3216, 1326507024
    %v3231 = vsel %vm3219, %v3213, %v3230
    %v3232 = vsel %vm3218, %v3229, %v3231
    %v3233 = vshll.u32 %v3193, 8
    %v3234 = vmul.u32.u64.compose %v3233, %v3232
    %v3235 = vextract.low.u32 %v3234
    %v3236 = vextract.high.u32 %v3234
    %v3237 = vmul.u32.u64.compose %v3233, %v3228
    %v3238 = vextract.low.u32 %v3237
    %v3239 = vextract.high.u32 %v3237
    %v3240 = vmul.u32 %v3233, %v3224
    %v3241 = vadd.s32 %v3236, %v3238
    %vm3242 = vc.u32 %v3236, %v3238
    %v3243 = vadd.s32 %v3239, 1
    %v3244 = vsel %vm3242, %v3243, %v3239
    %v3245 = vadd.s32 %v3240, %v3244
    %v3246 = vadd.s32 %v3245, 536870912
    %v3247 = vshrl.u32 %v3246, 30
    %v3248 = vshll.u32 %v3247, 30
    %v3249 = vsub.s32 %v3245, %v3248
    %vm3250 = vcmp.lt.s32.totalorder %v3249, 0
    %v3251 = vsub.s32 0, %v3249
    %v3252 = vsel %vm3250, %v3251, %v3249
    %v3253 = vclz %v3252
    %v3254 = vsub.s32 %v3253, 2
    %vm3255 = vcmp.gt.s32.totalorder 0, %v3254
    %v3256 = vsel %vm3255, 0, %v3254
    %v3257 = vsub.s32 32, %v3256
    %v3258 = vshll.u32 %v3249, %v3256
    %v3259 = vshrl.u32 %v3241, %v3257
    %v3260 = vor.u32 %v3258, %v3259
    %v3261 = vsub.s32 4294967266, %v3256
    %v3262 = vadd.s32 %v3261, 127
    %v3263 = vshll.u32 %v3262, 23
    %v3264 = vor.u32 4788187, %v3263
    %v3265 = vand.u32 2147483647, %v3264
    %v3267 = vcvt.s32.f32 %v3260
    %v3268 = vmul.f32 %v3267, %v3265
    %v3269 = vxor.u32 %v3268, 2147483648
    %v3270 = vsel %vm3187, %v3269, %v3268
    %v3271 = vsub.s32 4, %v3247
    %v3272 = vsel %vm3187, %v3271, %v3247
    %v3273 = vsel %vm3186, %v2733, %v3270
    %v3274 = vsel %vm3186, 0, %v3272
    %v3275 = vcosq.f32.pop %v3273
    %v3276 = vsinq.f32.pop %v3273
    %vm3277 = vweird.f32 %v2733
    %v3278 = vand.u32 %v3274, 3
    %vm3279 = vcmp.lt.s32.totalorder %v3278, 2
    %vm3280 = vcmp.eq.s32.totalorder %v3278, 0
    %v3281 = vxor.u32 %v3276, 2147483648
    %v3282 = vsel %vm3280, %v3275, %v3281
    %vm3283 = vcmp.eq.s32.totalorder %v3278, 2
    %v3284 = vxor.u32 %v3275, 2147483648
    %v3285 = vsel %vm3283, %v3284, %v3276
    %v3286 = vsel %vm3279, %v3282, %v3285
    %v3287 = vsel %vm3277, nan, %v3286
    %v3288 = vand.u32 2147483647, %v2734
    %vm3289 = vcmp.le.f32.partialorder %v3288, 0.7853982
    %vm3290 = vcmp.lt.s32.totalorder %v2734, 0
    %v3291 = vand.u32 %v2734, 2139095040
    %v3292 = vshrl.u32 %v3291, 23
    %v3293 = vsub.s32 %v3292, 127
    %v3294 = vand.u32 2147483647, %v2734
    %v3295 = vand.u32 %v3294, 8388607
    %v3296 = vor.u32 %v3295, 8388608
    %v3297 = vsub.s32 0, %v3296
    %v3298 = vadd.s32 %v3293, 1
    %vm3299 = vcmp.gt.s32.totalorder %v3298, 0
    %v3300 = vsel %vm3299, %v3298, 0
    %v3301 = vshrl.u32 %v3300, 5
    %v3302 = vand.u32 %v3300, 31
    %v3303 = vsub.s32 32, %v3302
    %v3304 = vshrl.u32 683565275, %v3303
    %v3305 = vshll.u32 683565275, %v3302
    %v3306 = vshrl.u32 2475754826, %v3303
    %v3307 = vor.u32 %v3305, %v3306
    %v3308 = vshll.u32 2475754826, %v3302
    %v3309 = vshrl.u32 2131351028, %v3303
    %v3310 = vor.u32 %v3308, %v3309
    %v3311 = vshll.u32 2131351028, %v3302
    %v3312 = vshrl.u32 2102212464, %v3303
    %v3313 = vor.u32 %v3311, %v3312
    %v3314 = vshll.u32 2102212464, %v3302
    %v3315 = vshrl.u32 920167782, %v3303
    %v3316 = vor.u32 %v3314, %v3315
    %v3317 = vshll.u32 920167782, %v3302
    %v3318 = vshrl.u32 1326507024, %v3303
    %v3319 = vor.u32 %v3317, %v3318
    %vm3320 = vcmp.lt.s32.totalorder %v3301, 1
    %vm3321 = vcmp.lt.s32.totalorder %v3301, 2
    %vm3322 = vcmp.lt.s32.totalorder %v3301, 3
    %vm3323 = vcmp.lt.s32.totalorder %v3301, 4
    %v3324 = vsel %vm3320, %v3304, %v3307
    %v3325 = vsel %vm3323, %v3313, 2102212464
    %v3326 = vsel %vm3322, %v3310, %v3325
    %v3327 = vsel %vm3321, %v3324, %v3326
    %v3328 = vsel %vm3320, %v3307, %v3310
    %v3329 = vsel %vm3323, %v3316, 920167782
    %v3330 = vsel %vm3322, %v3313, %v3329
    %v3331 = vsel %vm3321, %v3328, %v3330
    %v3332 = vsel %vm3320, %v3310, %v3313
    %v3333 = vsel %vm3323, %v3319, 1326507024
    %v3334 = vsel %vm3322, %v3316, %v3333
    %v3335 = vsel %vm3321, %v3332, %v3334
    %v3336 = vshll.u32 %v3296, 8
    %v3337 = vmul.u32.u64.compose %v3336, %v3335
    %v3338 = vextract.low.u32 %v3337
    %v3339 = vextract.high.u32 %v3337
    %v3340 = vmul.u32.u64.compose %v3336, %v3331
    %v3341 = vextract.low.u32 %v3340
    %v3342 = vextract.high.u32 %v3340
    %v3343 = vmul.u32 %v3336, %v3327
    %v3344 = vadd.s32 %v3339, %v3341
    %vm3345 = vc.u32 %v3339, %v3341
    %v3346 = vadd.s32 %v3342, 1
    %v3347 = vsel %vm3345, %v3346, %v3342
    %v3348 = vadd.s32 %v3343, %v3347
    %v3349 = vadd.s32 %v3348, 536870912
    %v3350 = vshrl.u32 %v3349, 30
    %v3351 = vshll.u32 %v3350, 30
    %v3352 = vsub.s32 %v3348, %v3351
    %vm3353 = vcmp.lt.s32.totalorder %v3352, 0
    %v3354 = vsub.s32 0, %v3352
    %v3355 = vsel %vm3353, %v3354, %v3352
    %v3356 = vclz %v3355
    %v3357 = vsub.s32 %v3356, 2
    %vm3358 = vcmp.gt.s32.totalorder 0, %v3357
    %v3359 = vsel %vm3358, 0, %v3357
    %v3360 = vsub.s32 32, %v3359
    %v3361 = vshll.u32 %v3352, %v3359
    %v3362 = vshrl.u32 %v3344, %v3360
    %v3363 = vor.u32 %v3361, %v3362
    %v3364 = vsub.s32 4294967266, %v3359
    %v3365 = vadd.s32 %v3364, 127
    %v3366 = vshll.u32 %v3365, 23
    %v3367 = vor.u32 4788187, %v3366
    %v3368 = vand.u32 2147483647, %v3367
    %v3370 = vcvt.s32.f32 %v3363
    %v3371 = vmul.f32 %v3370, %v3368
    %v3372 = vxor.u32 %v3371, 2147483648
    %v3373 = vsel %vm3290, %v3372, %v3371
    %v3374 = vsub.s32 4, %v3350
    %v3375 = vsel %vm3290, %v3374, %v3350
    %v3376 = vsel %vm3289, %v2734, %v3373
    %v3377 = vsel %vm3289, 0, %v3375
    %v3378 = vcosq.f32.pop %v3376
    %v3379 = vsinq.f32.pop %v3376
    %vm3380 = vweird.f32 %v2734
    %v3381 = vand.u32 %v3377, 3
    %vm3382 = vcmp.lt.s32.totalorder %v3381, 2
    %vm3383 = vcmp.eq.s32.totalorder %v3381, 0
    %v3384 = vxor.u32 %v3379, 2147483648
    %v3385 = vsel %vm3383, %v3378, %v3384
    %vm3386 = vcmp.eq.s32.totalorder %v3381, 2
    %v3387 = vxor.u32 %v3378, 2147483648
    %v3388 = vsel %vm3386, %v3387, %v3379
    %v3389 = vsel %vm3382, %v3385, %v3388
    %v3390 = vsel %vm3380, nan, %v3389
    %v3391 = vand.u32 2147483647, %v2735
    %vm3392 = vcmp.le.f32.partialorder %v3391, 0.7853982
    %vm3393 = vcmp.lt.s32.totalorder %v2735, 0
    %v3394 = vand.u32 %v2735, 2139095040
    %v3395 = vshrl.u32 %v3394, 23
    %v3396 = vsub.s32 %v3395, 127
    %v3397 = vand.u32 2147483647, %v2735
    %v3398 = vand.u32 %v3397, 8388607
    %v3399 = vor.u32 %v3398, 8388608
    %v3400 = vsub.s32 0, %v3399
    %v3401 = vadd.s32 %v3396, 1
    %vm3402 = vcmp.gt.s32.totalorder %v3401, 0
    %v3403 = vsel %vm3402, %v3401, 0
    %v3404 = vshrl.u32 %v3403, 5
    %v3405 = vand.u32 %v3403, 31
    %v3406 = vsub.s32 32, %v3405
    %v3407 = vshrl.u32 683565275, %v3406
    %v3408 = vshll.u32 683565275, %v3405
    %v3409 = vshrl.u32 2475754826, %v3406
    %v3410 = vor.u32 %v3408, %v3409
    %v3411 = vshll.u32 2475754826, %v3405
    %v3412 = vshrl.u32 2131351028, %v3406
    %v3413 = vor.u32 %v3411, %v3412
    %v3414 = vshll.u32 2131351028, %v3405
    %v3415 = vshrl.u32 2102212464, %v3406
    %v3416 = vor.u32 %v3414, %v3415
    %v3417 = vshll.u32 2102212464, %v3405
    %v3418 = vshrl.u32 920167782, %v3406
    %v3419 = vor.u32 %v3417, %v3418
    %v3420 = vshll.u32 920167782, %v3405
    %v3421 = vshrl.u32 1326507024, %v3406
    %v3422 = vor.u32 %v3420, %v3421
    %vm3423 = vcmp.lt.s32.totalorder %v3404, 1
    %vm3424 = vcmp.lt.s32.totalorder %v3404, 2
    %vm3425 = vcmp.lt.s32.totalorder %v3404, 3
    %vm3426 = vcmp.lt.s32.totalorder %v3404, 4
    %v3427 = vsel %vm3423, %v3407, %v3410
    %v3428 = vsel %vm3426, %v3416, 2102212464
    %v3429 = vsel %vm3425, %v3413, %v3428
    %v3430 = vsel %vm3424, %v3427, %v3429
    %v3431 = vsel %vm3423, %v3410, %v3413
    %v3432 = vsel %vm3426, %v3419, 920167782
    %v3433 = vsel %vm3425, %v3416, %v3432
    %v3434 = vsel %vm3424, %v3431, %v3433
    %v3435 = vsel %vm3423, %v3413, %v3416
    %v3436 = vsel %vm3426, %v3422, 1326507024
    %v3437 = vsel %vm3425, %v3419, %v3436
    %v3438 = vsel %vm3424, %v3435, %v3437
    %v3439 = vshll.u32 %v3399, 8
    %v3440 = vmul.u32.u64.compose %v3439, %v3438
    %v3441 = vextract.low.u32 %v3440
    %v3442 = vextract.high.u32 %v3440
    %v3443 = vmul.u32.u64.compose %v3439, %v3434
    %v3444 = vextract.low.u32 %v3443
    %v3445 = vextract.high.u32 %v3443
    %v3446 = vmul.u32 %v3439, %v3430
    %v3447 = vadd.s32 %v3442, %v3444
    %vm3448 = vc.u32 %v3442, %v3444
    %v3449 = vadd.s32 %v3445, 1
    %v3450 = vsel %vm3448, %v3449, %v3445
    %v3451 = vadd.s32 %v3446, %v3450
    %v3452 = vadd.s32 %v3451, 536870912
    %v3453 = vshrl.u32 %v3452, 30
    %v3454 = vshll.u32 %v3453, 30
    %v3455 = vsub.s32 %v3451, %v3454
    %vm3456 = vcmp.lt.s32.totalorder %v3455, 0
    %v3457 = vsub.s32 0, %v3455
    %v3458 = vsel %vm3456, %v3457, %v3455
    %v3459 = vclz %v3458
    %v3460 = vsub.s32 %v3459, 2
    %vm3461 = vcmp.gt.s32.totalorder 0, %v3460
    %v3462 = vsel %vm3461, 0, %v3460
    %v3463 = vsub.s32 32, %v3462
    %v3464 = vshll.u32 %v3455, %v3462
    %v3465 = vshrl.u32 %v3447, %v3463
    %v3466 = vor.u32 %v3464, %v3465
    %v3467 = vsub.s32 4294967266, %v3462
    %v3468 = vadd.s32 %v3467, 127
    %v3469 = vshll.u32 %v3468, 23
    %v3470 = vor.u32 4788187, %v3469
    %v3471 = vand.u32 2147483647, %v3470
    %v3473 = vcvt.s32.f32 %v3466
    %v3474 = vmul.f32 %v3473, %v3471
    %v3475 = vxor.u32 %v3474, 2147483648
    %v3476 = vsel %vm3393, %v3475, %v3474
    %v3477 = vsub.s32 4, %v3453
    %v3478 = vsel %vm3393, %v3477, %v3453
    %v3479 = vsel %vm3392, %v2735, %v3476
    %v3480 = vsel %vm3392, 0, %v3478
    %v3481 = vcosq.f32.pop %v3479
    %v3482 = vsinq.f32.pop %v3479
    %vm3483 = vweird.f32 %v2735
    %v3484 = vand.u32 %v3480, 3
    %vm3485 = vcmp.lt.s32.totalorder %v3484, 2
    %vm3486 = vcmp.eq.s32.totalorder %v3484, 0
    %v3487 = vxor.u32 %v3482, 2147483648
    %v3488 = vsel %vm3486, %v3481, %v3487
    %vm3489 = vcmp.eq.s32.totalorder %v3484, 2
    %v3490 = vxor.u32 %v3481, 2147483648
    %v3491 = vsel %vm3489, %v3490, %v3482
    %v3492 = vsel %vm3485, %v3488, %v3491
    %v3493 = vsel %vm3483, nan, %v3492
    %v3494 = vand.u32 2147483647, %v2736
    %vm3495 = vcmp.le.f32.partialorder %v3494, 0.7853982
    %vm3496 = vcmp.lt.s32.totalorder %v2736, 0
    %v3497 = vand.u32 %v2736, 2139095040
    %v3498 = vshrl.u32 %v3497, 23
    %v3499 = vsub.s32 %v3498, 127
    %v3500 = vand.u32 2147483647, %v2736
    %v3501 = vand.u32 %v3500, 8388607
    %v3502 = vor.u32 %v3501, 8388608
    %v3503 = vsub.s32 0, %v3502
    %v3504 = vadd.s32 %v3499, 1
    %vm3505 = vcmp.gt.s32.totalorder %v3504, 0
    %v3506 = vsel %vm3505, %v3504, 0
    %v3507 = vshrl.u32 %v3506, 5
    %v3508 = vand.u32 %v3506, 31
    %v3509 = vsub.s32 32, %v3508
    %v3510 = vshrl.u32 683565275, %v3509
    %v3511 = vshll.u32 683565275, %v3508
    %v3512 = vshrl.u32 2475754826, %v3509
    %v3513 = vor.u32 %v3511, %v3512
    %v3514 = vshll.u32 2475754826, %v3508
    %v3515 = vshrl.u32 2131351028, %v3509
    %v3516 = vor.u32 %v3514, %v3515
    %v3517 = vshll.u32 2131351028, %v3508
    %v3518 = vshrl.u32 2102212464, %v3509
    %v3519 = vor.u32 %v3517, %v3518
    %v3520 = vshll.u32 2102212464, %v3508
    %v3521 = vshrl.u32 920167782, %v3509
    %v3522 = vor.u32 %v3520, %v3521
    %v3523 = vshll.u32 920167782, %v3508
    %v3524 = vshrl.u32 1326507024, %v3509
    %v3525 = vor.u32 %v3523, %v3524
    %vm3526 = vcmp.lt.s32.totalorder %v3507, 1
    %vm3527 = vcmp.lt.s32.totalorder %v3507, 2
    %vm3528 = vcmp.lt.s32.totalorder %v3507, 3
    %vm3529 = vcmp.lt.s32.totalorder %v3507, 4
    %v3530 = vsel %vm3526, %v3510, %v3513
    %v3531 = vsel %vm3529, %v3519, 2102212464
    %v3532 = vsel %vm3528, %v3516, %v3531
    %v3533 = vsel %vm3527, %v3530, %v3532
    %v3534 = vsel %vm3526, %v3513, %v3516
    %v3535 = vsel %vm3529, %v3522, 920167782
    %v3536 = vsel %vm3528, %v3519, %v3535
    %v3537 = vsel %vm3527, %v3534, %v3536
    %v3538 = vsel %vm3526, %v3516, %v3519
    %v3539 = vsel %vm3529, %v3525, 1326507024
    %v3540 = vsel %vm3528, %v3522, %v3539
    %v3541 = vsel %vm3527, %v3538, %v3540
    %v3542 = vshll.u32 %v3502, 8
    %v3543 = vmul.u32.u64.compose %v3542, %v3541
    %v3544 = vextract.low.u32 %v3543
    %v3545 = vextract.high.u32 %v3543
    %v3546 = vmul.u32.u64.compose %v3542, %v3537
    %v3547 = vextract.low.u32 %v3546
    %v3548 = vextract.high.u32 %v3546
    %v3549 = vmul.u32 %v3542, %v3533
    %v3550 = vadd.s32 %v3545, %v3547
    %vm3551 = vc.u32 %v3545, %v3547
    %v3552 = vadd.s32 %v3548, 1
    %v3553 = vsel %vm3551, %v3552, %v3548
    %v3554 = vadd.s32 %v3549, %v3553
    %v3555 = vadd.s32 %v3554, 536870912
    %v3556 = vshrl.u32 %v3555, 30
    %v3557 = vshll.u32 %v3556, 30
    %v3558 = vsub.s32 %v3554, %v3557
    %vm3559 = vcmp.lt.s32.totalorder %v3558, 0
    %v3560 = vsub.s32 0, %v3558
    %v3561 = vsel %vm3559, %v3560, %v3558
    %v3562 = vclz %v3561
    %v3563 = vsub.s32 %v3562, 2
    %vm3564 = vcmp.gt.s32.totalorder 0, %v3563
    %v3565 = vsel %vm3564, 0, %v3563
    %v3566 = vsub.s32 32, %v3565
    %v3567 = vshll.u32 %v3558, %v3565
    %v3568 = vshrl.u32 %v3550, %v3566
    %v3569 = vor.u32 %v3567, %v3568
    %v3570 = vsub.s32 4294967266, %v3565
    %v3571 = vadd.s32 %v3570, 127
    %v3572 = vshll.u32 %v3571, 23
    %v3573 = vor.u32 4788187, %v3572
    %v3574 = vand.u32 2147483647, %v3573
    %v3576 = vcvt.s32.f32 %v3569
    %v3577 = vmul.f32 %v3576, %v3574
    %v3578 = vxor.u32 %v3577, 2147483648
    %v3579 = vsel %vm3496, %v3578, %v3577
    %v3580 = vsub.s32 4, %v3556
    %v3581 = vsel %vm3496, %v3580, %v3556
    %v3582 = vsel %vm3495, %v2736, %v3579
    %v3583 = vsel %vm3495, 0, %v3581
    %v3584 = vcosq.f32.pop %v3582
    %v3585 = vsinq.f32.pop %v3582
    %vm3586 = vweird.f32 %v2736
    %v3587 = vand.u32 %v3583, 3
    %vm3588 = vcmp.lt.s32.totalorder %v3587, 2
    %vm3589 = vcmp.eq.s32.totalorder %v3587, 0
    %v3590 = vxor.u32 %v3585, 2147483648
    %v3591 = vsel %vm3589, %v3584, %v3590
    %vm3592 = vcmp.eq.s32.totalorder %v3587, 2
    %v3593 = vxor.u32 %v3584, 2147483648
    %v3594 = vsel %vm3592, %v3593, %v3585
    %v3595 = vsel %vm3588, %v3591, %v3594
    %v3596 = vsel %vm3586, nan, %v3595
    %v3601 = vcombine.high %v3287, %v3287
    %v3602 = vcombine.high %v3390, %v3390
    %v3603 = vcombine.high %v3493, %v3493
    %v3604 = vcombine.high %v3596, %v3596
    %3609 = vst [vmem:[#allocation5 + $0xc0] sm:$0x7] %v3287
    %3610 = vst [vmem:[#allocation5 + $0xc8] sm:$0x7] %v3601
    %3611 = vst [vmem:[#allocation5 + $0xd0] sm:$0x7] %v3390
    %3612 = vst [vmem:[#allocation5 + $0xd8] sm:$0x7] %v3602
    %3613 = vst [vmem:[#allocation5 + $0xe0] sm:$0x7] %v3493
    %3614 = vst [vmem:[#allocation5 + $0xe8] sm:$0x7] %v3603
    %3615 = vst [vmem:[#allocation5 + $0xf0] sm:$0x7] %v3596
    %3616 = vst [vmem:[#allocation5 + $0xf8] sm:$0x7] %v3604
    // Predicated region
    $region10: #{tpu_custom_call.1} parent=1 // pred_check
      _
    $region11: #{tpu_custom_call.1} parent=1 // pred_check_branch
      %3618 = sbr.rel (0) target = $region13
    $region12: #{tpu_custom_call.1} parent=1 // pred_region
      %s3620 = ssub.s32 4096, 4096
      %3621 = vsyncadd [#allocation4], %s3620
      %s3622 = sshll.u32 [#allocation5], 4
      %s3623 = int_to_ptr.vmem [resolvable:$true] %s3622
      %3628 = dma.vmem_to_hbm [thread:$0]  %s3623, 4096, %s1, [#allocation4], 1024, 1024, 64
    $region13: #{tpu_custom_call.1} parent=1 // pred_fallthru
      _
    // Predicated region
    $region14: #{tpu_custom_call.1} parent=1 // pred_check
      _
    $region15: #{tpu_custom_call.1} parent=1 // pred_check_branch
      %3630 = sbr.rel (0) target = $region17
    $region16: #{tpu_custom_call.1} parent=1 // pred_region
      %3631 = dma.done [#allocation4], 4096
    $region17: #{tpu_custom_call.1} parent=1 // pred_fallthru
      _
    %3632 = vsyncpa [#allocation3], 1
    %3633 = vsyncpa [#allocation4], 1

</llo_original>
